<compile_context>
chip_gen: v6e
topology: v6e:2x2x1
jax: 0.10.0
libtpu: 0.0.40
codegen_flags: <defaults>
</compile_context>

<pallas_src>
import functools

import jax
import jax.numpy as jnp
from jax import lax
from jax.experimental import pallas as pl
from jax.experimental.pallas import tpu as pltpu


# ----------------------------------------------------------------------------
# small helpers
# ----------------------------------------------------------------------------
def _pick_row_block(n, target=512):
    """Largest row tile <= target that divides n and is sublane (8) aligned."""
    if n <= target:
        return n, 1
    start = (min(target, n) // 8) * 8
    for cand in range(start, 0, -8):
        if cand > 0 and n % cand == 0:
            return cand, n // cand
    return n, 1


def _pick_time_block(t, target):
    """Largest divisor of t that is <= target (timesteps per grid step)."""
    target = max(1, min(target, t))
    for cand in range(target, 0, -1):
        if t % cand == 0:
            return cand
    return t


# ----------------------------------------------------------------------------
# Pallas kernels
# ----------------------------------------------------------------------------
def _encoder_frontend_kernel(wemb_ref, cemb_ref, convw_ref, convb_ref,
                             wihw_ref, wihc_ref, bih_ref, gates_ref,
                             *, char_emb_dim, window_size, n_pos):
    """Char-CNN + hoisted BiLSTM input projection (both directions), fused.

    wemb_ref : (R, emb)    word embeddings (time-major rows)
    cemb_ref : (R, W*C)    char embeddings, chars flattened onto lanes
    convw_ref: (ws*C, F)   conv1d weight (im2col layout)
    convb_ref: (1, F)      conv1d bias
    wihw_ref : (emb, 8H)   [Wih_fwd | Wih_bwd] rows that multiply the word emb
    wihc_ref : (F, 8H)     [Wih_fwd | Wih_bwd] rows that multiply the char feature
    bih_ref  : (1, 8H)     [b_fwd | b_bwd]  (b_ih + b_hh folded)
    gates_ref: (R, 8H)     per-token gate pre-activations for both directions
    """
    C = char_emb_dim
    K = window_size * C
    x = cemb_ref[...]
    cw = convw_ref[...]
    # conv1d as n_pos shifted matmuls + running maximum (VPU), no reshape+XLU
    # cross-sublane reduce.  Bias add and ReLU commute with max -> applied once.
    feat = jnp.dot(x[:, 0:K], cw, preferred_element_type=jnp.float32)
    for p in range(1, n_pos):
        h = jnp.dot(x[:, p * C:p * C + K], cw, preferred_element_type=jnp.float32)
        feat = jnp.maximum(feat, h)
    feat = jnp.maximum(feat + convb_ref[...], 0.0)

    # Hoisted input projection: gates_in = [w_emb | char_feat] @ [Wih_f | Wih_b] + b,
    # computed as a split-K sum so the concatenated encoder input never exists.
    gates_ref[...] = (
        jnp.dot(wemb_ref[...], wihw_ref[...], preferred_element_type=jnp.float32)
        + jnp.dot(feat, wihc_ref[...], preferred_element_type=jnp.float32)
        + bih_ref[...])


def _bilstm_kernel(gf_ref, gb_ref, whhf_ref, whhb_ref, hf_ref, hb_ref,
                   hf_s, cf_s, hb_s, cb_s, *, hidden, t_block):
    """Fused fwd+bwd LSTM recurrence over one block of t_block timesteps.

    x @ Wih + b is precomputed in the front-end kernel, so each step only does
    the (B,H) @ (H,4H) recurrent matmul + elementwise gate math per direction.

    gf_ref : (t_block, B, 8H)  gate pre-acts, forward time block j
    gb_ref : (t_block, B, 8H)  gate pre-acts, mirrored time block (nblk-1-j)
    hf_ref : (t_block, B, H)   forward hidden states  (written at block j)
    hb_ref : (t_block, B, H)   backward hidden states (written at block nblk-1-j)
    *_s    : (B, H)            h/c carries, persist across grid steps
    """
    H = hidden

    @pl.when(pl.program_id(0) == 0)
    def _():
        hf_s[...] = jnp.zeros_like(hf_s)
        cf_s[...] = jnp.zeros_like(cf_s)
        hb_s[...] = jnp.zeros_like(hb_s)
        cb_s[...] = jnp.zeros_like(cb_s)

    whh_f = whhf_ref[...]
    whh_b = whhb_ref[...]

    def cell(pre, h, c, whh):
        g = pre + jnp.dot(h, whh, preferred_element_type=jnp.float32)
        # gate order i, f, g, o (PyTorch LSTM). NOTE: with H=32 these are
        # sub-vreg lane slices; padding H to 128 would make them lane-aligned.
        i_g = jax.nn.sigmoid(g[:, 0 * H:1 * H])
        f_g = jax.nn.sigmoid(g[:, 1 * H:2 * H])
        g_g = jnp.tanh(g[:, 2 * H:3 * H])
        o_g = jax.nn.sigmoid(g[:, 3 * H:4 * H])
        c_new = f_g * c + i_g * g_g
        h_new = o_g * jnp.tanh(c_new)
        return h_new, c_new

    def step(s, carry):
        h_f, c_f, h_b, c_b = carry
        # forward direction walks its block front-to-back
        h_f, c_f = cell(gf_ref[s][:, 0:4 * H], h_f, c_f, whh_f)
        hf_ref[s] = h_f
        # backward direction walks the mirrored block back-to-front
        sb = t_block - 1 - s
        h_b, c_b = cell(gb_ref[sb][:, 4 * H:8 * H], h_b, c_b, whh_b)
        hb_ref[sb] = h_b
        return h_f, c_f, h_b, c_b

    h_f, c_f, h_b, c_b = lax.fori_loop(
        0, t_block, step,
        (hf_s[...], cf_s[...], hb_s[...], cb_s[...]),
        unroll=True)

    hf_s[...] = h_f
    cf_s[...] = c_f
    hb_s[...] = h_b
    cb_s[...] = c_b


def _mlp_tagger_kernel(hf_ref, hb_ref, w1f_ref, w1b_ref, b1_ref, w2_ref, b2_ref,
                       out_ref):
    """Both MLPTagger heads fused: Linear -> ReLU -> Linear (dropout_p=0, eval).

    First-layer weights of both heads are concatenated on the output axis and
    split on the input axis, so [h_fwd | h_bwd] never has to be concatenated.
    The second layer is block-diagonal, zero-padded to a lane-dense width.
    """
    h = (jnp.dot(hf_ref[...], w1f_ref[...], preferred_element_type=jnp.float32)
         + jnp.dot(hb_ref[...], w1b_ref[...], preferred_element_type=jnp.float32)
         + b1_ref[...])
    h = jnp.maximum(h, 0.0)
    out_ref[...] = (jnp.dot(h, w2_ref[...], preferred_element_type=jnp.float32)
                    + b2_ref[...])


# ----------------------------------------------------------------------------
# Pallas wrappers
# ----------------------------------------------------------------------------
def encoder_frontend(wemb, cemb, conv_w, conv_b, wih_w, wih_c, bih,
                     *, char_emb_dim, window_size, n_pos, row_block=512):
    N = wemb.shape[0]
    G = wih_w.shape[1]
    br, nblk = _pick_row_block(N, row_block)
    kernel = functools.partial(_encoder_frontend_kernel,
                               char_emb_dim=char_emb_dim,
                               window_size=window_size, n_pos=n_pos)
    return pl.pallas_call(
        kernel,
        out_shape=jax.ShapeDtypeStruct((N, G), jnp.float32),
        grid=(nblk,),
        in_specs=[
            pl.BlockSpec((br, wemb.shape[1]), lambda r: (r, 0)),
            pl.BlockSpec((br, cemb.shape[1]), lambda r: (r, 0)),
            pl.BlockSpec(conv_w.shape, lambda r: (0, 0)),
            pl.BlockSpec(conv_b.shape, lambda r: (0, 0)),
            pl.BlockSpec(wih_w.shape, lambda r: (0, 0)),
            pl.BlockSpec(wih_c.shape, lambda r: (0, 0)),
            pl.BlockSpec(bih.shape, lambda r: (0, 0)),
        ],
        out_specs=pl.BlockSpec((br, G), lambda r: (r, 0)),
        compiler_params=pltpu.CompilerParams(dimension_semantics=("parallel",)),
    )(wemb, cemb, conv_w, conv_b, wih_w, wih_c, bih)


def bilstm(gates, whh_f, whh_b, *, hidden, time_block=16):
    """gates: (T, B, 8H) precomputed gate pre-activations (fwd lanes 0:4H, bwd 4H:8H).

    Returns (h_fwd, h_bwd), each (T, B, H) in original time order.
    """
    T, B, G = gates.shape
    H = hidden
    tb = _pick_time_block(T, time_block)
    nblk = T // tb
    kernel = functools.partial(_bilstm_kernel, hidden=H, t_block=tb)
    # TODO(synk): on v7x the two directions could be split across the 2 TensorCores
    # (pl.core_map / a parallel direction axis); here they interleave on one core.
    return pl.pallas_call(
        kernel,
        out_shape=(jax.ShapeDtypeStruct((T, B, H), jnp.float32),
                   jax.ShapeDtypeStruct((T, B, H), jnp.float32)),
        grid=(nblk,),
        in_specs=[
            pl.BlockSpec((tb, B, G), lambda j: (j, 0, 0)),
            pl.BlockSpec((tb, B, G), lambda j: (nblk - 1 - j, 0, 0)),
            pl.BlockSpec((H, 4 * H), lambda j: (0, 0)),
            pl.BlockSpec((H, 4 * H), lambda j: (0, 0)),
        ],
        out_specs=(
            pl.BlockSpec((tb, B, H), lambda j: (j, 0, 0)),
            pl.BlockSpec((tb, B, H), lambda j: (nblk - 1 - j, 0, 0)),
        ),
        scratch_shapes=[pltpu.VMEM((B, H), jnp.float32)] * 4,
        compiler_params=pltpu.CompilerParams(dimension_semantics=("arbitrary",)),
    )(gates, gates, whh_f, whh_b)


def mlp_tagger(hf, hb, w1f, w1b, b1, w2, b2, *, row_block=512):
    N, _ = hf.shape
    O = w2.shape[1]
    br, nblk = _pick_row_block(N, row_block)
    return pl.pallas_call(
        _mlp_tagger_kernel,
        out_shape=jax.ShapeDtypeStruct((N, O), jnp.float32),
        grid=(nblk,),
        in_specs=[
            pl.BlockSpec((br, hf.shape[1]), lambda r: (r, 0)),
            pl.BlockSpec((br, hb.shape[1]), lambda r: (r, 0)),
            pl.BlockSpec(w1f.shape, lambda r: (0, 0)),
            pl.BlockSpec(w1b.shape, lambda r: (0, 0)),
            pl.BlockSpec(b1.shape, lambda r: (0, 0)),
            pl.BlockSpec(w2.shape, lambda r: (0, 0)),
            pl.BlockSpec(b2.shape, lambda r: (0, 0)),
        ],
        out_specs=pl.BlockSpec((br, O), lambda r: (r, 0)),
        compiler_params=pltpu.CompilerParams(dimension_semantics=("parallel",)),
    )(hf, hb, w1f, w1b, b1, w2, b2)


# ----------------------------------------------------------------------------
# Parameter construction (deterministic, synthetic) + kernel-ready fusion
# ----------------------------------------------------------------------------
def xavier_uniform(key, shape):
    fan_in, fan_out = shape
    lim = (6.0 / (fan_in + fan_out)) ** 0.5
    return jax.random.uniform(key, shape, jnp.float32, -lim, lim)


def make_params(key, *, n_words, n_chars, emb_dim, char_emb_dim, num_filters,
                window_size, dim, n_tags, n_utags, form_pad_idx, char_pad_idx):
    ks = iter(jax.random.split(key, 16))
    H = dim
    d_in = emb_dim + num_filters          # encoder input dim (word emb || char feat)
    d_tag = 2 * H                         # bidirectional -> tagger_input_dim

    word_emb = 0.1 * jax.random.normal(next(ks), (n_words, emb_dim), jnp.float32)
    word_emb = word_emb.at[form_pad_idx].set(0.0)
    char_emb = 0.1 * jax.random.normal(next(ks), (n_chars, char_emb_dim), jnp.float32)
    char_emb = char_emb.at[char_pad_idx].set(0.0)

    # char CNN conv1d weight, flattened for conv-as-matmul: (window*C, num_filters)
    conv_w = xavier_uniform(next(ks), (window_size * char_emb_dim, num_filters))
    conv_b = jnp.zeros((1, num_filters), jnp.float32)

    def lstm_params(k):
        k1, k2, k3 = jax.random.split(k, 3)
        s = 1.0 / (H ** 0.5)
        wih = jax.random.uniform(k1, (d_in, 4 * H), jnp.float32, -s, s)
        whh = jax.random.uniform(k2, (H, 4 * H), jnp.float32, -s, s)
        b = jax.random.uniform(k3, (1, 4 * H), jnp.float32, -s, s)   # b_ih + b_hh folded
        return dict(wih=wih, whh=whh, b=b)

    def mlp_params(k, n_out):
        k1, k2 = jax.random.split(k)
        return dict(w1=xavier_uniform(k1, (d_tag, 128)),
                    b1=jnp.zeros((1, 128), jnp.float32),
                    w2=xavier_uniform(k2, (128, n_out)),
                    b2=jnp.zeros((1, n_out), jnp.float32))

    return dict(
        word_emb=word_emb, char_emb=char_emb, conv_w=conv_w, conv_b=conv_b,
        lstm_f=lstm_params(next(ks)), lstm_b=lstm_params(next(ks)),
        xpos_mlp=mlp_params(next(ks), n_tags),
        upos_mlp=mlp_params(next(ks), n_utags),
    )


def prepare_params(params, *, emb_dim, hidden):
    """Build kernel-ready fused/padded weights (done once, outside jit)."""
    H = hidden
    # both LSTM directions' input projections fused into one (Din, 8H) weight,
    # split by input source (word-emb rows / char-feature rows).
    wih_all = jnp.concatenate([params["lstm_f"]["wih"], params["lstm_b"]["wih"]], axis=1)
    bih_all = jnp.concatenate([params["lstm_f"]["b"], params["lstm_b"]["b"]], axis=1)
    wih_w, wih_c = wih_all[:emb_dim], wih_all[emb_dim:]

    xm, um = params["xpos_mlp"], params["upos_mlp"]
    mlp_dim = xm["w1"].shape[1]
    n_tags = xm["w2"].shape[1]
    n_utags = um["w2"].shape[1]
    n_out = n_tags + n_utags
    out_pad = ((n_out + 127) // 128) * 128     # lane-dense padded score width

    # first layers of both heads: concat on output axis, split on input axis
    w1 = jnp.concatenate([xm["w1"], um["w1"]], axis=1)        # (2H, 2*mlp_dim)
    b1 = jnp.concatenate([xm["b1"], um["b1"]], axis=1)
    w1f, w1b = w1[:H], w1[H:]
    # second layer: block-diagonal, zero-padded
    w2 = jnp.zeros((2 * mlp_dim, out_pad), jnp.float32)
    w2 = w2.at[:mlp_dim, :n_tags].set(xm["w2"])
    w2 = w2.at[mlp_dim:, n_tags:n_out].set(um["w2"])
    b2 = jnp.zeros((1, out_pad), jnp.float32)
    b2 = b2.at[:, :n_tags].set(xm["b2"])
    b2 = b2.at[:, n_tags:n_out].set(um["b2"])

    return dict(
        word_emb=params["word_emb"], char_emb=params["char_emb"],
        conv_w=params["conv_w"], conv_b=params["conv_b"],
        wih_w=wih_w, wih_c=wih_c, bih=bih_all,
        whh_f=params["lstm_f"]["whh"], whh_b=params["lstm_b"]["whh"],
        w1f=w1f, w1b=w1b, b1=b1, w2=w2, b2=b2,
    )


# ----------------------------------------------------------------------------
# Forward pass (Tagger.forward, tagger='mlp', training-scores path)
# ----------------------------------------------------------------------------
def tagger_forward(prep, form_var, char_var, *, window_size, hidden,
                   n_tags, n_utags, time_block=16):
    B, T = form_var.shape
    W = char_var.shape[-1]
    C = prep["char_emb"].shape[1]
    n_pos = W - window_size + 1
    H = hidden

    # time-major ids: only tiny int arrays are transposed, no float (B,T,D)
    # activation transposes ever hit HBM.
    form_tm = form_var.T                                   # (T, B)
    char_tm = jnp.transpose(char_var, (1, 0, 2))           # (T, B, W)

    # embedding gathers (JAX glue)
    wemb = prep["word_emb"][form_tm].reshape(T * B, -1)    # (T*B, emb)
    cemb = prep["char_emb"][char_tm].reshape(T * B, W * C)  # (T*B, W*C)

    # K1: char-CNN + hoisted input projection for both LSTM directions
    gates = encoder_frontend(wemb, cemb, prep["conv_w"], prep["conv_b"],
                             prep["wih_w"], prep["wih_c"], prep["bih"],
                             char_emb_dim=C, window_size=window_size, n_pos=n_pos)
    gates = gates.reshape(T, B, -1)                        # (T, B, 8H)

    # K2: fused bidirectional LSTM recurrence (num_layers=1, bi=True)
    # TODO(synk): no sequence-length masking (pack_padded_sequence); padded steps
    # feed the recurrence exactly as in the unpacked PyTorch path.
    h_fwd, h_bwd = bilstm(gates, prep["whh_f"], prep["whh_b"],
                          hidden=H, time_block=time_block)

    # K3: both MLP tagger heads fused, lane-dense padded scores
    scores = mlp_tagger(h_fwd.reshape(T * B, H), h_bwd.reshape(T * B, H),
                        prep["w1f"], prep["w1b"], prep["b1"],
                        prep["w2"], prep["b2"])
    scores = scores.reshape(T, B, -1)
    xpos = jnp.transpose(scores[:, :, :n_tags], (1, 0, 2))                 # (B, T, n_tags)
    upos = jnp.transpose(scores[:, :, n_tags:n_tags + n_utags], (1, 0, 2))  # (B, T, n_utags)

    # matches pos_tagger() return for tagger='mlp'
    # TODO(synk): tagger='crf' (ChainCRF forward/Viterbi) has no clean Pallas port here.
    return dict(loss=None, output=dict(xpos=xpos, upos=upos), score=None, sequence=None)


# ----------------------------------------------------------------------------
# Pure-JAX reference (unfused, mirrors the PyTorch forward) for validation
# ----------------------------------------------------------------------------
def tagger_reference(params, form_var, char_var, *, window_size):
    hi = jax.lax.Precision.HIGHEST
    B, T = form_var.shape
    W = char_var.shape[-1]
    P = W - window_size + 1
    w_emb = params["word_emb"][form_var]                    # (B,T,E)
    c_emb = params["char_emb"][char_var]                    # (B,T,W,C)
    C = c_emb.shape[-1]
    windows = jnp.stack([c_emb[:, :, p:p + window_size, :] for p in range(P)], axis=2)
    xu = windows.reshape(B, T, P, window_size * C)
    h = jnp.einsum('btpk,kf->btpf', xu, params["conv_w"], precision=hi) + params["conv_b"][0]
    char_feat = jnp.max(jnp.maximum(h, 0.0), axis=2)        # (B,T,F)
    enc_in = jnp.concatenate([w_emb, char_feat], axis=-1)
    H = params["lstm_f"]["whh"].shape[0]

    def run_lstm(x_tm, p):
        def step(carry, x_t):
            hh, cc = carry
            g = (jnp.dot(x_t, p["wih"], precision=hi)
                 + jnp.dot(hh, p["whh"], precision=hi) + p["b"][0])
            i = jax.nn.sigmoid(g[:, :H]); f = jax.nn.sigmoid(g[:, H:2 * H])
            gg = jnp.tanh(g[:, 2 * H:3 * H]); o = jax.nn.sigmoid(g[:, 3 * H:4 * H])
            cc = f * cc + i * gg
            hh = o * jnp.tanh(cc)
            return (hh, cc), hh
        z = jnp.zeros((x_tm.shape[1], H), jnp.float32)
        _, hs = lax.scan(step, (z, z), x_tm)
        return hs

    x_tm = jnp.transpose(enc_in, (1, 0, 2))
    hf = run_lstm(x_tm, params["lstm_f"])
    hb = run_lstm(x_tm[::-1], params["lstm_b"])[::-1]
    enc = jnp.transpose(jnp.concatenate([hf, hb], axis=-1), (1, 0, 2)).reshape(B * T, 2 * H)

    def mlp(z, p):
        hh = jnp.maximum(jnp.dot(z, p["w1"], precision=hi) + p["b1"][0], 0.0)
        return jnp.dot(hh, p["w2"], precision=hi) + p["b2"][0]

    xpos = mlp(enc, params["xpos_mlp"]).reshape(B, T, -1)
    upos = mlp(enc, params["upos_mlp"]).reshape(B, T, -1)
    return xpos, upos


# ----------------------------------------------------------------------------
if __name__ == "__main__":
    # Small shapes consistent with the module's hyper-parameters.
    B, T, W = 8, 16, 6                        # batch, tokens, chars per token
    n_words, n_chars = 50, 30
    n_tags, n_utags = 10, 8
    emb_dim, char_emb_dim = 32, 16
    num_filters, window_size = 16, 3
    dim = 32                                  # LSTM hidden size (per direction)
    form_pad_idx, char_pad_idx = 0, 0

    key = jax.random.PRNGKey(0)
    kp, kf, kc = jax.random.split(key, 3)

    params = make_params(
        kp, n_words=n_words, n_chars=n_chars, emb_dim=emb_dim,
        char_emb_dim=char_emb_dim, num_filters=num_filters,
        window_size=window_size, dim=dim, n_tags=n_tags, n_utags=n_utags,
        form_pad_idx=form_pad_idx, char_pad_idx=char_pad_idx)
    prep = prepare_params(params, emb_dim=emb_dim, hidden=dim)

    form_var = jax.random.randint(kf, (B, T), 2, n_words, dtype=jnp.int32)
    char_var = jax.random.randint(kc, (B, T, W), 1, n_chars, dtype=jnp.int32)

    fwd = jax.jit(functools.partial(
        tagger_forward, window_size=window_size, hidden=dim,
        n_tags=n_tags, n_utags=n_utags, time_block=8))
    out = fwd(prep, form_var, char_var)
    xpos = jax.block_until_ready(out["output"]["xpos"])
    upos = jax.block_until_ready(out["output"]["upos"])

    assert xpos.shape == (B, T, n_tags)
    assert upos.shape == (B, T, n_utags)

    # correctness: compare against the unfused pure-JAX reference
    ref_x, ref_u = jax.jit(functools.partial(tagger_reference, window_size=window_size))(
        params, form_var, char_var)
    err = max(float(jnp.max(jnp.abs(xpos - ref_x))),
              float(jnp.max(jnp.abs(upos - ref_u))))
    assert err < 5e-2, f"mismatch vs reference: {err}"

    print("KERNEL_OK")
</pallas_src>

<mosaic_0001>
module attributes {stable_mosaic.version = 11 : i64} {
  func.func @_encoder_frontend_kernel(%arg0: i32, %arg1: memref<128x32xf32, #tpu.memory_space<vmem>>, %arg2: memref<128x96xf32, #tpu.memory_space<vmem>>, %arg3: memref<48x16xf32, #tpu.memory_space<vmem>>, %arg4: memref<1x16xf32, #tpu.memory_space<vmem>>, %arg5: memref<32x256xf32, #tpu.memory_space<vmem>>, %arg6: memref<16x256xf32, #tpu.memory_space<vmem>>, %arg7: memref<1x256xf32, #tpu.memory_space<vmem>>, %arg8: memref<128x256xf32, #tpu.memory_space<vmem>>) attributes {dimension_semantics = [#tpu.dimension_semantics<parallel>], iteration_bounds = array<i64: 1>, scalar_prefetch = 0 : i64, scratch_operands = 0 : i64, tpu.core_type = #tpu.core_type<tc>, window_params = [{transform_indices = @transform_0, window_bounds = array<i64: 128, 32>}, {transform_indices = @transform_1, window_bounds = array<i64: 128, 96>}, {pipeline_mode = #tpu.pipeline_mode<synchronous>, transform_indices = @transform_2, window_bounds = array<i64: 48, 16>}, {pipeline_mode = #tpu.pipeline_mode<synchronous>, transform_indices = @transform_3, window_bounds = array<i64: 1, 16>}, {pipeline_mode = #tpu.pipeline_mode<synchronous>, transform_indices = @transform_4, window_bounds = array<i64: 32, 256>}, {pipeline_mode = #tpu.pipeline_mode<synchronous>, transform_indices = @transform_5, window_bounds = array<i64: 16, 256>}, {pipeline_mode = #tpu.pipeline_mode<synchronous>, transform_indices = @transform_6, window_bounds = array<i64: 1, 256>}, {transform_indices = @transform_7, window_bounds = array<i64: 128, 256>}]} {
    %c0 = arith.constant 0 : index
    %c0_0 = arith.constant 0 : index
    %0 = vector.load %arg2[%c0, %c0_0] : memref<128x96xf32, #tpu.memory_space<vmem>>, vector<128x96xf32>
    %c0_1 = arith.constant 0 : index
    %c0_2 = arith.constant 0 : index
    %1 = vector.load %arg3[%c0_1, %c0_2] : memref<48x16xf32, #tpu.memory_space<vmem>>, vector<48x16xf32>
    %2 = vector.extract_strided_slice %0 {offsets = [0, 0], sizes = [128, 48], strides = [1, 1]} : vector<128x96xf32> to vector<128x48xf32>
    %cst = arith.constant dense<0.000000e+00> : vector<128x16xf32>
    %3 = tpu.matmul %2, %1, %cst {dimension_numbers = #tpu.dot_dimension_numbers<[1], [0], [0], [1], [0, 0, 1, 1], [], []>} : vector<128x48xf32>, vector<48x16xf32>, vector<128x16xf32> -> vector<128x16xf32>
    %4 = vector.extract_strided_slice %0 {offsets = [0, 16], sizes = [128, 48], strides = [1, 1]} : vector<128x96xf32> to vector<128x48xf32>
    %cst_3 = arith.constant dense<0.000000e+00> : vector<128x16xf32>
    %5 = tpu.matmul %4, %1, %cst_3 {dimension_numbers = #tpu.dot_dimension_numbers<[1], [0], [0], [1], [0, 0, 1, 1], [], []>} : vector<128x48xf32>, vector<48x16xf32>, vector<128x16xf32> -> vector<128x16xf32>
    %6 = arith.maximumf %3, %5 : vector<128x16xf32>
    %7 = vector.extract_strided_slice %0 {offsets = [0, 32], sizes = [128, 48], strides = [1, 1]} : vector<128x96xf32> to vector<128x48xf32>
    %cst_4 = arith.constant dense<0.000000e+00> : vector<128x16xf32>
    %8 = tpu.matmul %7, %1, %cst_4 {dimension_numbers = #tpu.dot_dimension_numbers<[1], [0], [0], [1], [0, 0, 1, 1], [], []>} : vector<128x48xf32>, vector<48x16xf32>, vector<128x16xf32> -> vector<128x16xf32>
    %9 = arith.maximumf %6, %8 : vector<128x16xf32>
    %10 = vector.extract_strided_slice %0 {offsets = [0, 48], sizes = [128, 48], strides = [1, 1]} : vector<128x96xf32> to vector<128x48xf32>
    %cst_5 = arith.constant dense<0.000000e+00> : vector<128x16xf32>
    %11 = tpu.matmul %10, %1, %cst_5 {dimension_numbers = #tpu.dot_dimension_numbers<[1], [0], [0], [1], [0, 0, 1, 1], [], []>} : vector<128x48xf32>, vector<48x16xf32>, vector<128x16xf32> -> vector<128x16xf32>
    %12 = arith.maximumf %9, %11 : vector<128x16xf32>
    %c0_6 = arith.constant 0 : index
    %c0_7 = arith.constant 0 : index
    %13 = vector.load %arg4[%c0_6, %c0_7] : memref<1x16xf32, #tpu.memory_space<vmem>>, vector<1x16xf32>
    %14 = vector.broadcast %13 : vector<1x16xf32> to vector<128x16xf32>
    %15 = arith.addf %12, %14 : vector<128x16xf32>
    %cst_8 = arith.constant 0.000000e+00 : f32
    %16 = vector.broadcast %cst_8 : f32 to vector<128x16xf32>
    %17 = arith.maximumf %15, %16 : vector<128x16xf32>
    %c0_9 = arith.constant 0 : index
    %c0_10 = arith.constant 0 : index
    %18 = vector.load %arg1[%c0_9, %c0_10] : memref<128x32xf32, #tpu.memory_space<vmem>>, vector<128x32xf32>
    %c0_11 = arith.constant 0 : index
    %c0_12 = arith.constant 0 : index
    %19 = vector.load %arg5[%c0_11, %c0_12] : memref<32x256xf32, #tpu.memory_space<vmem>>, vector<32x256xf32>
    %cst_13 = arith.constant dense<0.000000e+00> : vector<128x256xf32>
    %20 = tpu.matmul %18, %19, %cst_13 {dimension_numbers = #tpu.dot_dimension_numbers<[1], [0], [0], [1], [0, 0, 1, 1], [], []>} : vector<128x32xf32>, vector<32x256xf32>, vector<128x256xf32> -> vector<128x256xf32>
    %c0_14 = arith.constant 0 : index
    %c0_15 = arith.constant 0 : index
    %21 = vector.load %arg6[%c0_14, %c0_15] : memref<16x256xf32, #tpu.memory_space<vmem>>, vector<16x256xf32>
    %cst_16 = arith.constant dense<0.000000e+00> : vector<128x256xf32>
    %22 = tpu.matmul %17, %21, %cst_16 {dimension_numbers = #tpu.dot_dimension_numbers<[1], [0], [0], [1], [0, 0, 1, 1], [], []>} : vector<128x16xf32>, vector<16x256xf32>, vector<128x256xf32> -> vector<128x256xf32>
    %23 = arith.addf %20, %22 : vector<128x256xf32>
    %c0_17 = arith.constant 0 : index
    %c0_18 = arith.constant 0 : index
    %24 = vector.load %arg7[%c0_17, %c0_18] : memref<1x256xf32, #tpu.memory_space<vmem>>, vector<1x256xf32>
    %25 = vector.broadcast %24 : vector<1x256xf32> to vector<128x256xf32>
    %26 = arith.addf %23, %25 : vector<128x256xf32>
    %c0_19 = arith.constant 0 : index
    %c0_20 = arith.constant 0 : index
    %27 = vector.load %arg8[%c0_19, %c0_20] : memref<128x256xf32, #tpu.memory_space<vmem>>, vector<128x256xf32>
    tpu.vector_store %arg8[%c0_19, %c0_20], %26 {strides = array<i32>} : memref<128x256xf32, #tpu.memory_space<vmem>>, vector<128x256xf32>,
    return
  }
  func.func @transform_0(%arg0: i32) -> (i32, i32) {
    %c0_i32 = arith.constant 0 : i32
    %c0_i32_0 = arith.constant 0 : i32
    return %arg0, %c0_i32 : i32, i32
  }
  func.func @transform_1(%arg0: i32) -> (i32, i32) {
    %c0_i32 = arith.constant 0 : i32
    %c0_i32_0 = arith.constant 0 : i32
    return %arg0, %c0_i32 : i32, i32
  }
  func.func @transform_2(%arg0: i32) -> (i32, i32) {
    %c0_i32 = arith.constant 0 : i32
    %c0_i32_0 = arith.constant 0 : i32
    %c0_i32_1 = arith.constant 0 : i32
    return %c0_i32, %c0_i32_0 : i32, i32
  }
  func.func @transform_3(%arg0: i32) -> (i32, i32) {
    %c0_i32 = arith.constant 0 : i32
    %c0_i32_0 = arith.constant 0 : i32
    %c0_i32_1 = arith.constant 0 : i32
    return %c0_i32, %c0_i32_0 : i32, i32
  }
  func.func @transform_4(%arg0: i32) -> (i32, i32) {
    %c0_i32 = arith.constant 0 : i32
    %c0_i32_0 = arith.constant 0 : i32
    %c0_i32_1 = arith.constant 0 : i32
    return %c0_i32, %c0_i32_0 : i32, i32
  }
  func.func @transform_5(%arg0: i32) -> (i32, i32) {
    %c0_i32 = arith.constant 0 : i32
    %c0_i32_0 = arith.constant 0 : i32
    %c0_i32_1 = arith.constant 0 : i32
    return %c0_i32, %c0_i32_0 : i32, i32
  }
  func.func @transform_6(%arg0: i32) -> (i32, i32) {
    %c0_i32 = arith.constant 0 : i32
    %c0_i32_0 = arith.constant 0 : i32
    %c0_i32_1 = arith.constant 0 : i32
    return %c0_i32, %c0_i32_0 : i32, i32
  }
  func.func @transform_7(%arg0: i32) -> (i32, i32) {
    %c0_i32 = arith.constant 0 : i32
    %c0_i32_0 = arith.constant 0 : i32
    return %arg0, %c0_i32 : i32, i32
  }
}

module attributes {stable_mosaic.version = 11 : i64} {
  func.func @_mlp_tagger_kernel(%arg0: i32, %arg1: memref<128x32xf32, #tpu.memory_space<vmem>>, %arg2: memref<128x32xf32, #tpu.memory_space<vmem>>, %arg3: memref<32x256xf32, #tpu.memory_space<vmem>>, %arg4: memref<32x256xf32, #tpu.memory_space<vmem>>, %arg5: memref<1x256xf32, #tpu.memory_space<vmem>>, %arg6: memref<256x128xf32, #tpu.memory_space<vmem>>, %arg7: memref<1x128xf32, #tpu.memory_space<vmem>>, %arg8: memref<128x128xf32, #tpu.memory_space<vmem>>) attributes {dimension_semantics = [#tpu.dimension_semantics<parallel>], iteration_bounds = array<i64: 1>, scalar_prefetch = 0 : i64, scratch_operands = 0 : i64, tpu.core_type = #tpu.core_type<tc>, window_params = [{transform_indices = @transform_0, window_bounds = array<i64: 128, 32>}, {transform_indices = @transform_1, window_bounds = array<i64: 128, 32>}, {pipeline_mode = #tpu.pipeline_mode<synchronous>, transform_indices = @transform_2, window_bounds = array<i64: 32, 256>}, {pipeline_mode = #tpu.pipeline_mode<synchronous>, transform_indices = @transform_3, window_bounds = array<i64: 32, 256>}, {pipeline_mode = #tpu.pipeline_mode<synchronous>, transform_indices = @transform_4, window_bounds = array<i64: 1, 256>}, {pipeline_mode = #tpu.pipeline_mode<synchronous>, transform_indices = @transform_5, window_bounds = array<i64: 256, 128>}, {pipeline_mode = #tpu.pipeline_mode<synchronous>, transform_indices = @transform_6, window_bounds = array<i64: 1, 128>}, {transform_indices = @transform_7, window_bounds = array<i64: 128, 128>}]} {
    %c0 = arith.constant 0 : index
    %c0_0 = arith.constant 0 : index
    %0 = vector.load %arg1[%c0, %c0_0] : memref<128x32xf32, #tpu.memory_space<vmem>>, vector<128x32xf32>
    %c0_1 = arith.constant 0 : index
    %c0_2 = arith.constant 0 : index
    %1 = vector.load %arg3[%c0_1, %c0_2] : memref<32x256xf32, #tpu.memory_space<vmem>>, vector<32x256xf32>
    %cst = arith.constant dense<0.000000e+00> : vector<128x256xf32>
    %2 = tpu.matmul %0, %1, %cst {dimension_numbers = #tpu.dot_dimension_numbers<[1], [0], [0], [1], [0, 0, 1, 1], [], []>} : vector<128x32xf32>, vector<32x256xf32>, vector<128x256xf32> -> vector<128x256xf32>
    %c0_3 = arith.constant 0 : index
    %c0_4 = arith.constant 0 : index
    %3 = vector.load %arg2[%c0_3, %c0_4] : memref<128x32xf32, #tpu.memory_space<vmem>>, vector<128x32xf32>
    %c0_5 = arith.constant 0 : index
    %c0_6 = arith.constant 0 : index
    %4 = vector.load %arg4[%c0_5, %c0_6] : memref<32x256xf32, #tpu.memory_space<vmem>>, vector<32x256xf32>
    %cst_7 = arith.constant dense<0.000000e+00> : vector<128x256xf32>
    %5 = tpu.matmul %3, %4, %cst_7 {dimension_numbers = #tpu.dot_dimension_numbers<[1], [0], [0], [1], [0, 0, 1, 1], [], []>} : vector<128x32xf32>, vector<32x256xf32>, vector<128x256xf32> -> vector<128x256xf32>
    %6 = arith.addf %2, %5 : vector<128x256xf32>
    %c0_8 = arith.constant 0 : index
    %c0_9 = arith.constant 0 : index
    %7 = vector.load %arg5[%c0_8, %c0_9] : memref<1x256xf32, #tpu.memory_space<vmem>>, vector<1x256xf32>
    %8 = vector.broadcast %7 : vector<1x256xf32> to vector<128x256xf32>
    %9 = arith.addf %6, %8 : vector<128x256xf32>
    %cst_10 = arith.constant 0.000000e+00 : f32
    %10 = vector.broadcast %cst_10 : f32 to vector<128x256xf32>
    %11 = arith.maximumf %9, %10 : vector<128x256xf32>
    %c0_11 = arith.constant 0 : index
    %c0_12 = arith.constant 0 : index
    %12 = vector.load %arg6[%c0_11, %c0_12] : memref<256x128xf32, #tpu.memory_space<vmem>>, vector<256x128xf32>
    %cst_13 = arith.constant dense<0.000000e+00> : vector<128x128xf32>
    %13 = tpu.matmul %11, %12, %cst_13 {dimension_numbers = #tpu.dot_dimension_numbers<[1], [0], [0], [1], [0, 0, 1, 1], [], []>} : vector<128x256xf32>, vector<256x128xf32>, vector<128x128xf32> -> vector<128x128xf32>
    %c0_14 = arith.constant 0 : index
    %c0_15 = arith.constant 0 : index
    %14 = vector.load %arg7[%c0_14, %c0_15] : memref<1x128xf32, #tpu.memory_space<vmem>>, vector<1x128xf32>
    %15 = vector.broadcast %14 : vector<1x128xf32> to vector<128x128xf32>
    %16 = arith.addf %13, %15 : vector<128x128xf32>
    %c0_16 = arith.constant 0 : index
    %c0_17 = arith.constant 0 : index
    %17 = vector.load %arg8[%c0_16, %c0_17] : memref<128x128xf32, #tpu.memory_space<vmem>>, vector<128x128xf32>
    tpu.vector_store %arg8[%c0_16, %c0_17], %16 {strides = array<i32>} : memref<128x128xf32, #tpu.memory_space<vmem>>, vector<128x128xf32>,
    return
  }
  func.func @transform_0(%arg0: i32) -> (i32, i32) {
    %c0_i32 = arith.constant 0 : i32
    %c0_i32_0 = arith.constant 0 : i32
    return %arg0, %c0_i32 : i32, i32
  }
  func.func @transform_1(%arg0: i32) -> (i32, i32) {
    %c0_i32 = arith.constant 0 : i32
    %c0_i32_0 = arith.constant 0 : i32
    return %arg0, %c0_i32 : i32, i32
  }
  func.func @transform_2(%arg0: i32) -> (i32, i32) {
    %c0_i32 = arith.constant 0 : i32
    %c0_i32_0 = arith.constant 0 : i32
    %c0_i32_1 = arith.constant 0 : i32
    return %c0_i32, %c0_i32_0 : i32, i32
  }
  func.func @transform_3(%arg0: i32) -> (i32, i32) {
    %c0_i32 = arith.constant 0 : i32
    %c0_i32_0 = arith.constant 0 : i32
    %c0_i32_1 = arith.constant 0 : i32
    return %c0_i32, %c0_i32_0 : i32, i32
  }
  func.func @transform_4(%arg0: i32) -> (i32, i32) {
    %c0_i32 = arith.constant 0 : i32
    %c0_i32_0 = arith.constant 0 : i32
    %c0_i32_1 = arith.constant 0 : i32
    return %c0_i32, %c0_i32_0 : i32, i32
  }
  func.func @transform_5(%arg0: i32) -> (i32, i32) {
    %c0_i32 = arith.constant 0 : i32
    %c0_i32_0 = arith.constant 0 : i32
    %c0_i32_1 = arith.constant 0 : i32
    return %c0_i32, %c0_i32_0 : i32, i32
  }
  func.func @transform_6(%arg0: i32) -> (i32, i32) {
    %c0_i32 = arith.constant 0 : i32
    %c0_i32_0 = arith.constant 0 : i32
    %c0_i32_1 = arith.constant 0 : i32
    return %c0_i32, %c0_i32_0 : i32, i32
  }
  func.func @transform_7(%arg0: i32) -> (i32, i32) {
    %c0_i32 = arith.constant 0 : i32
    %c0_i32_0 = arith.constant 0 : i32
    return %arg0, %c0_i32 : i32, i32
  }
}

module attributes {stable_mosaic.version = 11 : i64} {
  func.func @_bilstm_kernel(%arg0: i32, %arg1: memref<8x8x256xf32, #tpu.memory_space<vmem>>, %arg2: memref<8x8x256xf32, #tpu.memory_space<vmem>>, %arg3: memref<32x128xf32, #tpu.memory_space<vmem>>, %arg4: memref<32x128xf32, #tpu.memory_space<vmem>>, %arg5: memref<8x8x32xf32, #tpu.memory_space<vmem>>, %arg6: memref<8x8x32xf32, #tpu.memory_space<vmem>>, %arg7: memref<8x32xf32, #tpu.memory_space<vmem>>, %arg8: memref<8x32xf32, #tpu.memory_space<vmem>>, %arg9: memref<8x32xf32, #tpu.memory_space<vmem>>, %arg10: memref<8x32xf32, #tpu.memory_space<vmem>>) attributes {dimension_semantics = [#tpu.dimension_semantics<arbitrary>], iteration_bounds = array<i64: 2>, scalar_prefetch = 0 : i64, scratch_operands = 4 : i64, tpu.core_type = #tpu.core_type<tc>, window_params = [{transform_indices = @transform_0, window_bounds = array<i64: 8, 8, 256>}, {transform_indices = @transform_1, window_bounds = array<i64: 8, 8, 256>}, {pipeline_mode = #tpu.pipeline_mode<synchronous>, transform_indices = @transform_2, window_bounds = array<i64: 32, 128>}, {pipeline_mode = #tpu.pipeline_mode<synchronous>, transform_indices = @transform_3, window_bounds = array<i64: 32, 128>}, {transform_indices = @transform_4, window_bounds = array<i64: 8, 8, 32>}, {transform_indices = @transform_5, window_bounds = array<i64: 8, 8, 32>}]} {
    %c0_i32 = arith.constant 0 : i32
    %0 = arith.cmpi eq, %arg0, %c0_i32 : i32
    %1 = arith.extui %0 : i1 to i32
    %c0_i32_0 = arith.constant 0 : i32
    %2 = arith.cmpi ne, %1, %c0_i32_0 : i32
    scf.if %2 {
      %cst_156 = arith.constant 0.000000e+00 : f32
      %581 = vector.broadcast %cst_156 : f32 to vector<8x32xf32>
      %c0_157 = arith.constant 0 : index
      %c0_158 = arith.constant 0 : index
      %582 = vector.load %arg7[%c0_157, %c0_158] : memref<8x32xf32, #tpu.memory_space<vmem>>, vector<8x32xf32>
      tpu.vector_store %arg7[%c0_157, %c0_158], %581 {strides = array<i32>} : memref<8x32xf32, #tpu.memory_space<vmem>>, vector<8x32xf32>,
      %cst_159 = arith.constant 0.000000e+00 : f32
      %583 = vector.broadcast %cst_159 : f32 to vector<8x32xf32>
      %c0_160 = arith.constant 0 : index
      %c0_161 = arith.constant 0 : index
      %584 = vector.load %arg8[%c0_160, %c0_161] : memref<8x32xf32, #tpu.memory_space<vmem>>, vector<8x32xf32>
      tpu.vector_store %arg8[%c0_160, %c0_161], %583 {strides = array<i32>} : memref<8x32xf32, #tpu.memory_space<vmem>>, vector<8x32xf32>,
      %cst_162 = arith.constant 0.000000e+00 : f32
      %585 = vector.broadcast %cst_162 : f32 to vector<8x32xf32>
      %c0_163 = arith.constant 0 : index
      %c0_164 = arith.constant 0 : index
      %586 = vector.load %arg9[%c0_163, %c0_164] : memref<8x32xf32, #tpu.memory_space<vmem>>, vector<8x32xf32>
      tpu.vector_store %arg9[%c0_163, %c0_164], %585 {strides = array<i32>} : memref<8x32xf32, #tpu.memory_space<vmem>>, vector<8x32xf32>,
      %cst_165 = arith.constant 0.000000e+00 : f32
      %587 = vector.broadcast %cst_165 : f32 to vector<8x32xf32>
      %c0_166 = arith.constant 0 : index
      %c0_167 = arith.constant 0 : index
      %588 = vector.load %arg10[%c0_166, %c0_167] : memref<8x32xf32, #tpu.memory_space<vmem>>, vector<8x32xf32>
      tpu.vector_store %arg10[%c0_166, %c0_167], %587 {strides = array<i32>} : memref<8x32xf32, #tpu.memory_space<vmem>>, vector<8x32xf32>,
    } else {
    }
    %c0 = arith.constant 0 : index
    %c0_1 = arith.constant 0 : index
    %3 = vector.load %arg3[%c0, %c0_1] : memref<32x128xf32, #tpu.memory_space<vmem>>, vector<32x128xf32>
    %c0_2 = arith.constant 0 : index
    %c0_3 = arith.constant 0 : index
    %4 = vector.load %arg4[%c0_2, %c0_3] : memref<32x128xf32, #tpu.memory_space<vmem>>, vector<32x128xf32>
    %c0_4 = arith.constant 0 : index
    %c0_5 = arith.constant 0 : index
    %5 = vector.load %arg7[%c0_4, %c0_5] : memref<8x32xf32, #tpu.memory_space<vmem>>, vector<8x32xf32>
    %c0_6 = arith.constant 0 : index
    %c0_7 = arith.constant 0 : index
    %6 = vector.load %arg8[%c0_6, %c0_7] : memref<8x32xf32, #tpu.memory_space<vmem>>, vector<8x32xf32>
    %c0_8 = arith.constant 0 : index
    %c0_9 = arith.constant 0 : index
    %7 = vector.load %arg9[%c0_8, %c0_9] : memref<8x32xf32, #tpu.memory_space<vmem>>, vector<8x32xf32>
    %c0_10 = arith.constant 0 : index
    %c0_11 = arith.constant 0 : index
    %8 = vector.load %arg10[%c0_10, %c0_11] : memref<8x32xf32, #tpu.memory_space<vmem>>, vector<8x32xf32>
    %c0_i32_12 = arith.constant 0 : i32
    %9 = arith.index_cast %c0_i32_12 : i32 to index
    %c0_13 = arith.constant 0 : index
    %c0_14 = arith.constant 0 : index
    %10 = vector.load %arg1[%9, %c0_13, %c0_14] : memref<8x8x256xf32, #tpu.memory_space<vmem>>, vector<1x8x256xf32>
    %11 = vector.shape_cast %10 : vector<1x8x256xf32> to vector<8x256xf32>
    %12 = vector.extract_strided_slice %11 {offsets = [0, 0], sizes = [8, 128], strides = [1, 1]} : vector<8x256xf32> to vector<8x128xf32>
    %cst = arith.constant dense<0.000000e+00> : vector<8x128xf32>
    %13 = tpu.matmul %5, %3, %cst {dimension_numbers = #tpu.dot_dimension_numbers<[1], [0], [0], [1], [0, 0, 1, 1], [], []>} : vector<8x32xf32>, vector<32x128xf32>, vector<8x128xf32> -> vector<8x128xf32>
    %14 = arith.addf %12, %13 : vector<8x128xf32>
    %15 = vector.extract_strided_slice %14 {offsets = [0, 0], sizes = [8, 32], strides = [1, 1]} : vector<8x128xf32> to vector<8x32xf32>
    %16 = arith.negf %15 : vector<8x32xf32>
    %17 = math.exp %16 : vector<8x32xf32>
    %cst_15 = arith.constant 1.000000e+00 : f32
    %18 = vector.broadcast %cst_15 : f32 to vector<8x32xf32>
    %19 = arith.addf %18, %17 : vector<8x32xf32>
    %20 = arith.divf %18, %19 : vector<8x32xf32>
    %21 = vector.extract_strided_slice %14 {offsets = [0, 32], sizes = [8, 32], strides = [1, 1]} : vector<8x128xf32> to vector<8x32xf32>
    %22 = arith.negf %21 : vector<8x32xf32>
    %23 = math.exp %22 : vector<8x32xf32>
    %cst_16 = arith.constant 1.000000e+00 : f32
    %24 = vector.broadcast %cst_16 : f32 to vector<8x32xf32>
    %25 = arith.addf %24, %23 : vector<8x32xf32>
    %26 = arith.divf %24, %25 : vector<8x32xf32>
    %27 = vector.extract_strided_slice %14 {offsets = [0, 64], sizes = [8, 32], strides = [1, 1]} : vector<8x128xf32> to vector<8x32xf32>
    %28 = math.tanh %27 : vector<8x32xf32>
    %29 = vector.extract_strided_slice %14 {offsets = [0, 96], sizes = [8, 32], strides = [1, 1]} : vector<8x128xf32> to vector<8x32xf32>
    %30 = arith.negf %29 : vector<8x32xf32>
    %31 = math.exp %30 : vector<8x32xf32>
    %cst_17 = arith.constant 1.000000e+00 : f32
    %32 = vector.broadcast %cst_17 : f32 to vector<8x32xf32>
    %33 = arith.addf %32, %31 : vector<8x32xf32>
    %34 = arith.divf %32, %33 : vector<8x32xf32>
    %35 = arith.mulf %26, %6 : vector<8x32xf32>
    %36 = arith.mulf %20, %28 : vector<8x32xf32>
    %37 = arith.addf %35, %36 : vector<8x32xf32>
    %38 = math.tanh %37 : vector<8x32xf32>
    %39 = arith.mulf %34, %38 : vector<8x32xf32>
    %40 = arith.index_cast %c0_i32_12 : i32 to index
    %c0_18 = arith.constant 0 : index
    %c0_19 = arith.constant 0 : index
    %41 = vector.load %arg5[%40, %c0_18, %c0_19] : memref<8x8x32xf32, #tpu.memory_space<vmem>>, vector<1x8x32xf32>
    %42 = vector.shape_cast %41 : vector<1x8x32xf32> to vector<8x32xf32>
    %43 = vector.shape_cast %39 : vector<8x32xf32> to vector<1x8x32xf32>
    tpu.vector_store %arg5[%40, %c0_18, %c0_19], %43 {strides = array<i32>} : memref<8x8x32xf32, #tpu.memory_space<vmem>>, vector<1x8x32xf32>,
    %c7_i32 = arith.constant 7 : i32
    %44 = arith.subi %c7_i32, %c0_i32_12 : i32
    %45 = arith.index_cast %44 : i32 to index
    %c0_20 = arith.constant 0 : index
    %c0_21 = arith.constant 0 : index
    %46 = vector.load %arg2[%45, %c0_20, %c0_21] : memref<8x8x256xf32, #tpu.memory_space<vmem>>, vector<1x8x256xf32>
    %47 = vector.shape_cast %46 : vector<1x8x256xf32> to vector<8x256xf32>
    %48 = vector.extract_strided_slice %47 {offsets = [0, 128], sizes = [8, 128], strides = [1, 1]} : vector<8x256xf32> to vector<8x128xf32>
    %cst_22 = arith.constant dense<0.000000e+00> : vector<8x128xf32>
    %49 = tpu.matmul %7, %4, %cst_22 {dimension_numbers = #tpu.dot_dimension_numbers<[1], [0], [0], [1], [0, 0, 1, 1], [], []>} : vector<8x32xf32>, vector<32x128xf32>, vector<8x128xf32> -> vector<8x128xf32>
    %50 = arith.addf %48, %49 : vector<8x128xf32>
    %51 = vector.extract_strided_slice %50 {offsets = [0, 0], sizes = [8, 32], strides = [1, 1]} : vector<8x128xf32> to vector<8x32xf32>
    %52 = arith.negf %51 : vector<8x32xf32>
    %53 = math.exp %52 : vector<8x32xf32>
    %cst_23 = arith.constant 1.000000e+00 : f32
    %54 = vector.broadcast %cst_23 : f32 to vector<8x32xf32>
    %55 = arith.addf %54, %53 : vector<8x32xf32>
    %56 = arith.divf %54, %55 : vector<8x32xf32>
    %57 = vector.extract_strided_slice %50 {offsets = [0, 32], sizes = [8, 32], strides = [1, 1]} : vector<8x128xf32> to vector<8x32xf32>
    %58 = arith.negf %57 : vector<8x32xf32>
    %59 = math.exp %58 : vector<8x32xf32>
    %cst_24 = arith.constant 1.000000e+00 : f32
    %60 = vector.broadcast %cst_24 : f32 to vector<8x32xf32>
    %61 = arith.addf %60, %59 : vector<8x32xf32>
    %62 = arith.divf %60, %61 : vector<8x32xf32>
    %63 = vector.extract_strided_slice %50 {offsets = [0, 64], sizes = [8, 32], strides = [1, 1]} : vector<8x128xf32> to vector<8x32xf32>
    %64 = math.tanh %63 : vector<8x32xf32>
    %65 = vector.extract_strided_slice %50 {offsets = [0, 96], sizes = [8, 32], strides = [1, 1]} : vector<8x128xf32> to vector<8x32xf32>
    %66 = arith.negf %65 : vector<8x32xf32>
    %67 = math.exp %66 : vector<8x32xf32>
    %cst_25 = arith.constant 1.000000e+00 : f32
    %68 = vector.broadcast %cst_25 : f32 to vector<8x32xf32>
    %69 = arith.addf %68, %67 : vector<8x32xf32>
    %70 = arith.divf %68, %69 : vector<8x32xf32>
    %71 = arith.mulf %62, %8 : vector<8x32xf32>
    %72 = arith.mulf %56, %64 : vector<8x32xf32>
    %73 = arith.addf %71, %72 : vector<8x32xf32>
    %74 = math.tanh %73 : vector<8x32xf32>
    %75 = arith.mulf %70, %74 : vector<8x32xf32>
    %76 = arith.index_cast %44 : i32 to index
    %c0_26 = arith.constant 0 : index
    %c0_27 = arith.constant 0 : index
    %77 = vector.load %arg6[%76, %c0_26, %c0_27] : memref<8x8x32xf32, #tpu.memory_space<vmem>>, vector<1x8x32xf32>
    %78 = vector.shape_cast %77 : vector<1x8x32xf32> to vector<8x32xf32>
    %79 = vector.shape_cast %75 : vector<8x32xf32> to vector<1x8x32xf32>
    tpu.vector_store %arg6[%76, %c0_26, %c0_27], %79 {strides = array<i32>} : memref<8x8x32xf32, #tpu.memory_space<vmem>>, vector<1x8x32xf32>,
    %c1_i32 = arith.constant 1 : i32
    %80 = arith.index_cast %c1_i32 : i32 to index
    %c0_28 = arith.constant 0 : index
    %c0_29 = arith.constant 0 : index
    %81 = vector.load %arg1[%80, %c0_28, %c0_29] : memref<8x8x256xf32, #tpu.memory_space<vmem>>, vector<1x8x256xf32>
    %82 = vector.shape_cast %81 : vector<1x8x256xf32> to vector<8x256xf32>
    %83 = vector.extract_strided_slice %82 {offsets = [0, 0], sizes = [8, 128], strides = [1, 1]} : vector<8x256xf32> to vector<8x128xf32>
    %cst_30 = arith.constant dense<0.000000e+00> : vector<8x128xf32>
    %84 = tpu.matmul %39, %3, %cst_30 {dimension_numbers = #tpu.dot_dimension_numbers<[1], [0], [0], [1], [0, 0, 1, 1], [], []>} : vector<8x32xf32>, vector<32x128xf32>, vector<8x128xf32> -> vector<8x128xf32>
    %85 = arith.addf %83, %84 : vector<8x128xf32>
    %86 = vector.extract_strided_slice %85 {offsets = [0, 0], sizes = [8, 32], strides = [1, 1]} : vector<8x128xf32> to vector<8x32xf32>
    %87 = arith.negf %86 : vector<8x32xf32>
    %88 = math.exp %87 : vector<8x32xf32>
    %cst_31 = arith.constant 1.000000e+00 : f32
    %89 = vector.broadcast %cst_31 : f32 to vector<8x32xf32>
    %90 = arith.addf %89, %88 : vector<8x32xf32>
    %91 = arith.divf %89, %90 : vector<8x32xf32>
    %92 = vector.extract_strided_slice %85 {offsets = [0, 32], sizes = [8, 32], strides = [1, 1]} : vector<8x128xf32> to vector<8x32xf32>
    %93 = arith.negf %92 : vector<8x32xf32>
    %94 = math.exp %93 : vector<8x32xf32>
    %cst_32 = arith.constant 1.000000e+00 : f32
    %95 = vector.broadcast %cst_32 : f32 to vector<8x32xf32>
    %96 = arith.addf %95, %94 : vector<8x32xf32>
    %97 = arith.divf %95, %96 : vector<8x32xf32>
    %98 = vector.extract_strided_slice %85 {offsets = [0, 64], sizes = [8, 32], strides = [1, 1]} : vector<8x128xf32> to vector<8x32xf32>
    %99 = math.tanh %98 : vector<8x32xf32>
    %100 = vector.extract_strided_slice %85 {offsets = [0, 96], sizes = [8, 32], strides = [1, 1]} : vector<8x128xf32> to vector<8x32xf32>
    %101 = arith.negf %100 : vector<8x32xf32>
    %102 = math.exp %101 : vector<8x32xf32>
    %cst_33 = arith.constant 1.000000e+00 : f32
    %103 = vector.broadcast %cst_33 : f32 to vector<8x32xf32>
    %104 = arith.addf %103, %102 : vector<8x32xf32>
    %105 = arith.divf %103, %104 : vector<8x32xf32>
    %106 = arith.mulf %97, %37 : vector<8x32xf32>
    %107 = arith.mulf %91, %99 : vector<8x32xf32>
    %108 = arith.addf %106, %107 : vector<8x32xf32>
    %109 = math.tanh %108 : vector<8x32xf32>
    %110 = arith.mulf %105, %109 : vector<8x32xf32>
    %111 = arith.index_cast %c1_i32 : i32 to index
    %c0_34 = arith.constant 0 : index
    %c0_35 = arith.constant 0 : index
    %112 = vector.load %arg5[%111, %c0_34, %c0_35] : memref<8x8x32xf32, #tpu.memory_space<vmem>>, vector<1x8x32xf32>
    %113 = vector.shape_cast %112 : vector<1x8x32xf32> to vector<8x32xf32>
    %114 = vector.shape_cast %110 : vector<8x32xf32> to vector<1x8x32xf32>
    tpu.vector_store %arg5[%111, %c0_34, %c0_35], %114 {strides = array<i32>} : memref<8x8x32xf32, #tpu.memory_space<vmem>>, vector<1x8x32xf32>,
    %c7_i32_36 = arith.constant 7 : i32
    %115 = arith.subi %c7_i32_36, %c1_i32 : i32
    %116 = arith.index_cast %115 : i32 to index
    %c0_37 = arith.constant 0 : index
    %c0_38 = arith.constant 0 : index
    %117 = vector.load %arg2[%116, %c0_37, %c0_38] : memref<8x8x256xf32, #tpu.memory_space<vmem>>, vector<1x8x256xf32>
    %118 = vector.shape_cast %117 : vector<1x8x256xf32> to vector<8x256xf32>
    %119 = vector.extract_strided_slice %118 {offsets = [0, 128], sizes = [8, 128], strides = [1, 1]} : vector<8x256xf32> to vector<8x128xf32>
    %cst_39 = arith.constant dense<0.000000e+00> : vector<8x128xf32>
    %120 = tpu.matmul %75, %4, %cst_39 {dimension_numbers = #tpu.dot_dimension_numbers<[1], [0], [0], [1], [0, 0, 1, 1], [], []>} : vector<8x32xf32>, vector<32x128xf32>, vector<8x128xf32> -> vector<8x128xf32>
    %121 = arith.addf %119, %120 : vector<8x128xf32>
    %122 = vector.extract_strided_slice %121 {offsets = [0, 0], sizes = [8, 32], strides = [1, 1]} : vector<8x128xf32> to vector<8x32xf32>
    %123 = arith.negf %122 : vector<8x32xf32>
    %124 = math.exp %123 : vector<8x32xf32>
    %cst_40 = arith.constant 1.000000e+00 : f32
    %125 = vector.broadcast %cst_40 : f32 to vector<8x32xf32>
    %126 = arith.addf %125, %124 : vector<8x32xf32>
    %127 = arith.divf %125, %126 : vector<8x32xf32>
    %128 = vector.extract_strided_slice %121 {offsets = [0, 32], sizes = [8, 32], strides = [1, 1]} : vector<8x128xf32> to vector<8x32xf32>
    %129 = arith.negf %128 : vector<8x32xf32>
    %130 = math.exp %129 : vector<8x32xf32>
    %cst_41 = arith.constant 1.000000e+00 : f32
    %131 = vector.broadcast %cst_41 : f32 to vector<8x32xf32>
    %132 = arith.addf %131, %130 : vector<8x32xf32>
    %133 = arith.divf %131, %132 : vector<8x32xf32>
    %134 = vector.extract_strided_slice %121 {offsets = [0, 64], sizes = [8, 32], strides = [1, 1]} : vector<8x128xf32> to vector<8x32xf32>
    %135 = math.tanh %134 : vector<8x32xf32>
    %136 = vector.extract_strided_slice %121 {offsets = [0, 96], sizes = [8, 32], strides = [1, 1]} : vector<8x128xf32> to vector<8x32xf32>
    %137 = arith.negf %136 : vector<8x32xf32>
    %138 = math.exp %137 : vector<8x32xf32>
    %cst_42 = arith.constant 1.000000e+00 : f32
    %139 = vector.broadcast %cst_42 : f32 to vector<8x32xf32>
    %140 = arith.addf %139, %138 : vector<8x32xf32>
    %141 = arith.divf %139, %140 : vector<8x32xf32>
    %142 = arith.mulf %133, %73 : vector<8x32xf32>
    %143 = arith.mulf %127, %135 : vector<8x32xf32>
    %144 = arith.addf %142, %143 : vector<8x32xf32>
    %145 = math.tanh %144 : vector<8x32xf32>
    %146 = arith.mulf %141, %145 : vector<8x32xf32>
    %147 = arith.index_cast %115 : i32 to index
    %c0_43 = arith.constant 0 : index
    %c0_44 = arith.constant 0 : index
    %148 = vector.load %arg6[%147, %c0_43, %c0_44] : memref<8x8x32xf32, #tpu.memory_space<vmem>>, vector<1x8x32xf32>
    %149 = vector.shape_cast %148 : vector<1x8x32xf32> to vector<8x32xf32>
    %150 = vector.shape_cast %146 : vector<8x32xf32> to vector<1x8x32xf32>
    tpu.vector_store %arg6[%147, %c0_43, %c0_44], %150 {strides = array<i32>} : memref<8x8x32xf32, #tpu.memory_space<vmem>>, vector<1x8x32xf32>,
    %c2_i32 = arith.constant 2 : i32
    %151 = arith.index_cast %c2_i32 : i32 to index
    %c0_45 = arith.constant 0 : index
    %c0_46 = arith.constant 0 : index
    %152 = vector.load %arg1[%151, %c0_45, %c0_46] : memref<8x8x256xf32, #tpu.memory_space<vmem>>, vector<1x8x256xf32>
    %153 = vector.shape_cast %152 : vector<1x8x256xf32> to vector<8x256xf32>
    %154 = vector.extract_strided_slice %153 {offsets = [0, 0], sizes = [8, 128], strides = [1, 1]} : vector<8x256xf32> to vector<8x128xf32>
    %cst_47 = arith.constant dense<0.000000e+00> : vector<8x128xf32>
    %155 = tpu.matmul %110, %3, %cst_47 {dimension_numbers = #tpu.dot_dimension_numbers<[1], [0], [0], [1], [0, 0, 1, 1], [], []>} : vector<8x32xf32>, vector<32x128xf32>, vector<8x128xf32> -> vector<8x128xf32>
    %156 = arith.addf %154, %155 : vector<8x128xf32>
    %157 = vector.extract_strided_slice %156 {offsets = [0, 0], sizes = [8, 32], strides = [1, 1]} : vector<8x128xf32> to vector<8x32xf32>
    %158 = arith.negf %157 : vector<8x32xf32>
    %159 = math.exp %158 : vector<8x32xf32>
    %cst_48 = arith.constant 1.000000e+00 : f32
    %160 = vector.broadcast %cst_48 : f32 to vector<8x32xf32>
    %161 = arith.addf %160, %159 : vector<8x32xf32>
    %162 = arith.divf %160, %161 : vector<8x32xf32>
    %163 = vector.extract_strided_slice %156 {offsets = [0, 32], sizes = [8, 32], strides = [1, 1]} : vector<8x128xf32> to vector<8x32xf32>
    %164 = arith.negf %163 : vector<8x32xf32>
    %165 = math.exp %164 : vector<8x32xf32>
    %cst_49 = arith.constant 1.000000e+00 : f32
    %166 = vector.broadcast %cst_49 : f32 to vector<8x32xf32>
    %167 = arith.addf %166, %165 : vector<8x32xf32>
    %168 = arith.divf %166, %167 : vector<8x32xf32>
    %169 = vector.extract_strided_slice %156 {offsets = [0, 64], sizes = [8, 32], strides = [1, 1]} : vector<8x128xf32> to vector<8x32xf32>
    %170 = math.tanh %169 : vector<8x32xf32>
    %171 = vector.extract_strided_slice %156 {offsets = [0, 96], sizes = [8, 32], strides = [1, 1]} : vector<8x128xf32> to vector<8x32xf32>
    %172 = arith.negf %171 : vector<8x32xf32>
    %173 = math.exp %172 : vector<8x32xf32>
    %cst_50 = arith.constant 1.000000e+00 : f32
    %174 = vector.broadcast %cst_50 : f32 to vector<8x32xf32>
    %175 = arith.addf %174, %173 : vector<8x32xf32>
    %176 = arith.divf %174, %175 : vector<8x32xf32>
    %177 = arith.mulf %168, %108 : vector<8x32xf32>
    %178 = arith.mulf %162, %170 : vector<8x32xf32>
    %179 = arith.addf %177, %178 : vector<8x32xf32>
    %180 = math.tanh %179 : vector<8x32xf32>
    %181 = arith.mulf %176, %180 : vector<8x32xf32>
    %182 = arith.index_cast %c2_i32 : i32 to index
    %c0_51 = arith.constant 0 : index
    %c0_52 = arith.constant 0 : index
    %183 = vector.load %arg5[%182, %c0_51, %c0_52] : memref<8x8x32xf32, #tpu.memory_space<vmem>>, vector<1x8x32xf32>
    %184 = vector.shape_cast %183 : vector<1x8x32xf32> to vector<8x32xf32>
    %185 = vector.shape_cast %181 : vector<8x32xf32> to vector<1x8x32xf32>
    tpu.vector_store %arg5[%182, %c0_51, %c0_52], %185 {strides = array<i32>} : memref<8x8x32xf32, #tpu.memory_space<vmem>>, vector<1x8x32xf32>,
    %c7_i32_53 = arith.constant 7 : i32
    %186 = arith.subi %c7_i32_53, %c2_i32 : i32
    %187 = arith.index_cast %186 : i32 to index
    %c0_54 = arith.constant 0 : index
    %c0_55 = arith.constant 0 : index
    %188 = vector.load %arg2[%187, %c0_54, %c0_55] : memref<8x8x256xf32, #tpu.memory_space<vmem>>, vector<1x8x256xf32>
    %189 = vector.shape_cast %188 : vector<1x8x256xf32> to vector<8x256xf32>
    %190 = vector.extract_strided_slice %189 {offsets = [0, 128], sizes = [8, 128], strides = [1, 1]} : vector<8x256xf32> to vector<8x128xf32>
    %cst_56 = arith.constant dense<0.000000e+00> : vector<8x128xf32>
    %191 = tpu.matmul %146, %4, %cst_56 {dimension_numbers = #tpu.dot_dimension_numbers<[1], [0], [0], [1], [0, 0, 1, 1], [], []>} : vector<8x32xf32>, vector<32x128xf32>, vector<8x128xf32> -> vector<8x128xf32>
    %192 = arith.addf %190, %191 : vector<8x128xf32>
    %193 = vector.extract_strided_slice %192 {offsets = [0, 0], sizes = [8, 32], strides = [1, 1]} : vector<8x128xf32> to vector<8x32xf32>
    %194 = arith.negf %193 : vector<8x32xf32>
    %195 = math.exp %194 : vector<8x32xf32>
    %cst_57 = arith.constant 1.000000e+00 : f32
    %196 = vector.broadcast %cst_57 : f32 to vector<8x32xf32>
    %197 = arith.addf %196, %195 : vector<8x32xf32>
    %198 = arith.divf %196, %197 : vector<8x32xf32>
    %199 = vector.extract_strided_slice %192 {offsets = [0, 32], sizes = [8, 32], strides = [1, 1]} : vector<8x128xf32> to vector<8x32xf32>
    %200 = arith.negf %199 : vector<8x32xf32>
    %201 = math.exp %200 : vector<8x32xf32>
    %cst_58 = arith.constant 1.000000e+00 : f32
    %202 = vector.broadcast %cst_58 : f32 to vector<8x32xf32>
    %203 = arith.addf %202, %201 : vector<8x32xf32>
    %204 = arith.divf %202, %203 : vector<8x32xf32>
    %205 = vector.extract_strided_slice %192 {offsets = [0, 64], sizes = [8, 32], strides = [1, 1]} : vector<8x128xf32> to vector<8x32xf32>
    %206 = math.tanh %205 : vector<8x32xf32>
    %207 = vector.extract_strided_slice %192 {offsets = [0, 96], sizes = [8, 32], strides = [1, 1]} : vector<8x128xf32> to vector<8x32xf32>
    %208 = arith.negf %207 : vector<8x32xf32>
    %209 = math.exp %208 : vector<8x32xf32>
    %cst_59 = arith.constant 1.000000e+00 : f32
    %210 = vector.broadcast %cst_59 : f32 to vector<8x32xf32>
    %211 = arith.addf %210, %209 : vector<8x32xf32>
    %212 = arith.divf %210, %211 : vector<8x32xf32>
    %213 = arith.mulf %204, %144 : vector<8x32xf32>
    %214 = arith.mulf %198, %206 : vector<8x32xf32>
    %215 = arith.addf %213, %214 : vector<8x32xf32>
    %216 = math.tanh %215 : vector<8x32xf32>
    %217 = arith.mulf %212, %216 : vector<8x32xf32>
    %218 = arith.index_cast %186 : i32 to index
    %c0_60 = arith.constant 0 : index
    %c0_61 = arith.constant 0 : index
    %219 = vector.load %arg6[%218, %c0_60, %c0_61] : memref<8x8x32xf32, #tpu.memory_space<vmem>>, vector<1x8x32xf32>
    %220 = vector.shape_cast %219 : vector<1x8x32xf32> to vector<8x32xf32>
    %221 = vector.shape_cast %217 : vector<8x32xf32> to vector<1x8x32xf32>
    tpu.vector_store %arg6[%218, %c0_60, %c0_61], %221 {strides = array<i32>} : memref<8x8x32xf32, #tpu.memory_space<vmem>>, vector<1x8x32xf32>,
    %c3_i32 = arith.constant 3 : i32
    %222 = arith.index_cast %c3_i32 : i32 to index
    %c0_62 = arith.constant 0 : index
    %c0_63 = arith.constant 0 : index
    %223 = vector.load %arg1[%222, %c0_62, %c0_63] : memref<8x8x256xf32, #tpu.memory_space<vmem>>, vector<1x8x256xf32>
    %224 = vector.shape_cast %223 : vector<1x8x256xf32> to vector<8x256xf32>
    %225 = vector.extract_strided_slice %224 {offsets = [0, 0], sizes = [8, 128], strides = [1, 1]} : vector<8x256xf32> to vector<8x128xf32>
    %cst_64 = arith.constant dense<0.000000e+00> : vector<8x128xf32>
    %226 = tpu.matmul %181, %3, %cst_64 {dimension_numbers = #tpu.dot_dimension_numbers<[1], [0], [0], [1], [0, 0, 1, 1], [], []>} : vector<8x32xf32>, vector<32x128xf32>, vector<8x128xf32> -> vector<8x128xf32>
    %227 = arith.addf %225, %226 : vector<8x128xf32>
    %228 = vector.extract_strided_slice %227 {offsets = [0, 0], sizes = [8, 32], strides = [1, 1]} : vector<8x128xf32> to vector<8x32xf32>
    %229 = arith.negf %228 : vector<8x32xf32>
    %230 = math.exp %229 : vector<8x32xf32>
    %cst_65 = arith.constant 1.000000e+00 : f32
    %231 = vector.broadcast %cst_65 : f32 to vector<8x32xf32>
    %232 = arith.addf %231, %230 : vector<8x32xf32>
    %233 = arith.divf %231, %232 : vector<8x32xf32>
    %234 = vector.extract_strided_slice %227 {offsets = [0, 32], sizes = [8, 32], strides = [1, 1]} : vector<8x128xf32> to vector<8x32xf32>
    %235 = arith.negf %234 : vector<8x32xf32>
    %236 = math.exp %235 : vector<8x32xf32>
    %cst_66 = arith.constant 1.000000e+00 : f32
    %237 = vector.broadcast %cst_66 : f32 to vector<8x32xf32>
    %238 = arith.addf %237, %236 : vector<8x32xf32>
    %239 = arith.divf %237, %238 : vector<8x32xf32>
    %240 = vector.extract_strided_slice %227 {offsets = [0, 64], sizes = [8, 32], strides = [1, 1]} : vector<8x128xf32> to vector<8x32xf32>
    %241 = math.tanh %240 : vector<8x32xf32>
    %242 = vector.extract_strided_slice %227 {offsets = [0, 96], sizes = [8, 32], strides = [1, 1]} : vector<8x128xf32> to vector<8x32xf32>
    %243 = arith.negf %242 : vector<8x32xf32>
    %244 = math.exp %243 : vector<8x32xf32>
    %cst_67 = arith.constant 1.000000e+00 : f32
    %245 = vector.broadcast %cst_67 : f32 to vector<8x32xf32>
    %246 = arith.addf %245, %244 : vector<8x32xf32>
    %247 = arith.divf %245, %246 : vector<8x32xf32>
    %248 = arith.mulf %239, %179 : vector<8x32xf32>
    %249 = arith.mulf %233, %241 : vector<8x32xf32>
    %250 = arith.addf %248, %249 : vector<8x32xf32>
    %251 = math.tanh %250 : vector<8x32xf32>
    %252 = arith.mulf %247, %251 : vector<8x32xf32>
    %253 = arith.index_cast %c3_i32 : i32 to index
    %c0_68 = arith.constant 0 : index
    %c0_69 = arith.constant 0 : index
    %254 = vector.load %arg5[%253, %c0_68, %c0_69] : memref<8x8x32xf32, #tpu.memory_space<vmem>>, vector<1x8x32xf32>
    %255 = vector.shape_cast %254 : vector<1x8x32xf32> to vector<8x32xf32>
    %256 = vector.shape_cast %252 : vector<8x32xf32> to vector<1x8x32xf32>
    tpu.vector_store %arg5[%253, %c0_68, %c0_69], %256 {strides = array<i32>} : memref<8x8x32xf32, #tpu.memory_space<vmem>>, vector<1x8x32xf32>,
    %c7_i32_70 = arith.constant 7 : i32
    %257 = arith.subi %c7_i32_70, %c3_i32 : i32
    %258 = arith.index_cast %257 : i32 to index
    %c0_71 = arith.constant 0 : index
    %c0_72 = arith.constant 0 : index
    %259 = vector.load %arg2[%258, %c0_71, %c0_72] : memref<8x8x256xf32, #tpu.memory_space<vmem>>, vector<1x8x256xf32>
    %260 = vector.shape_cast %259 : vector<1x8x256xf32> to vector<8x256xf32>
    %261 = vector.extract_strided_slice %260 {offsets = [0, 128], sizes = [8, 128], strides = [1, 1]} : vector<8x256xf32> to vector<8x128xf32>
    %cst_73 = arith.constant dense<0.000000e+00> : vector<8x128xf32>
    %262 = tpu.matmul %217, %4, %cst_73 {dimension_numbers = #tpu.dot_dimension_numbers<[1], [0], [0], [1], [0, 0, 1, 1], [], []>} : vector<8x32xf32>, vector<32x128xf32>, vector<8x128xf32> -> vector<8x128xf32>
    %263 = arith.addf %261, %262 : vector<8x128xf32>
    %264 = vector.extract_strided_slice %263 {offsets = [0, 0], sizes = [8, 32], strides = [1, 1]} : vector<8x128xf32> to vector<8x32xf32>
    %265 = arith.negf %264 : vector<8x32xf32>
    %266 = math.exp %265 : vector<8x32xf32>
    %cst_74 = arith.constant 1.000000e+00 : f32
    %267 = vector.broadcast %cst_74 : f32 to vector<8x32xf32>
    %268 = arith.addf %267, %266 : vector<8x32xf32>
    %269 = arith.divf %267, %268 : vector<8x32xf32>
    %270 = vector.extract_strided_slice %263 {offsets = [0, 32], sizes = [8, 32], strides = [1, 1]} : vector<8x128xf32> to vector<8x32xf32>
    %271 = arith.negf %270 : vector<8x32xf32>
    %272 = math.exp %271 : vector<8x32xf32>
    %cst_75 = arith.constant 1.000000e+00 : f32
    %273 = vector.broadcast %cst_75 : f32 to vector<8x32xf32>
    %274 = arith.addf %273, %272 : vector<8x32xf32>
    %275 = arith.divf %273, %274 : vector<8x32xf32>
    %276 = vector.extract_strided_slice %263 {offsets = [0, 64], sizes = [8, 32], strides = [1, 1]} : vector<8x128xf32> to vector<8x32xf32>
    %277 = math.tanh %276 : vector<8x32xf32>
    %278 = vector.extract_strided_slice %263 {offsets = [0, 96], sizes = [8, 32], strides = [1, 1]} : vector<8x128xf32> to vector<8x32xf32>
    %279 = arith.negf %278 : vector<8x32xf32>
    %280 = math.exp %279 : vector<8x32xf32>
    %cst_76 = arith.constant 1.000000e+00 : f32
    %281 = vector.broadcast %cst_76 : f32 to vector<8x32xf32>
    %282 = arith.addf %281, %280 : vector<8x32xf32>
    %283 = arith.divf %281, %282 : vector<8x32xf32>
    %284 = arith.mulf %275, %215 : vector<8x32xf32>
    %285 = arith.mulf %269, %277 : vector<8x32xf32>
    %286 = arith.addf %284, %285 : vector<8x32xf32>
    %287 = math.tanh %286 : vector<8x32xf32>
    %288 = arith.mulf %283, %287 : vector<8x32xf32>
    %289 = arith.index_cast %257 : i32 to index
    %c0_77 = arith.constant 0 : index
    %c0_78 = arith.constant 0 : index
    %290 = vector.load %arg6[%289, %c0_77, %c0_78] : memref<8x8x32xf32, #tpu.memory_space<vmem>>, vector<1x8x32xf32>
    %291 = vector.shape_cast %290 : vector<1x8x32xf32> to vector<8x32xf32>
    %292 = vector.shape_cast %288 : vector<8x32xf32> to vector<1x8x32xf32>
    tpu.vector_store %arg6[%289, %c0_77, %c0_78], %292 {strides = array<i32>} : memref<8x8x32xf32, #tpu.memory_space<vmem>>, vector<1x8x32xf32>,
    %c4_i32 = arith.constant 4 : i32
    %293 = arith.index_cast %c4_i32 : i32 to index
    %c0_79 = arith.constant 0 : index
    %c0_80 = arith.constant 0 : index
    %294 = vector.load %arg1[%293, %c0_79, %c0_80] : memref<8x8x256xf32, #tpu.memory_space<vmem>>, vector<1x8x256xf32>
    %295 = vector.shape_cast %294 : vector<1x8x256xf32> to vector<8x256xf32>
    %296 = vector.extract_strided_slice %295 {offsets = [0, 0], sizes = [8, 128], strides = [1, 1]} : vector<8x256xf32> to vector<8x128xf32>
    %cst_81 = arith.constant dense<0.000000e+00> : vector<8x128xf32>
    %297 = tpu.matmul %252, %3, %cst_81 {dimension_numbers = #tpu.dot_dimension_numbers<[1], [0], [0], [1], [0, 0, 1, 1], [], []>} : vector<8x32xf32>, vector<32x128xf32>, vector<8x128xf32> -> vector<8x128xf32>
    %298 = arith.addf %296, %297 : vector<8x128xf32>
    %299 = vector.extract_strided_slice %298 {offsets = [0, 0], sizes = [8, 32], strides = [1, 1]} : vector<8x128xf32> to vector<8x32xf32>
    %300 = arith.negf %299 : vector<8x32xf32>
    %301 = math.exp %300 : vector<8x32xf32>
    %cst_82 = arith.constant 1.000000e+00 : f32
    %302 = vector.broadcast %cst_82 : f32 to vector<8x32xf32>
    %303 = arith.addf %302, %301 : vector<8x32xf32>
    %304 = arith.divf %302, %303 : vector<8x32xf32>
    %305 = vector.extract_strided_slice %298 {offsets = [0, 32], sizes = [8, 32], strides = [1, 1]} : vector<8x128xf32> to vector<8x32xf32>
    %306 = arith.negf %305 : vector<8x32xf32>
    %307 = math.exp %306 : vector<8x32xf32>
    %cst_83 = arith.constant 1.000000e+00 : f32
    %308 = vector.broadcast %cst_83 : f32 to vector<8x32xf32>
    %309 = arith.addf %308, %307 : vector<8x32xf32>
    %310 = arith.divf %308, %309 : vector<8x32xf32>
    %311 = vector.extract_strided_slice %298 {offsets = [0, 64], sizes = [8, 32], strides = [1, 1]} : vector<8x128xf32> to vector<8x32xf32>
    %312 = math.tanh %311 : vector<8x32xf32>
    %313 = vector.extract_strided_slice %298 {offsets = [0, 96], sizes = [8, 32], strides = [1, 1]} : vector<8x128xf32> to vector<8x32xf32>
    %314 = arith.negf %313 : vector<8x32xf32>
    %315 = math.exp %314 : vector<8x32xf32>
    %cst_84 = arith.constant 1.000000e+00 : f32
    %316 = vector.broadcast %cst_84 : f32 to vector<8x32xf32>
    %317 = arith.addf %316, %315 : vector<8x32xf32>
    %318 = arith.divf %316, %317 : vector<8x32xf32>
    %319 = arith.mulf %310, %250 : vector<8x32xf32>
    %320 = arith.mulf %304, %312 : vector<8x32xf32>
    %321 = arith.addf %319, %320 : vector<8x32xf32>
    %322 = math.tanh %321 : vector<8x32xf32>
    %323 = arith.mulf %318, %322 : vector<8x32xf32>
    %324 = arith.index_cast %c4_i32 : i32 to index
    %c0_85 = arith.constant 0 : index
    %c0_86 = arith.constant 0 : index
    %325 = vector.load %arg5[%324, %c0_85, %c0_86] : memref<8x8x32xf32, #tpu.memory_space<vmem>>, vector<1x8x32xf32>
    %326 = vector.shape_cast %325 : vector<1x8x32xf32> to vector<8x32xf32>
    %327 = vector.shape_cast %323 : vector<8x32xf32> to vector<1x8x32xf32>
    tpu.vector_store %arg5[%324, %c0_85, %c0_86], %327 {strides = array<i32>} : memref<8x8x32xf32, #tpu.memory_space<vmem>>, vector<1x8x32xf32>,
    %c7_i32_87 = arith.constant 7 : i32
    %328 = arith.subi %c7_i32_87, %c4_i32 : i32
    %329 = arith.index_cast %328 : i32 to index
    %c0_88 = arith.constant 0 : index
    %c0_89 = arith.constant 0 : index
    %330 = vector.load %arg2[%329, %c0_88, %c0_89] : memref<8x8x256xf32, #tpu.memory_space<vmem>>, vector<1x8x256xf32>
    %331 = vector.shape_cast %330 : vector<1x8x256xf32> to vector<8x256xf32>
    %332 = vector.extract_strided_slice %331 {offsets = [0, 128], sizes = [8, 128], strides = [1, 1]} : vector<8x256xf32> to vector<8x128xf32>
    %cst_90 = arith.constant dense<0.000000e+00> : vector<8x128xf32>
    %333 = tpu.matmul %288, %4, %cst_90 {dimension_numbers = #tpu.dot_dimension_numbers<[1], [0], [0], [1], [0, 0, 1, 1], [], []>} : vector<8x32xf32>, vector<32x128xf32>, vector<8x128xf32> -> vector<8x128xf32>
    %334 = arith.addf %332, %333 : vector<8x128xf32>
    %335 = vector.extract_strided_slice %334 {offsets = [0, 0], sizes = [8, 32], strides = [1, 1]} : vector<8x128xf32> to vector<8x32xf32>
    %336 = arith.negf %335 : vector<8x32xf32>
    %337 = math.exp %336 : vector<8x32xf32>
    %cst_91 = arith.constant 1.000000e+00 : f32
    %338 = vector.broadcast %cst_91 : f32 to vector<8x32xf32>
    %339 = arith.addf %338, %337 : vector<8x32xf32>
    %340 = arith.divf %338, %339 : vector<8x32xf32>
    %341 = vector.extract_strided_slice %334 {offsets = [0, 32], sizes = [8, 32], strides = [1, 1]} : vector<8x128xf32> to vector<8x32xf32>
    %342 = arith.negf %341 : vector<8x32xf32>
    %343 = math.exp %342 : vector<8x32xf32>
    %cst_92 = arith.constant 1.000000e+00 : f32
    %344 = vector.broadcast %cst_92 : f32 to vector<8x32xf32>
    %345 = arith.addf %344, %343 : vector<8x32xf32>
    %346 = arith.divf %344, %345 : vector<8x32xf32>
    %347 = vector.extract_strided_slice %334 {offsets = [0, 64], sizes = [8, 32], strides = [1, 1]} : vector<8x128xf32> to vector<8x32xf32>
    %348 = math.tanh %347 : vector<8x32xf32>
    %349 = vector.extract_strided_slice %334 {offsets = [0, 96], sizes = [8, 32], strides = [1, 1]} : vector<8x128xf32> to vector<8x32xf32>
    %350 = arith.negf %349 : vector<8x32xf32>
    %351 = math.exp %350 : vector<8x32xf32>
    %cst_93 = arith.constant 1.000000e+00 : f32
    %352 = vector.broadcast %cst_93 : f32 to vector<8x32xf32>
    %353 = arith.addf %352, %351 : vector<8x32xf32>
    %354 = arith.divf %352, %353 : vector<8x32xf32>
    %355 = arith.mulf %346, %286 : vector<8x32xf32>
    %356 = arith.mulf %340, %348 : vector<8x32xf32>
    %357 = arith.addf %355, %356 : vector<8x32xf32>
    %358 = math.tanh %357 : vector<8x32xf32>
    %359 = arith.mulf %354, %358 : vector<8x32xf32>
    %360 = arith.index_cast %328 : i32 to index
    %c0_94 = arith.constant 0 : index
    %c0_95 = arith.constant 0 : index
    %361 = vector.load %arg6[%360, %c0_94, %c0_95] : memref<8x8x32xf32, #tpu.memory_space<vmem>>, vector<1x8x32xf32>
    %362 = vector.shape_cast %361 : vector<1x8x32xf32> to vector<8x32xf32>
    %363 = vector.shape_cast %359 : vector<8x32xf32> to vector<1x8x32xf32>
    tpu.vector_store %arg6[%360, %c0_94, %c0_95], %363 {strides = array<i32>} : memref<8x8x32xf32, #tpu.memory_space<vmem>>, vector<1x8x32xf32>,
    %c5_i32 = arith.constant 5 : i32
    %364 = arith.index_cast %c5_i32 : i32 to index
    %c0_96 = arith.constant 0 : index
    %c0_97 = arith.constant 0 : index
    %365 = vector.load %arg1[%364, %c0_96, %c0_97] : memref<8x8x256xf32, #tpu.memory_space<vmem>>, vector<1x8x256xf32>
    %366 = vector.shape_cast %365 : vector<1x8x256xf32> to vector<8x256xf32>
    %367 = vector.extract_strided_slice %366 {offsets = [0, 0], sizes = [8, 128], strides = [1, 1]} : vector<8x256xf32> to vector<8x128xf32>
    %cst_98 = arith.constant dense<0.000000e+00> : vector<8x128xf32>
    %368 = tpu.matmul %323, %3, %cst_98 {dimension_numbers = #tpu.dot_dimension_numbers<[1], [0], [0], [1], [0, 0, 1, 1], [], []>} : vector<8x32xf32>, vector<32x128xf32>, vector<8x128xf32> -> vector<8x128xf32>
    %369 = arith.addf %367, %368 : vector<8x128xf32>
    %370 = vector.extract_strided_slice %369 {offsets = [0, 0], sizes = [8, 32], strides = [1, 1]} : vector<8x128xf32> to vector<8x32xf32>
    %371 = arith.negf %370 : vector<8x32xf32>
    %372 = math.exp %371 : vector<8x32xf32>
    %cst_99 = arith.constant 1.000000e+00 : f32
    %373 = vector.broadcast %cst_99 : f32 to vector<8x32xf32>
    %374 = arith.addf %373, %372 : vector<8x32xf32>
    %375 = arith.divf %373, %374 : vector<8x32xf32>
    %376 = vector.extract_strided_slice %369 {offsets = [0, 32], sizes = [8, 32], strides = [1, 1]} : vector<8x128xf32> to vector<8x32xf32>
    %377 = arith.negf %376 : vector<8x32xf32>
    %378 = math.exp %377 : vector<8x32xf32>
    %cst_100 = arith.constant 1.000000e+00 : f32
    %379 = vector.broadcast %cst_100 : f32 to vector<8x32xf32>
    %380 = arith.addf %379, %378 : vector<8x32xf32>
    %381 = arith.divf %379, %380 : vector<8x32xf32>
    %382 = vector.extract_strided_slice %369 {offsets = [0, 64], sizes = [8, 32], strides = [1, 1]} : vector<8x128xf32> to vector<8x32xf32>
    %383 = math.tanh %382 : vector<8x32xf32>
    %384 = vector.extract_strided_slice %369 {offsets = [0, 96], sizes = [8, 32], strides = [1, 1]} : vector<8x128xf32> to vector<8x32xf32>
    %385 = arith.negf %384 : vector<8x32xf32>
    %386 = math.exp %385 : vector<8x32xf32>
    %cst_101 = arith.constant 1.000000e+00 : f32
    %387 = vector.broadcast %cst_101 : f32 to vector<8x32xf32>
    %388 = arith.addf %387, %386 : vector<8x32xf32>
    %389 = arith.divf %387, %388 : vector<8x32xf32>
    %390 = arith.mulf %381, %321 : vector<8x32xf32>
    %391 = arith.mulf %375, %383 : vector<8x32xf32>
    %392 = arith.addf %390, %391 : vector<8x32xf32>
    %393 = math.tanh %392 : vector<8x32xf32>
    %394 = arith.mulf %389, %393 : vector<8x32xf32>
    %395 = arith.index_cast %c5_i32 : i32 to index
    %c0_102 = arith.constant 0 : index
    %c0_103 = arith.constant 0 : index
    %396 = vector.load %arg5[%395, %c0_102, %c0_103] : memref<8x8x32xf32, #tpu.memory_space<vmem>>, vector<1x8x32xf32>
    %397 = vector.shape_cast %396 : vector<1x8x32xf32> to vector<8x32xf32>
    %398 = vector.shape_cast %394 : vector<8x32xf32> to vector<1x8x32xf32>
    tpu.vector_store %arg5[%395, %c0_102, %c0_103], %398 {strides = array<i32>} : memref<8x8x32xf32, #tpu.memory_space<vmem>>, vector<1x8x32xf32>,
    %c7_i32_104 = arith.constant 7 : i32
    %399 = arith.subi %c7_i32_104, %c5_i32 : i32
    %400 = arith.index_cast %399 : i32 to index
    %c0_105 = arith.constant 0 : index
    %c0_106 = arith.constant 0 : index
    %401 = vector.load %arg2[%400, %c0_105, %c0_106] : memref<8x8x256xf32, #tpu.memory_space<vmem>>, vector<1x8x256xf32>
    %402 = vector.shape_cast %401 : vector<1x8x256xf32> to vector<8x256xf32>
    %403 = vector.extract_strided_slice %402 {offsets = [0, 128], sizes = [8, 128], strides = [1, 1]} : vector<8x256xf32> to vector<8x128xf32>
    %cst_107 = arith.constant dense<0.000000e+00> : vector<8x128xf32>
    %404 = tpu.matmul %359, %4, %cst_107 {dimension_numbers = #tpu.dot_dimension_numbers<[1], [0], [0], [1], [0, 0, 1, 1], [], []>} : vector<8x32xf32>, vector<32x128xf32>, vector<8x128xf32> -> vector<8x128xf32>
    %405 = arith.addf %403, %404 : vector<8x128xf32>
    %406 = vector.extract_strided_slice %405 {offsets = [0, 0], sizes = [8, 32], strides = [1, 1]} : vector<8x128xf32> to vector<8x32xf32>
    %407 = arith.negf %406 : vector<8x32xf32>
    %408 = math.exp %407 : vector<8x32xf32>
    %cst_108 = arith.constant 1.000000e+00 : f32
    %409 = vector.broadcast %cst_108 : f32 to vector<8x32xf32>
    %410 = arith.addf %409, %408 : vector<8x32xf32>
    %411 = arith.divf %409, %410 : vector<8x32xf32>
    %412 = vector.extract_strided_slice %405 {offsets = [0, 32], sizes = [8, 32], strides = [1, 1]} : vector<8x128xf32> to vector<8x32xf32>
    %413 = arith.negf %412 : vector<8x32xf32>
    %414 = math.exp %413 : vector<8x32xf32>
    %cst_109 = arith.constant 1.000000e+00 : f32
    %415 = vector.broadcast %cst_109 : f32 to vector<8x32xf32>
    %416 = arith.addf %415, %414 : vector<8x32xf32>
    %417 = arith.divf %415, %416 : vector<8x32xf32>
    %418 = vector.extract_strided_slice %405 {offsets = [0, 64], sizes = [8, 32], strides = [1, 1]} : vector<8x128xf32> to vector<8x32xf32>
    %419 = math.tanh %418 : vector<8x32xf32>
    %420 = vector.extract_strided_slice %405 {offsets = [0, 96], sizes = [8, 32], strides = [1, 1]} : vector<8x128xf32> to vector<8x32xf32>
    %421 = arith.negf %420 : vector<8x32xf32>
    %422 = math.exp %421 : vector<8x32xf32>
    %cst_110 = arith.constant 1.000000e+00 : f32
    %423 = vector.broadcast %cst_110 : f32 to vector<8x32xf32>
    %424 = arith.addf %423, %422 : vector<8x32xf32>
    %425 = arith.divf %423, %424 : vector<8x32xf32>
    %426 = arith.mulf %417, %357 : vector<8x32xf32>
    %427 = arith.mulf %411, %419 : vector<8x32xf32>
    %428 = arith.addf %426, %427 : vector<8x32xf32>
    %429 = math.tanh %428 : vector<8x32xf32>
    %430 = arith.mulf %425, %429 : vector<8x32xf32>
    %431 = arith.index_cast %399 : i32 to index
    %c0_111 = arith.constant 0 : index
    %c0_112 = arith.constant 0 : index
    %432 = vector.load %arg6[%431, %c0_111, %c0_112] : memref<8x8x32xf32, #tpu.memory_space<vmem>>, vector<1x8x32xf32>
    %433 = vector.shape_cast %432 : vector<1x8x32xf32> to vector<8x32xf32>
    %434 = vector.shape_cast %430 : vector<8x32xf32> to vector<1x8x32xf32>
    tpu.vector_store %arg6[%431, %c0_111, %c0_112], %434 {strides = array<i32>} : memref<8x8x32xf32, #tpu.memory_space<vmem>>, vector<1x8x32xf32>,
    %c6_i32 = arith.constant 6 : i32
    %435 = arith.index_cast %c6_i32 : i32 to index
    %c0_113 = arith.constant 0 : index
    %c0_114 = arith.constant 0 : index
    %436 = vector.load %arg1[%435, %c0_113, %c0_114] : memref<8x8x256xf32, #tpu.memory_space<vmem>>, vector<1x8x256xf32>
    %437 = vector.shape_cast %436 : vector<1x8x256xf32> to vector<8x256xf32>
    %438 = vector.extract_strided_slice %437 {offsets = [0, 0], sizes = [8, 128], strides = [1, 1]} : vector<8x256xf32> to vector<8x128xf32>
    %cst_115 = arith.constant dense<0.000000e+00> : vector<8x128xf32>
    %439 = tpu.matmul %394, %3, %cst_115 {dimension_numbers = #tpu.dot_dimension_numbers<[1], [0], [0], [1], [0, 0, 1, 1], [], []>} : vector<8x32xf32>, vector<32x128xf32>, vector<8x128xf32> -> vector<8x128xf32>
    %440 = arith.addf %438, %439 : vector<8x128xf32>
    %441 = vector.extract_strided_slice %440 {offsets = [0, 0], sizes = [8, 32], strides = [1, 1]} : vector<8x128xf32> to vector<8x32xf32>
    %442 = arith.negf %441 : vector<8x32xf32>
    %443 = math.exp %442 : vector<8x32xf32>
    %cst_116 = arith.constant 1.000000e+00 : f32
    %444 = vector.broadcast %cst_116 : f32 to vector<8x32xf32>
    %445 = arith.addf %444, %443 : vector<8x32xf32>
    %446 = arith.divf %444, %445 : vector<8x32xf32>
    %447 = vector.extract_strided_slice %440 {offsets = [0, 32], sizes = [8, 32], strides = [1, 1]} : vector<8x128xf32> to vector<8x32xf32>
    %448 = arith.negf %447 : vector<8x32xf32>
    %449 = math.exp %448 : vector<8x32xf32>
    %cst_117 = arith.constant 1.000000e+00 : f32
    %450 = vector.broadcast %cst_117 : f32 to vector<8x32xf32>
    %451 = arith.addf %450, %449 : vector<8x32xf32>
    %452 = arith.divf %450, %451 : vector<8x32xf32>
    %453 = vector.extract_strided_slice %440 {offsets = [0, 64], sizes = [8, 32], strides = [1, 1]} : vector<8x128xf32> to vector<8x32xf32>
    %454 = math.tanh %453 : vector<8x32xf32>
    %455 = vector.extract_strided_slice %440 {offsets = [0, 96], sizes = [8, 32], strides = [1, 1]} : vector<8x128xf32> to vector<8x32xf32>
    %456 = arith.negf %455 : vector<8x32xf32>
    %457 = math.exp %456 : vector<8x32xf32>
    %cst_118 = arith.constant 1.000000e+00 : f32
    %458 = vector.broadcast %cst_118 : f32 to vector<8x32xf32>
    %459 = arith.addf %458, %457 : vector<8x32xf32>
    %460 = arith.divf %458, %459 : vector<8x32xf32>
    %461 = arith.mulf %452, %392 : vector<8x32xf32>
    %462 = arith.mulf %446, %454 : vector<8x32xf32>
    %463 = arith.addf %461, %462 : vector<8x32xf32>
    %464 = math.tanh %463 : vector<8x32xf32>
    %465 = arith.mulf %460, %464 : vector<8x32xf32>
    %466 = arith.index_cast %c6_i32 : i32 to index
    %c0_119 = arith.constant 0 : index
    %c0_120 = arith.constant 0 : index
    %467 = vector.load %arg5[%466, %c0_119, %c0_120] : memref<8x8x32xf32, #tpu.memory_space<vmem>>, vector<1x8x32xf32>
    %468 = vector.shape_cast %467 : vector<1x8x32xf32> to vector<8x32xf32>
    %469 = vector.shape_cast %465 : vector<8x32xf32> to vector<1x8x32xf32>
    tpu.vector_store %arg5[%466, %c0_119, %c0_120], %469 {strides = array<i32>} : memref<8x8x32xf32, #tpu.memory_space<vmem>>, vector<1x8x32xf32>,
    %c7_i32_121 = arith.constant 7 : i32
    %470 = arith.subi %c7_i32_121, %c6_i32 : i32
    %471 = arith.index_cast %470 : i32 to index
    %c0_122 = arith.constant 0 : index
    %c0_123 = arith.constant 0 : index
    %472 = vector.load %arg2[%471, %c0_122, %c0_123] : memref<8x8x256xf32, #tpu.memory_space<vmem>>, vector<1x8x256xf32>
    %473 = vector.shape_cast %472 : vector<1x8x256xf32> to vector<8x256xf32>
    %474 = vector.extract_strided_slice %473 {offsets = [0, 128], sizes = [8, 128], strides = [1, 1]} : vector<8x256xf32> to vector<8x128xf32>
    %cst_124 = arith.constant dense<0.000000e+00> : vector<8x128xf32>
    %475 = tpu.matmul %430, %4, %cst_124 {dimension_numbers = #tpu.dot_dimension_numbers<[1], [0], [0], [1], [0, 0, 1, 1], [], []>} : vector<8x32xf32>, vector<32x128xf32>, vector<8x128xf32> -> vector<8x128xf32>
    %476 = arith.addf %474, %475 : vector<8x128xf32>
    %477 = vector.extract_strided_slice %476 {offsets = [0, 0], sizes = [8, 32], strides = [1, 1]} : vector<8x128xf32> to vector<8x32xf32>
    %478 = arith.negf %477 : vector<8x32xf32>
    %479 = math.exp %478 : vector<8x32xf32>
    %cst_125 = arith.constant 1.000000e+00 : f32
    %480 = vector.broadcast %cst_125 : f32 to vector<8x32xf32>
    %481 = arith.addf %480, %479 : vector<8x32xf32>
    %482 = arith.divf %480, %481 : vector<8x32xf32>
    %483 = vector.extract_strided_slice %476 {offsets = [0, 32], sizes = [8, 32], strides = [1, 1]} : vector<8x128xf32> to vector<8x32xf32>
    %484 = arith.negf %483 : vector<8x32xf32>
    %485 = math.exp %484 : vector<8x32xf32>
    %cst_126 = arith.constant 1.000000e+00 : f32
    %486 = vector.broadcast %cst_126 : f32 to vector<8x32xf32>
    %487 = arith.addf %486, %485 : vector<8x32xf32>
    %488 = arith.divf %486, %487 : vector<8x32xf32>
    %489 = vector.extract_strided_slice %476 {offsets = [0, 64], sizes = [8, 32], strides = [1, 1]} : vector<8x128xf32> to vector<8x32xf32>
    %490 = math.tanh %489 : vector<8x32xf32>
    %491 = vector.extract_strided_slice %476 {offsets = [0, 96], sizes = [8, 32], strides = [1, 1]} : vector<8x128xf32> to vector<8x32xf32>
    %492 = arith.negf %491 : vector<8x32xf32>
    %493 = math.exp %492 : vector<8x32xf32>
    %cst_127 = arith.constant 1.000000e+00 : f32
    %494 = vector.broadcast %cst_127 : f32 to vector<8x32xf32>
    %495 = arith.addf %494, %493 : vector<8x32xf32>
    %496 = arith.divf %494, %495 : vector<8x32xf32>
    %497 = arith.mulf %488, %428 : vector<8x32xf32>
    %498 = arith.mulf %482, %490 : vector<8x32xf32>
    %499 = arith.addf %497, %498 : vector<8x32xf32>
    %500 = math.tanh %499 : vector<8x32xf32>
    %501 = arith.mulf %496, %500 : vector<8x32xf32>
    %502 = arith.index_cast %470 : i32 to index
    %c0_128 = arith.constant 0 : index
    %c0_129 = arith.constant 0 : index
    %503 = vector.load %arg6[%502, %c0_128, %c0_129] : memref<8x8x32xf32, #tpu.memory_space<vmem>>, vector<1x8x32xf32>
    %504 = vector.shape_cast %503 : vector<1x8x32xf32> to vector<8x32xf32>
    %505 = vector.shape_cast %501 : vector<8x32xf32> to vector<1x8x32xf32>
    tpu.vector_store %arg6[%502, %c0_128, %c0_129], %505 {strides = array<i32>} : memref<8x8x32xf32, #tpu.memory_space<vmem>>, vector<1x8x32xf32>,
    %c7_i32_130 = arith.constant 7 : i32
    %506 = arith.index_cast %c7_i32_130 : i32 to index
    %c0_131 = arith.constant 0 : index
    %c0_132 = arith.constant 0 : index
    %507 = vector.load %arg1[%506, %c0_131, %c0_132] : memref<8x8x256xf32, #tpu.memory_space<vmem>>, vector<1x8x256xf32>
    %508 = vector.shape_cast %507 : vector<1x8x256xf32> to vector<8x256xf32>
    %509 = vector.extract_strided_slice %508 {offsets = [0, 0], sizes = [8, 128], strides = [1, 1]} : vector<8x256xf32> to vector<8x128xf32>
    %cst_133 = arith.constant dense<0.000000e+00> : vector<8x128xf32>
    %510 = tpu.matmul %465, %3, %cst_133 {dimension_numbers = #tpu.dot_dimension_numbers<[1], [0], [0], [1], [0, 0, 1, 1], [], []>} : vector<8x32xf32>, vector<32x128xf32>, vector<8x128xf32> -> vector<8x128xf32>
    %511 = arith.addf %509, %510 : vector<8x128xf32>
    %512 = vector.extract_strided_slice %511 {offsets = [0, 0], sizes = [8, 32], strides = [1, 1]} : vector<8x128xf32> to vector<8x32xf32>
    %513 = arith.negf %512 : vector<8x32xf32>
    %514 = math.exp %513 : vector<8x32xf32>
    %cst_134 = arith.constant 1.000000e+00 : f32
    %515 = vector.broadcast %cst_134 : f32 to vector<8x32xf32>
    %516 = arith.addf %515, %514 : vector<8x32xf32>
    %517 = arith.divf %515, %516 : vector<8x32xf32>
    %518 = vector.extract_strided_slice %511 {offsets = [0, 32], sizes = [8, 32], strides = [1, 1]} : vector<8x128xf32> to vector<8x32xf32>
    %519 = arith.negf %518 : vector<8x32xf32>
    %520 = math.exp %519 : vector<8x32xf32>
    %cst_135 = arith.constant 1.000000e+00 : f32
    %521 = vector.broadcast %cst_135 : f32 to vector<8x32xf32>
    %522 = arith.addf %521, %520 : vector<8x32xf32>
    %523 = arith.divf %521, %522 : vector<8x32xf32>
    %524 = vector.extract_strided_slice %511 {offsets = [0, 64], sizes = [8, 32], strides = [1, 1]} : vector<8x128xf32> to vector<8x32xf32>
    %525 = math.tanh %524 : vector<8x32xf32>
    %526 = vector.extract_strided_slice %511 {offsets = [0, 96], sizes = [8, 32], strides = [1, 1]} : vector<8x128xf32> to vector<8x32xf32>
    %527 = arith.negf %526 : vector<8x32xf32>
    %528 = math.exp %527 : vector<8x32xf32>
    %cst_136 = arith.constant 1.000000e+00 : f32
    %529 = vector.broadcast %cst_136 : f32 to vector<8x32xf32>
    %530 = arith.addf %529, %528 : vector<8x32xf32>
    %531 = arith.divf %529, %530 : vector<8x32xf32>
    %532 = arith.mulf %523, %463 : vector<8x32xf32>
    %533 = arith.mulf %517, %525 : vector<8x32xf32>
    %534 = arith.addf %532, %533 : vector<8x32xf32>
    %535 = math.tanh %534 : vector<8x32xf32>
    %536 = arith.mulf %531, %535 : vector<8x32xf32>
    %537 = arith.index_cast %c7_i32_130 : i32 to index
    %c0_137 = arith.constant 0 : index
    %c0_138 = arith.constant 0 : index
    %538 = vector.load %arg5[%537, %c0_137, %c0_138] : memref<8x8x32xf32, #tpu.memory_space<vmem>>, vector<1x8x32xf32>
    %539 = vector.shape_cast %538 : vector<1x8x32xf32> to vector<8x32xf32>
    %540 = vector.shape_cast %536 : vector<8x32xf32> to vector<1x8x32xf32>
    tpu.vector_store %arg5[%537, %c0_137, %c0_138], %540 {strides = array<i32>} : memref<8x8x32xf32, #tpu.memory_space<vmem>>, vector<1x8x32xf32>,
    %c7_i32_139 = arith.constant 7 : i32
    %541 = arith.subi %c7_i32_139, %c7_i32_130 : i32
    %542 = arith.index_cast %541 : i32 to index
    %c0_140 = arith.constant 0 : index
    %c0_141 = arith.constant 0 : index
    %543 = vector.load %arg2[%542, %c0_140, %c0_141] : memref<8x8x256xf32, #tpu.memory_space<vmem>>, vector<1x8x256xf32>
    %544 = vector.shape_cast %543 : vector<1x8x256xf32> to vector<8x256xf32>
    %545 = vector.extract_strided_slice %544 {offsets = [0, 128], sizes = [8, 128], strides = [1, 1]} : vector<8x256xf32> to vector<8x128xf32>
    %cst_142 = arith.constant dense<0.000000e+00> : vector<8x128xf32>
    %546 = tpu.matmul %501, %4, %cst_142 {dimension_numbers = #tpu.dot_dimension_numbers<[1], [0], [0], [1], [0, 0, 1, 1], [], []>} : vector<8x32xf32>, vector<32x128xf32>, vector<8x128xf32> -> vector<8x128xf32>
    %547 = arith.addf %545, %546 : vector<8x128xf32>
    %548 = vector.extract_strided_slice %547 {offsets = [0, 0], sizes = [8, 32], strides = [1, 1]} : vector<8x128xf32> to vector<8x32xf32>
    %549 = arith.negf %548 : vector<8x32xf32>
    %550 = math.exp %549 : vector<8x32xf32>
    %cst_143 = arith.constant 1.000000e+00 : f32
    %551 = vector.broadcast %cst_143 : f32 to vector<8x32xf32>
    %552 = arith.addf %551, %550 : vector<8x32xf32>
    %553 = arith.divf %551, %552 : vector<8x32xf32>
    %554 = vector.extract_strided_slice %547 {offsets = [0, 32], sizes = [8, 32], strides = [1, 1]} : vector<8x128xf32> to vector<8x32xf32>
    %555 = arith.negf %554 : vector<8x32xf32>
    %556 = math.exp %555 : vector<8x32xf32>
    %cst_144 = arith.constant 1.000000e+00 : f32
    %557 = vector.broadcast %cst_144 : f32 to vector<8x32xf32>
    %558 = arith.addf %557, %556 : vector<8x32xf32>
    %559 = arith.divf %557, %558 : vector<8x32xf32>
    %560 = vector.extract_strided_slice %547 {offsets = [0, 64], sizes = [8, 32], strides = [1, 1]} : vector<8x128xf32> to vector<8x32xf32>
    %561 = math.tanh %560 : vector<8x32xf32>
    %562 = vector.extract_strided_slice %547 {offsets = [0, 96], sizes = [8, 32], strides = [1, 1]} : vector<8x128xf32> to vector<8x32xf32>
    %563 = arith.negf %562 : vector<8x32xf32>
    %564 = math.exp %563 : vector<8x32xf32>
    %cst_145 = arith.constant 1.000000e+00 : f32
    %565 = vector.broadcast %cst_145 : f32 to vector<8x32xf32>
    %566 = arith.addf %565, %564 : vector<8x32xf32>
    %567 = arith.divf %565, %566 : vector<8x32xf32>
    %568 = arith.mulf %559, %499 : vector<8x32xf32>
    %569 = arith.mulf %553, %561 : vector<8x32xf32>
    %570 = arith.addf %568, %569 : vector<8x32xf32>
    %571 = math.tanh %570 : vector<8x32xf32>
    %572 = arith.mulf %567, %571 : vector<8x32xf32>
    %573 = arith.index_cast %541 : i32 to index
    %c0_146 = arith.constant 0 : index
    %c0_147 = arith.constant 0 : index
    %574 = vector.load %arg6[%573, %c0_146, %c0_147] : memref<8x8x32xf32, #tpu.memory_space<vmem>>, vector<1x8x32xf32>
    %575 = vector.shape_cast %574 : vector<1x8x32xf32> to vector<8x32xf32>
    %576 = vector.shape_cast %572 : vector<8x32xf32> to vector<1x8x32xf32>
    tpu.vector_store %arg6[%573, %c0_146, %c0_147], %576 {strides = array<i32>} : memref<8x8x32xf32, #tpu.memory_space<vmem>>, vector<1x8x32xf32>,
    %c8_i32 = arith.constant 8 : i32
    %c0_148 = arith.constant 0 : index
    %c0_149 = arith.constant 0 : index
    %577 = vector.load %arg7[%c0_148, %c0_149] : memref<8x32xf32, #tpu.memory_space<vmem>>, vector<8x32xf32>
    tpu.vector_store %arg7[%c0_148, %c0_149], %536 {strides = array<i32>} : memref<8x32xf32, #tpu.memory_space<vmem>>, vector<8x32xf32>,
    %c0_150 = arith.constant 0 : index
    %c0_151 = arith.constant 0 : index
    %578 = vector.load %arg8[%c0_150, %c0_151] : memref<8x32xf32, #tpu.memory_space<vmem>>, vector<8x32xf32>
    tpu.vector_store %arg8[%c0_150, %c0_151], %534 {strides = array<i32>} : memref<8x32xf32, #tpu.memory_space<vmem>>, vector<8x32xf32>,
    %c0_152 = arith.constant 0 : index
    %c0_153 = arith.constant 0 : index
    %579 = vector.load %arg9[%c0_152, %c0_153] : memref<8x32xf32, #tpu.memory_space<vmem>>, vector<8x32xf32>
    tpu.vector_store %arg9[%c0_152, %c0_153], %572 {strides = array<i32>} : memref<8x32xf32, #tpu.memory_space<vmem>>, vector<8x32xf32>,
    %c0_154 = arith.constant 0 : index
    %c0_155 = arith.constant 0 : index
    %580 = vector.load %arg10[%c0_154, %c0_155] : memref<8x32xf32, #tpu.memory_space<vmem>>, vector<8x32xf32>
    tpu.vector_store %arg10[%c0_154, %c0_155], %570 {strides = array<i32>} : memref<8x32xf32, #tpu.memory_space<vmem>>, vector<8x32xf32>,
    return
  }
  func.func @transform_0(%arg0: i32) -> (i32, i32, i32) {
    %c0_i32 = arith.constant 0 : i32
    %c0_i32_0 = arith.constant 0 : i32
    %c0_i32_1 = arith.constant 0 : i32
    return %arg0, %c0_i32, %c0_i32_0 : i32, i32, i32
  }
  func.func @transform_1(%arg0: i32) -> (i32, i32, i32) {
    %c1_i32 = arith.constant 1 : i32
    %0 = arith.subi %c1_i32, %arg0 : i32
    %c0_i32 = arith.constant 0 : i32
    %c0_i32_0 = arith.constant 0 : i32
    %c0_i32_1 = arith.constant 0 : i32
    return %0, %c0_i32, %c0_i32_0 : i32, i32, i32
  }
  func.func @transform_2(%arg0: i32) -> (i32, i32) {
    %c0_i32 = arith.constant 0 : i32
    %c0_i32_0 = arith.constant 0 : i32
    %c0_i32_1 = arith.constant 0 : i32
    return %c0_i32, %c0_i32_0 : i32, i32
  }
  func.func @transform_3(%arg0: i32) -> (i32, i32) {
    %c0_i32 = arith.constant 0 : i32
    %c0_i32_0 = arith.constant 0 : i32
    %c0_i32_1 = arith.constant 0 : i32
    return %c0_i32, %c0_i32_0 : i32, i32
  }
  func.func @transform_4(%arg0: i32) -> (i32, i32, i32) {
    %c0_i32 = arith.constant 0 : i32
    %c0_i32_0 = arith.constant 0 : i32
    %c0_i32_1 = arith.constant 0 : i32
    return %arg0, %c0_i32, %c0_i32_0 : i32, i32, i32
  }
  func.func @transform_5(%arg0: i32) -> (i32, i32, i32) {
    %c1_i32 = arith.constant 1 : i32
    %0 = arith.subi %c1_i32, %arg0 : i32
    %c0_i32 = arith.constant 0 : i32
    %c0_i32_0 = arith.constant 0 : i32
    %c0_i32_1 = arith.constant 0 : i32
    return %0, %c0_i32, %c0_i32_0 : i32, i32, i32
  }
}

</mosaic_0001>

<llo_original>
// kernel: tagger_forward.5
$region0: #{tagger_forward.5}
  #allocation0 [shape = 'u32[]', space=smem, size = 0x4, offset = 0x4, fixed_abs, tag = 'smem constant byte address 0x4 - core index']
  #allocation1 [shape = 'u32[144,128]{1,0:T(1,128)}', space=vmem, size = 0x12000, scoped, tag = 'internal scratch']
  %s0 = inlined_call_operand.vmem [shape: f32[128,32], index: 0, kind: input, shape index: {}]
  %s1 = inlined_call_operand.vmem [shape: f32[128,32], index: 1, kind: input, shape index: {}]
  %s2 = inlined_call_operand.vmem [shape: f32[32,256], index: 2, kind: input, shape index: {}]
  %s3 = inlined_call_operand.vmem [shape: f32[32,256], index: 3, kind: input, shape index: {}]
  %s4 = inlined_call_operand.vmem [shape: f32[1,256], index: 4, kind: input, shape index: {}]
  %s5 = inlined_call_operand.vmem [shape: f32[256,128], index: 5, kind: input, shape index: {}]
  %s6 = inlined_call_operand.vmem [shape: f32[1,128], index: 6, kind: input, shape index: {}]
  %s7 = inlined_call_operand.vmem [shape: f32[128,128], index: 7, kind: output, shape index: {}]
  %s8 = sld [smem:[#allocation0]]
  $region38: #{tagger_forward.5} parent=0
    _
  %s10 = ssub.s32 1, %s8
  %s11 = scalar_select 0, %s10, %s8
  // Predicated region
  $region2: #{tagger_forward.5} parent=0 // pred_check
    _
  $region3: #{tagger_forward.5} parent=0 // pred_check_branch
    %13 = sbr.rel (0) target = $region5
  $region4: #{tagger_forward.5} parent=0 // pred_region
    _
  $region5: #{tagger_forward.5} parent=0 // pred_fallthru
    _
  // Predicated region
  $region6: #{tagger_forward.5} parent=0 // pred_check
    _
  $region7: #{tagger_forward.5} parent=0 // pred_check_branch
    %15 = sbr.rel (0) target = $region9
  $region8: #{tagger_forward.5} parent=0 // pred_region
    _
  $region9: #{tagger_forward.5} parent=0 // pred_fallthru
    _
  // Predicated region
  $region10: #{tagger_forward.5} parent=0 // pred_check
    _
  $region11: #{tagger_forward.5} parent=0 // pred_check_branch
    %17 = sbr.rel (0) target = $region13
  $region12: #{tagger_forward.5} parent=0 // pred_region
    _
  $region13: #{tagger_forward.5} parent=0 // pred_fallthru
    _
  // Predicated region
  $region14: #{tagger_forward.5} parent=0 // pred_check
    _
  $region15: #{tagger_forward.5} parent=0 // pred_check_branch
    %19 = sbr.rel (0) target = $region17
  $region16: #{tagger_forward.5} parent=0 // pred_region
    _
  $region17: #{tagger_forward.5} parent=0 // pred_fallthru
    _
  // Predicated region
  $region18: #{tagger_forward.5} parent=0 // pred_check
    _
  $region19: #{tagger_forward.5} parent=0 // pred_check_branch
    %21 = sbr.rel (0) target = $region21
  $region20: #{tagger_forward.5} parent=0 // pred_region
    _
  $region21: #{tagger_forward.5} parent=0 // pred_fallthru
    _
  // Predicated region
  $region22: #{tagger_forward.5} parent=0 // pred_check
    _
  $region23: #{tagger_forward.5} parent=0 // pred_check_branch
    %23 = sbr.rel (0) target = $region25
  $region24: #{tagger_forward.5} parent=0 // pred_region
    _
  $region25: #{tagger_forward.5} parent=0 // pred_fallthru
    _
  // Predicated region
  $region26: #{tagger_forward.5} parent=0 // pred_check
    _
  $region27: #{tagger_forward.5} parent=0 // pred_check_branch
    %25 = sbr.rel (0) target = $region29
  $region28: #{tagger_forward.5} parent=0 // pred_region
    _
  $region29: #{tagger_forward.5} parent=0 // pred_fallthru
    _
  %v26 = vld [vmem:[%s0] sm:$0xff]
  %v27 = vld [vmem:[%s0 + $0x8] sm:$0xff]
  %v28 = vld [vmem:[%s0 + $0x10] sm:$0xff]
  %v29 = vld [vmem:[%s0 + $0x18] sm:$0xff]
  %v30 = vld [vmem:[%s0 + $0x20] sm:$0xff]
  %v31 = vld [vmem:[%s0 + $0x28] sm:$0xff]
  %v32 = vld [vmem:[%s0 + $0x30] sm:$0xff]
  %v33 = vld [vmem:[%s0 + $0x38] sm:$0xff]
  %v34 = vld [vmem:[%s0 + $0x40] sm:$0xff]
  %v35 = vld [vmem:[%s0 + $0x48] sm:$0xff]
  %v36 = vld [vmem:[%s0 + $0x50] sm:$0xff]
  %v37 = vld [vmem:[%s0 + $0x58] sm:$0xff]
  %v38 = vld [vmem:[%s0 + $0x60] sm:$0xff]
  %v39 = vld [vmem:[%s0 + $0x68] sm:$0xff]
  %v40 = vld [vmem:[%s0 + $0x70] sm:$0xff]
  %v41 = vld [vmem:[%s0 + $0x78] sm:$0xff]
  %v42 = vld [vmem:[%s2] sm:$0xff]
  %v43 = vld [vmem:[%s2 + $0x8] sm:$0xff]
  %v44 = vld [vmem:[%s2 + $0x10] sm:$0xff]
  %v45 = vld [vmem:[%s2 + $0x18] sm:$0xff]
  %v46 = vld [vmem:[%s2 + $0x20] sm:$0xff]
  %v47 = vld [vmem:[%s2 + $0x28] sm:$0xff]
  %v48 = vld [vmem:[%s2 + $0x30] sm:$0xff]
  %v49 = vld [vmem:[%s2 + $0x38] sm:$0xff]
  %v50 = vld [vmem:[%s1] sm:$0xff]
  %v51 = vld [vmem:[%s1 + $0x8] sm:$0xff]
  %v52 = vld [vmem:[%s1 + $0x10] sm:$0xff]
  %v53 = vld [vmem:[%s1 + $0x18] sm:$0xff]
  %v54 = vld [vmem:[%s1 + $0x20] sm:$0xff]
  %v55 = vld [vmem:[%s1 + $0x28] sm:$0xff]
  %v56 = vld [vmem:[%s1 + $0x30] sm:$0xff]
  %v57 = vld [vmem:[%s1 + $0x38] sm:$0xff]
  %v58 = vld [vmem:[%s1 + $0x40] sm:$0xff]
  %v59 = vld [vmem:[%s1 + $0x48] sm:$0xff]
  %v60 = vld [vmem:[%s1 + $0x50] sm:$0xff]
  %v61 = vld [vmem:[%s1 + $0x58] sm:$0xff]
  %v62 = vld [vmem:[%s1 + $0x60] sm:$0xff]
  %v63 = vld [vmem:[%s1 + $0x68] sm:$0xff]
  %v64 = vld [vmem:[%s1 + $0x70] sm:$0xff]
  %v65 = vld [vmem:[%s1 + $0x78] sm:$0xff]
  %v66 = vld [vmem:[%s3] sm:$0xff]
  %v67 = vld [vmem:[%s3 + $0x8] sm:$0xff]
  %v68 = vld [vmem:[%s3 + $0x10] sm:$0xff]
  %v69 = vld [vmem:[%s3 + $0x18] sm:$0xff]
  %v70 = vld [vmem:[%s3 + $0x20] sm:$0xff]
  %v71 = vld [vmem:[%s3 + $0x28] sm:$0xff]
  %v72 = vld [vmem:[%s3 + $0x30] sm:$0xff]
  %v73 = vld [vmem:[%s3 + $0x38] sm:$0xff]
  %vm74 = vcmask 261120
  %v76 = vsel %vm74, %v50, 0
  %v79 = vsel %vm74, %v51, 0
  %v82 = vsel %vm74, %v52, 0
  %v85 = vsel %vm74, %v53, 0
  %v88 = vsel %vm74, %v54, 0
  %v91 = vsel %vm74, %v55, 0
  %v94 = vsel %vm74, %v56, 0
  %v97 = vsel %vm74, %v57, 0
  %v100 = vsel %vm74, %v58, 0
  %v103 = vsel %vm74, %v59, 0
  %v106 = vsel %vm74, %v60, 0
  %v109 = vsel %vm74, %v61, 0
  %v112 = vsel %vm74, %v62, 0
  %v115 = vsel %vm74, %v63, 0
  %v118 = vsel %vm74, %v64, 0
  %v121 = vsel %vm74, %v65, 0
  %123 = vmatprep.subr.mxu0 0.0
  %124 = vmatpush1.msra.mxu0 0.0
  %125 = vmatprep.subr.mxu0 0.0
  %126 = vmatpush1.msra.mxu0 0.0
  %127 = vmatprep.subr.mxu0 0.0
  %128 = vmatpush1.msra.mxu0 0.0
  %129 = vmatprep.subr.mxu0 0.0
  %130 = vmatpush1.msra.mxu0 0.0
  %131 = vmatprep.subr.mxu0 0.0
  %132 = vmatpush1.msra.mxu0 0.0
  %133 = vmatprep.subr.mxu0 0.0
  %134 = vmatpush1.msra.mxu0 0.0
  %135 = vmatprep.subr.mxu0 0.0
  %136 = vmatpush1.msra.mxu0 0.0
  %137 = vmatprep.subr.mxu0 0.0
  %138 = vmatpush1.msra.mxu0 0.0
  %139 = vmatprep.subr.mxu0 0.0
  %140 = vmatpush1.msra.mxu0 0.0
  %141 = vmatprep.subr.mxu0 0.0
  %142 = vmatpush1.msra.mxu0 0.0
  %143 = vmatprep.subr.mxu0 0.0
  %144 = vmatpush1.msra.mxu0 0.0
  %145 = vmatprep.subr.mxu0 0.0
  %146 = vmatpush1.msra.mxu0 0.0
  %147 = vmatprep.subr.mxu0 %v73
  %148 = vmatpush1.msra.mxu0 %v72
  %149 = vmatprep.subr.mxu0 %v71
  %150 = vmatpush1.msra.mxu0 %v70
  %151 = vmatprep.subr.mxu0 %v69
  %152 = vmatpush1.msra.mxu0 %v68
  %153 = vmatprep.subr.mxu0 %v67
  %154 = vmatpush1.msra.mxu0 %v66
  %155 = vmatprep.subr.mxu0 0.0
  %156 = vmatpush2.msra.mxu0 0.0
  %157 = vmatprep.subr.mxu0 0.0
  %158 = vmatpush2.msra.mxu0 0.0
  %159 = vmatprep.subr.mxu0 0.0
  %160 = vmatpush2.msra.mxu0 0.0
  %161 = vmatprep.subr.mxu0 0.0
  %162 = vmatpush2.msra.mxu0 0.0
  %163 = vmatprep.subr.mxu0 0.0
  %164 = vmatpush2.msra.mxu0 0.0
  %165 = vmatprep.subr.mxu0 0.0
  %166 = vmatpush2.msra.mxu0 0.0
  %167 = vmatprep.subr.mxu0 0.0
  %168 = vmatpush2.msra.mxu0 0.0
  %169 = vmatprep.subr.mxu0 0.0
  %170 = vmatpush2.msra.mxu0 0.0
  %171 = vmatprep.subr.mxu0 0.0
  %172 = vmatpush2.msra.mxu0 0.0
  %173 = vmatprep.subr.mxu0 0.0
  %174 = vmatpush2.msra.mxu0 0.0
  %175 = vmatprep.subr.mxu0 0.0
  %176 = vmatpush2.msra.mxu0 0.0
  %177 = vmatprep.subr.mxu0 0.0
  %178 = vmatpush2.msra.mxu0 0.0
  %179 = vmatprep.subr.mxu0 0.0
  %180 = vmatpush2.msra.mxu0 0.0
  %181 = vmatprep.subr.mxu0 0.0
  %182 = vmatpush2.msra.mxu0 0.0
  %183 = vmatprep.subr.mxu0 0.0
  %184 = vmatpush2.msra.mxu0 0.0
  %185 = vmatprep.subr.mxu0 0.0
  %186 = vmatpush2.msra.mxu0 0.0
  %187 = vmatprep.mubr.f32.mxu0 0.0
  %188 = vmatmul.mubr.f32.gmra.mxu0 %v76
  %v189 = vpop.f32.mrf.mxu0
  %v190 = vadd.f32 0.0, %v189
  %v191 = vpop.f32.mrf.mxu0
  %v192 = vadd.f32 0.0, %v191
  %193 = vmatprep.mubr.f32.mxu0 0.0
  %194 = vmatmul.mubr.f32.gmra.mxu0 %v79
  %v195 = vpop.f32.mrf.mxu0
  %v196 = vadd.f32 0.0, %v195
  %v197 = vpop.f32.mrf.mxu0
  %v198 = vadd.f32 0.0, %v197
  %199 = vmatprep.mubr.f32.mxu0 0.0
  %200 = vmatmul.mubr.f32.gmra.mxu0 %v82
  %v201 = vpop.f32.mrf.mxu0
  %v202 = vadd.f32 0.0, %v201
  %v203 = vpop.f32.mrf.mxu0
  %v204 = vadd.f32 0.0, %v203
  %205 = vmatprep.mubr.f32.mxu0 0.0
  %206 = vmatmul.mubr.f32.gmra.mxu0 %v85
  %v207 = vpop.f32.mrf.mxu0
  %v208 = vadd.f32 0.0, %v207
  %v209 = vpop.f32.mrf.mxu0
  %v210 = vadd.f32 0.0, %v209
  %211 = vmatprep.mubr.f32.mxu0 0.0
  %212 = vmatmul.mubr.f32.gmra.mxu0 %v88
  %v213 = vpop.f32.mrf.mxu0
  %v214 = vadd.f32 0.0, %v213
  %v215 = vpop.f32.mrf.mxu0
  %v216 = vadd.f32 0.0, %v215
  %217 = vmatprep.mubr.f32.mxu0 0.0
  %218 = vmatmul.mubr.f32.gmra.mxu0 %v91
  %v219 = vpop.f32.mrf.mxu0
  %v220 = vadd.f32 0.0, %v219
  %v221 = vpop.f32.mrf.mxu0
  %v222 = vadd.f32 0.0, %v221
  %223 = vmatprep.mubr.f32.mxu0 0.0
  %224 = vmatmul.mubr.f32.gmra.mxu0 %v94
  %v225 = vpop.f32.mrf.mxu0
  %v226 = vadd.f32 0.0, %v225
  %v227 = vpop.f32.mrf.mxu0
  %v228 = vadd.f32 0.0, %v227
  %229 = vmatprep.mubr.f32.mxu0 0.0
  %230 = vmatmul.mubr.f32.gmra.mxu0 %v97
  %v231 = vpop.f32.mrf.mxu0
  %v232 = vadd.f32 0.0, %v231
  %v233 = vpop.f32.mrf.mxu0
  %v234 = vadd.f32 0.0, %v233
  %235 = vmatprep.mubr.f32.mxu0 0.0
  %236 = vmatmul.mubr.f32.gmra.mxu0 %v100
  %v237 = vpop.f32.mrf.mxu0
  %v238 = vadd.f32 0.0, %v237
  %v239 = vpop.f32.mrf.mxu0
  %v240 = vadd.f32 0.0, %v239
  %241 = vmatprep.mubr.f32.mxu0 0.0
  %242 = vmatmul.mubr.f32.gmra.mxu0 %v103
  %v243 = vpop.f32.mrf.mxu0
  %v244 = vadd.f32 0.0, %v243
  %v245 = vpop.f32.mrf.mxu0
  %v246 = vadd.f32 0.0, %v245
  %247 = vmatprep.mubr.f32.mxu0 0.0
  %248 = vmatmul.mubr.f32.gmra.mxu0 %v106
  %v249 = vpop.f32.mrf.mxu0
  %v250 = vadd.f32 0.0, %v249
  %v251 = vpop.f32.mrf.mxu0
  %v252 = vadd.f32 0.0, %v251
  %253 = vmatprep.mubr.f32.mxu0 0.0
  %254 = vmatmul.mubr.f32.gmra.mxu0 %v109
  %v255 = vpop.f32.mrf.mxu0
  %v256 = vadd.f32 0.0, %v255
  %v257 = vpop.f32.mrf.mxu0
  %v258 = vadd.f32 0.0, %v257
  %259 = vmatprep.mubr.f32.mxu0 0.0
  %260 = vmatmul.mubr.f32.gmra.mxu0 %v112
  %v261 = vpop.f32.mrf.mxu0
  %v262 = vadd.f32 0.0, %v261
  %v263 = vpop.f32.mrf.mxu0
  %v264 = vadd.f32 0.0, %v263
  %265 = vmatprep.mubr.f32.mxu0 0.0
  %266 = vmatmul.mubr.f32.gmra.mxu0 %v115
  %v267 = vpop.f32.mrf.mxu0
  %v268 = vadd.f32 0.0, %v267
  %v269 = vpop.f32.mrf.mxu0
  %v270 = vadd.f32 0.0, %v269
  %271 = vmatprep.mubr.f32.mxu0 0.0
  %272 = vmatmul.mubr.f32.gmra.mxu0 %v118
  %v273 = vpop.f32.mrf.mxu0
  %v274 = vadd.f32 0.0, %v273
  %v275 = vpop.f32.mrf.mxu0
  %v276 = vadd.f32 0.0, %v275
  %277 = vmatprep.mubr.f32.mxu0 0.0
  %278 = vmatmul.mubr.f32.gmra.mxu0 %v121
  %v279 = vpop.f32.mrf.mxu0
  %v280 = vadd.f32 0.0, %v279
  %v281 = vpop.f32.mrf.mxu0
  %v282 = vadd.f32 0.0, %v281
  %283 = vdwg.mxu0
  %v285 = vsel %vm74, %v26, 0
  %v288 = vsel %vm74, %v27, 0
  %v291 = vsel %vm74, %v28, 0
  %v294 = vsel %vm74, %v29, 0
  %v297 = vsel %vm74, %v30, 0
  %v300 = vsel %vm74, %v31, 0
  %v303 = vsel %vm74, %v32, 0
  %v306 = vsel %vm74, %v33, 0
  %v309 = vsel %vm74, %v34, 0
  %v312 = vsel %vm74, %v35, 0
  %v315 = vsel %vm74, %v36, 0
  %v318 = vsel %vm74, %v37, 0
  %v321 = vsel %vm74, %v38, 0
  %v324 = vsel %vm74, %v39, 0
  %v327 = vsel %vm74, %v40, 0
  %v330 = vsel %vm74, %v41, 0
  %332 = vmatprep.subr.mxu0 0.0
  %333 = vmatpush1.msra.mxu0 0.0
  %334 = vmatprep.subr.mxu0 0.0
  %335 = vmatpush1.msra.mxu0 0.0
  %336 = vmatprep.subr.mxu0 0.0
  %337 = vmatpush1.msra.mxu0 0.0
  %338 = vmatprep.subr.mxu0 0.0
  %339 = vmatpush1.msra.mxu0 0.0
  %340 = vmatprep.subr.mxu0 0.0
  %341 = vmatpush1.msra.mxu0 0.0
  %342 = vmatprep.subr.mxu0 0.0
  %343 = vmatpush1.msra.mxu0 0.0
  %344 = vmatprep.subr.mxu0 0.0
  %345 = vmatpush1.msra.mxu0 0.0
  %346 = vmatprep.subr.mxu0 0.0
  %347 = vmatpush1.msra.mxu0 0.0
  %348 = vmatprep.subr.mxu0 0.0
  %349 = vmatpush1.msra.mxu0 0.0
  %350 = vmatprep.subr.mxu0 0.0
  %351 = vmatpush1.msra.mxu0 0.0
  %352 = vmatprep.subr.mxu0 0.0
  %353 = vmatpush1.msra.mxu0 0.0
  %354 = vmatprep.subr.mxu0 0.0
  %355 = vmatpush1.msra.mxu0 0.0
  %356 = vmatprep.subr.mxu0 %v49
  %357 = vmatpush1.msra.mxu0 %v48
  %358 = vmatprep.subr.mxu0 %v47
  %359 = vmatpush1.msra.mxu0 %v46
  %360 = vmatprep.subr.mxu0 %v45
  %361 = vmatpush1.msra.mxu0 %v44
  %362 = vmatprep.subr.mxu0 %v43
  %363 = vmatpush1.msra.mxu0 %v42
  %364 = vmatprep.subr.mxu0 0.0
  %365 = vmatpush2.msra.mxu0 0.0
  %366 = vmatprep.subr.mxu0 0.0
  %367 = vmatpush2.msra.mxu0 0.0
  %368 = vmatprep.subr.mxu0 0.0
  %369 = vmatpush2.msra.mxu0 0.0
  %370 = vmatprep.subr.mxu0 0.0
  %371 = vmatpush2.msra.mxu0 0.0
  %372 = vmatprep.subr.mxu0 0.0
  %373 = vmatpush2.msra.mxu0 0.0
  %374 = vmatprep.subr.mxu0 0.0
  %375 = vmatpush2.msra.mxu0 0.0
  %376 = vmatprep.subr.mxu0 0.0
  %377 = vmatpush2.msra.mxu0 0.0
  %378 = vmatprep.subr.mxu0 0.0
  %379 = vmatpush2.msra.mxu0 0.0
  %380 = vmatprep.subr.mxu0 0.0
  %381 = vmatpush2.msra.mxu0 0.0
  %382 = vmatprep.subr.mxu0 0.0
  %383 = vmatpush2.msra.mxu0 0.0
  %384 = vmatprep.subr.mxu0 0.0
  %385 = vmatpush2.msra.mxu0 0.0
  %386 = vmatprep.subr.mxu0 0.0
  %387 = vmatpush2.msra.mxu0 0.0
  %388 = vmatprep.subr.mxu0 0.0
  %389 = vmatpush2.msra.mxu0 0.0
  %390 = vmatprep.subr.mxu0 0.0
  %391 = vmatpush2.msra.mxu0 0.0
  %392 = vmatprep.subr.mxu0 0.0
  %393 = vmatpush2.msra.mxu0 0.0
  %394 = vmatprep.subr.mxu0 0.0
  %395 = vmatpush2.msra.mxu0 0.0
  %396 = vmatprep.mubr.f32.mxu0 0.0
  %397 = vmatmul.mubr.f32.gmra.mxu0 %v285
  %v398 = vpop.f32.mrf.mxu0
  %v399 = vadd.f32 %v190, %v398
  %v400 = vpop.f32.mrf.mxu0
  %v401 = vadd.f32 %v192, %v400
  %402 = vmatprep.mubr.f32.mxu0 0.0
  %403 = vmatmul.mubr.f32.gmra.mxu0 %v288
  %v404 = vpop.f32.mrf.mxu0
  %v405 = vadd.f32 %v196, %v404
  %v406 = vpop.f32.mrf.mxu0
  %v407 = vadd.f32 %v198, %v406
  %408 = vmatprep.mubr.f32.mxu0 0.0
  %409 = vmatmul.mubr.f32.gmra.mxu0 %v291
  %v410 = vpop.f32.mrf.mxu0
  %v411 = vadd.f32 %v202, %v410
  %v412 = vpop.f32.mrf.mxu0
  %v413 = vadd.f32 %v204, %v412
  %414 = vmatprep.mubr.f32.mxu0 0.0
  %415 = vmatmul.mubr.f32.gmra.mxu0 %v294
  %v416 = vpop.f32.mrf.mxu0
  %v417 = vadd.f32 %v208, %v416
  %v418 = vpop.f32.mrf.mxu0
  %v419 = vadd.f32 %v210, %v418
  %420 = vmatprep.mubr.f32.mxu0 0.0
  %421 = vmatmul.mubr.f32.gmra.mxu0 %v297
  %v422 = vpop.f32.mrf.mxu0
  %v423 = vadd.f32 %v214, %v422
  %v424 = vpop.f32.mrf.mxu0
  %v425 = vadd.f32 %v216, %v424
  %426 = vmatprep.mubr.f32.mxu0 0.0
  %427 = vmatmul.mubr.f32.gmra.mxu0 %v300
  %v428 = vpop.f32.mrf.mxu0
  %v429 = vadd.f32 %v220, %v428
  %v430 = vpop.f32.mrf.mxu0
  %v431 = vadd.f32 %v222, %v430
  %432 = vmatprep.mubr.f32.mxu0 0.0
  %433 = vmatmul.mubr.f32.gmra.mxu0 %v303
  %v434 = vpop.f32.mrf.mxu0
  %v435 = vadd.f32 %v226, %v434
  %v436 = vpop.f32.mrf.mxu0
  %v437 = vadd.f32 %v228, %v436
  %438 = vmatprep.mubr.f32.mxu0 0.0
  %439 = vmatmul.mubr.f32.gmra.mxu0 %v306
  %v440 = vpop.f32.mrf.mxu0
  %v441 = vadd.f32 %v232, %v440
  %v442 = vpop.f32.mrf.mxu0
  %v443 = vadd.f32 %v234, %v442
  %444 = vmatprep.mubr.f32.mxu0 0.0
  %445 = vmatmul.mubr.f32.gmra.mxu0 %v309
  %v446 = vpop.f32.mrf.mxu0
  %v447 = vadd.f32 %v238, %v446
  %v448 = vpop.f32.mrf.mxu0
  %v449 = vadd.f32 %v240, %v448
  %450 = vmatprep.mubr.f32.mxu0 0.0
  %451 = vmatmul.mubr.f32.gmra.mxu0 %v312
  %v452 = vpop.f32.mrf.mxu0
  %v453 = vadd.f32 %v244, %v452
  %v454 = vpop.f32.mrf.mxu0
  %v455 = vadd.f32 %v246, %v454
  %456 = vmatprep.mubr.f32.mxu0 0.0
  %457 = vmatmul.mubr.f32.gmra.mxu0 %v315
  %v458 = vpop.f32.mrf.mxu0
  %v459 = vadd.f32 %v250, %v458
  %v460 = vpop.f32.mrf.mxu0
  %v461 = vadd.f32 %v252, %v460
  %462 = vmatprep.mubr.f32.mxu0 0.0
  %463 = vmatmul.mubr.f32.gmra.mxu0 %v318
  %v464 = vpop.f32.mrf.mxu0
  %v465 = vadd.f32 %v256, %v464
  %v466 = vpop.f32.mrf.mxu0
  %v467 = vadd.f32 %v258, %v466
  %468 = vmatprep.mubr.f32.mxu0 0.0
  %469 = vmatmul.mubr.f32.gmra.mxu0 %v321
  %v470 = vpop.f32.mrf.mxu0
  %v471 = vadd.f32 %v262, %v470
  %v472 = vpop.f32.mrf.mxu0
  %v473 = vadd.f32 %v264, %v472
  %474 = vmatprep.mubr.f32.mxu0 0.0
  %475 = vmatmul.mubr.f32.gmra.mxu0 %v324
  %v476 = vpop.f32.mrf.mxu0
  %v477 = vadd.f32 %v268, %v476
  %v478 = vpop.f32.mrf.mxu0
  %v479 = vadd.f32 %v270, %v478
  %480 = vmatprep.mubr.f32.mxu0 0.0
  %481 = vmatmul.mubr.f32.gmra.mxu0 %v327
  %v482 = vpop.f32.mrf.mxu0
  %v483 = vadd.f32 %v274, %v482
  %v484 = vpop.f32.mrf.mxu0
  %v485 = vadd.f32 %v276, %v484
  %486 = vmatprep.mubr.f32.mxu0 0.0
  %487 = vmatmul.mubr.f32.gmra.mxu0 %v330
  %v488 = vpop.f32.mrf.mxu0
  %v489 = vadd.f32 %v280, %v488
  %v490 = vpop.f32.mrf.mxu0
  %v491 = vadd.f32 %v282, %v490
  %492 = vdwg.mxu0
  %v493 = vld [vmem:[%s4] sm:$0x3]
  %v495 = vlaneseq
  %v496 = vshrl.u32 %v495, 7
  %v497 = vsub.s32 0, %v496
  %v498 = vrot.slane %v493, %v497
  %v499 = vlaneseq
  %v500 = vshrl.u32 %v499, 7
  %v501 = vsub.s32 1, %v500
  %v502 = vrot.slane %v493, %v501
  %v505 = vadd.f32 %v399, %v498
  %v506 = vadd.f32 %v401, %v502
  %v507 = vadd.f32 %v405, %v498
  %v508 = vadd.f32 %v407, %v502
  %v509 = vadd.f32 %v411, %v498
  %v510 = vadd.f32 %v413, %v502
  %v511 = vadd.f32 %v417, %v498
  %v512 = vadd.f32 %v419, %v502
  %v513 = vadd.f32 %v423, %v498
  %v514 = vadd.f32 %v425, %v502
  %v515 = vadd.f32 %v429, %v498
  %v516 = vadd.f32 %v431, %v502
  %v517 = vadd.f32 %v435, %v498
  %v518 = vadd.f32 %v437, %v502
  %v519 = vadd.f32 %v441, %v498
  %v520 = vadd.f32 %v443, %v502
  %v521 = vadd.f32 %v447, %v498
  %v522 = vadd.f32 %v449, %v502
  %v523 = vadd.f32 %v453, %v498
  %v524 = vadd.f32 %v455, %v502
  %v525 = vadd.f32 %v459, %v498
  %v526 = vadd.f32 %v461, %v502
  %v527 = vadd.f32 %v465, %v498
  %v528 = vadd.f32 %v467, %v502
  %v529 = vadd.f32 %v471, %v498
  %v530 = vadd.f32 %v473, %v502
  %v531 = vadd.f32 %v477, %v498
  %v532 = vadd.f32 %v479, %v502
  %v533 = vadd.f32 %v483, %v498
  %v534 = vadd.f32 %v485, %v502
  %v535 = vadd.f32 %v489, %v498
  %v536 = vadd.f32 %v491, %v502
  %v537 = vmax.f32 %v505, 0.0
  %v538 = vmax.f32 %v506, 0.0
  %v539 = vmax.f32 %v507, 0.0
  %v540 = vmax.f32 %v508, 0.0
  %v541 = vmax.f32 %v509, 0.0
  %v542 = vmax.f32 %v510, 0.0
  %v543 = vmax.f32 %v511, 0.0
  %v544 = vmax.f32 %v512, 0.0
  %v545 = vmax.f32 %v513, 0.0
  %v546 = vmax.f32 %v514, 0.0
  %v547 = vmax.f32 %v515, 0.0
  %v548 = vmax.f32 %v516, 0.0
  %v549 = vmax.f32 %v517, 0.0
  %v550 = vmax.f32 %v518, 0.0
  %v551 = vmax.f32 %v519, 0.0
  %v552 = vmax.f32 %v520, 0.0
  %v553 = vmax.f32 %v521, 0.0
  %v554 = vmax.f32 %v522, 0.0
  %v555 = vmax.f32 %v523, 0.0
  %v556 = vmax.f32 %v524, 0.0
  %v557 = vmax.f32 %v525, 0.0
  %v558 = vmax.f32 %v526, 0.0
  %v559 = vmax.f32 %v527, 0.0
  %v560 = vmax.f32 %v528, 0.0
  %v561 = vmax.f32 %v529, 0.0
  %v562 = vmax.f32 %v530, 0.0
  %v563 = vmax.f32 %v531, 0.0
  %v564 = vmax.f32 %v532, 0.0
  %v565 = vmax.f32 %v533, 0.0
  %v566 = vmax.f32 %v534, 0.0
  %v567 = vmax.f32 %v535, 0.0
  %v568 = vmax.f32 %v536, 0.0
  %v569 = vld [vmem:[%s5] sm:$0xff]
  %v570 = vld [vmem:[%s5 + $0x8] sm:$0xff]
  %v571 = vld [vmem:[%s5 + $0x10] sm:$0xff]
  %v572 = vld [vmem:[%s5 + $0x18] sm:$0xff]
  %v573 = vld [vmem:[%s5 + $0x20] sm:$0xff]
  %v574 = vld [vmem:[%s5 + $0x28] sm:$0xff]
  %v575 = vld [vmem:[%s5 + $0x30] sm:$0xff]
  %v576 = vld [vmem:[%s5 + $0x38] sm:$0xff]
  %v577 = vld [vmem:[%s5 + $0x40] sm:$0xff]
  %v578 = vld [vmem:[%s5 + $0x48] sm:$0xff]
  %v579 = vld [vmem:[%s5 + $0x50] sm:$0xff]
  %v580 = vld [vmem:[%s5 + $0x58] sm:$0xff]
  %v581 = vld [vmem:[%s5 + $0x60] sm:$0xff]
  %v582 = vld [vmem:[%s5 + $0x68] sm:$0xff]
  %v583 = vld [vmem:[%s5 + $0x70] sm:$0xff]
  %v584 = vld [vmem:[%s5 + $0x78] sm:$0xff]
  %v585 = vld [vmem:[%s5 + $0x80] sm:$0xff]
  %v586 = vld [vmem:[%s5 + $0x88] sm:$0xff]
  %v587 = vld [vmem:[%s5 + $0x90] sm:$0xff]
  %v588 = vld [vmem:[%s5 + $0x98] sm:$0xff]
  %v589 = vld [vmem:[%s5 + $0xa0] sm:$0xff]
  %v590 = vld [vmem:[%s5 + $0xa8] sm:$0xff]
  %v591 = vld [vmem:[%s5 + $0xb0] sm:$0xff]
  %v592 = vld [vmem:[%s5 + $0xb8] sm:$0xff]
  %v593 = vld [vmem:[%s5 + $0xc0] sm:$0xff]
  %v594 = vld [vmem:[%s5 + $0xc8] sm:$0xff]
  %v595 = vld [vmem:[%s5 + $0xd0] sm:$0xff]
  %v596 = vld [vmem:[%s5 + $0xd8] sm:$0xff]
  %v597 = vld [vmem:[%s5 + $0xe0] sm:$0xff]
  %v598 = vld [vmem:[%s5 + $0xe8] sm:$0xff]
  %v599 = vld [vmem:[%s5 + $0xf0] sm:$0xff]
  %v600 = vld [vmem:[%s5 + $0xf8] sm:$0xff]
  %v601 = vld [vmem:[%s6] sm:$0x1]
  %v603 = vlaneseq
  %v604 = vshrl.u32 %v603, 7
  %v605 = vsub.s32 0, %v604
  %v606 = vrot.slane %v601, %v605
  %608 = vmatprep.subr.mxu0 0.0
  %609 = vmatpush1.msra.mxu0 %v584
  %610 = vmatprep.subr.mxu0 0.0
  %611 = vmatpush1.msra.mxu0 %v583
  %612 = vmatprep.subr.mxu0 0.0
  %613 = vmatpush1.msra.mxu0 %v582
  %614 = vmatprep.subr.mxu0 0.0
  %615 = vmatpush1.msra.mxu0 %v581
  %616 = vmatprep.subr.mxu0 0.0
  %617 = vmatpush1.msra.mxu0 %v580
  %618 = vmatprep.subr.mxu0 0.0
  %619 = vmatpush1.msra.mxu0 %v579
  %620 = vmatprep.subr.mxu0 0.0
  %621 = vmatpush1.msra.mxu0 %v578
  %622 = vmatprep.subr.mxu0 0.0
  %623 = vmatpush1.msra.mxu0 %v577
  %624 = vmatprep.subr.mxu0 0.0
  %625 = vmatpush1.msra.mxu0 %v576
  %626 = vmatprep.subr.mxu0 0.0
  %627 = vmatpush1.msra.mxu0 %v575
  %628 = vmatprep.subr.mxu0 0.0
  %629 = vmatpush1.msra.mxu0 %v574
  %630 = vmatprep.subr.mxu0 0.0
  %631 = vmatpush1.msra.mxu0 %v573
  %632 = vmatprep.subr.mxu0 0.0
  %633 = vmatpush1.msra.mxu0 %v572
  %634 = vmatprep.subr.mxu0 0.0
  %635 = vmatpush1.msra.mxu0 %v571
  %636 = vmatprep.subr.mxu0 0.0
  %637 = vmatpush1.msra.mxu0 %v570
  %638 = vmatprep.subr.mxu0 0.0
  %639 = vmatpush1.msra.mxu0 %v569
  %640 = vmatprep.subr.mxu0 0.0
  %641 = vmatpush2.msra.mxu0 %v600
  %642 = vmatprep.subr.mxu0 0.0
  %643 = vmatpush2.msra.mxu0 %v599
  %644 = vmatprep.subr.mxu0 0.0
  %645 = vmatpush2.msra.mxu0 %v598
  %646 = vmatprep.subr.mxu0 0.0
  %647 = vmatpush2.msra.mxu0 %v597
  %648 = vmatprep.subr.mxu0 0.0
  %649 = vmatpush2.msra.mxu0 %v596
  %650 = vmatprep.subr.mxu0 0.0
  %651 = vmatpush2.msra.mxu0 %v595
  %652 = vmatprep.subr.mxu0 0.0
  %653 = vmatpush2.msra.mxu0 %v594
  %654 = vmatprep.subr.mxu0 0.0
  %655 = vmatpush2.msra.mxu0 %v593
  %656 = vmatprep.subr.mxu0 0.0
  %657 = vmatpush2.msra.mxu0 %v592
  %658 = vmatprep.subr.mxu0 0.0
  %659 = vmatpush2.msra.mxu0 %v591
  %660 = vmatprep.subr.mxu0 0.0
  %661 = vmatpush2.msra.mxu0 %v590
  %662 = vmatprep.subr.mxu0 0.0
  %663 = vmatpush2.msra.mxu0 %v589
  %664 = vmatprep.subr.mxu0 0.0
  %665 = vmatpush2.msra.mxu0 %v588
  %666 = vmatprep.subr.mxu0 0.0
  %667 = vmatpush2.msra.mxu0 %v587
  %668 = vmatprep.subr.mxu0 0.0
  %669 = vmatpush2.msra.mxu0 %v586
  %670 = vmatprep.subr.mxu0 0.0
  %671 = vmatpush2.msra.mxu0 %v585
  %672 = vmatprep.mubr.f32.mxu0 %v538
  %673 = vmatmul.mubr.f32.gmra.mxu0 %v537
  %v674 = vpop.f32.mrf.mxu0
  %v675 = vadd.f32 %v606, %v674
  %v676 = vpop.f32.mrf.mxu0
  %677 = vmatprep.mubr.f32.mxu0 %v540
  %678 = vmatmul.mubr.f32.gmra.mxu0 %v539
  %v679 = vpop.f32.mrf.mxu0
  %v680 = vadd.f32 %v606, %v679
  %v681 = vpop.f32.mrf.mxu0
  %682 = vmatprep.mubr.f32.mxu0 %v542
  %683 = vmatmul.mubr.f32.gmra.mxu0 %v541
  %v684 = vpop.f32.mrf.mxu0
  %v685 = vadd.f32 %v606, %v684
  %v686 = vpop.f32.mrf.mxu0
  %687 = vmatprep.mubr.f32.mxu0 %v544
  %688 = vmatmul.mubr.f32.gmra.mxu0 %v543
  %v689 = vpop.f32.mrf.mxu0
  %v690 = vadd.f32 %v606, %v689
  %v691 = vpop.f32.mrf.mxu0
  %692 = vmatprep.mubr.f32.mxu0 %v546
  %693 = vmatmul.mubr.f32.gmra.mxu0 %v545
  %v694 = vpop.f32.mrf.mxu0
  %v695 = vadd.f32 %v606, %v694
  %v696 = vpop.f32.mrf.mxu0
  %697 = vmatprep.mubr.f32.mxu0 %v548
  %698 = vmatmul.mubr.f32.gmra.mxu0 %v547
  %v699 = vpop.f32.mrf.mxu0
  %v700 = vadd.f32 %v606, %v699
  %v701 = vpop.f32.mrf.mxu0
  %702 = vmatprep.mubr.f32.mxu0 %v550
  %703 = vmatmul.mubr.f32.gmra.mxu0 %v549
  %v704 = vpop.f32.mrf.mxu0
  %v705 = vadd.f32 %v606, %v704
  %v706 = vpop.f32.mrf.mxu0
  %707 = vmatprep.mubr.f32.mxu0 %v552
  %708 = vmatmul.mubr.f32.gmra.mxu0 %v551
  %v709 = vpop.f32.mrf.mxu0
  %v710 = vadd.f32 %v606, %v709
  %v711 = vpop.f32.mrf.mxu0
  %712 = vmatprep.mubr.f32.mxu0 %v554
  %713 = vmatmul.mubr.f32.gmra.mxu0 %v553
  %v714 = vpop.f32.mrf.mxu0
  %v715 = vadd.f32 %v606, %v714
  %v716 = vpop.f32.mrf.mxu0
  %717 = vmatprep.mubr.f32.mxu0 %v556
  %718 = vmatmul.mubr.f32.gmra.mxu0 %v555
  %v719 = vpop.f32.mrf.mxu0
  %v720 = vadd.f32 %v606, %v719
  %v721 = vpop.f32.mrf.mxu0
  %722 = vmatprep.mubr.f32.mxu0 %v558
  %723 = vmatmul.mubr.f32.gmra.mxu0 %v557
  %v724 = vpop.f32.mrf.mxu0
  %v725 = vadd.f32 %v606, %v724
  %v726 = vpop.f32.mrf.mxu0
  %727 = vmatprep.mubr.f32.mxu0 %v560
  %728 = vmatmul.mubr.f32.gmra.mxu0 %v559
  %v729 = vpop.f32.mrf.mxu0
  %v730 = vadd.f32 %v606, %v729
  %v731 = vpop.f32.mrf.mxu0
  %732 = vmatprep.mubr.f32.mxu0 %v562
  %733 = vmatmul.mubr.f32.gmra.mxu0 %v561
  %v734 = vpop.f32.mrf.mxu0
  %v735 = vadd.f32 %v606, %v734
  %v736 = vpop.f32.mrf.mxu0
  %737 = vmatprep.mubr.f32.mxu0 %v564
  %738 = vmatmul.mubr.f32.gmra.mxu0 %v563
  %v739 = vpop.f32.mrf.mxu0
  %v740 = vadd.f32 %v606, %v739
  %v741 = vpop.f32.mrf.mxu0
  %742 = vmatprep.mubr.f32.mxu0 %v566
  %743 = vmatmul.mubr.f32.gmra.mxu0 %v565
  %v744 = vpop.f32.mrf.mxu0
  %v745 = vadd.f32 %v606, %v744
  %v746 = vpop.f32.mrf.mxu0
  %747 = vmatprep.mubr.f32.mxu0 %v568
  %748 = vmatmul.mubr.f32.gmra.mxu0 %v567
  %v749 = vpop.f32.mrf.mxu0
  %v750 = vadd.f32 %v606, %v749
  %v751 = vpop.f32.mrf.mxu0
  %752 = vdwg.mxu0
  %753 = vst [vmem:[%s7] sm:$0xff] %v675
  %754 = vst [vmem:[%s7 + $0x8] sm:$0xff] %v680
  %755 = vst [vmem:[%s7 + $0x10] sm:$0xff] %v685
  %756 = vst [vmem:[%s7 + $0x18] sm:$0xff] %v690
  %757 = vst [vmem:[%s7 + $0x20] sm:$0xff] %v695
  %758 = vst [vmem:[%s7 + $0x28] sm:$0xff] %v700
  %759 = vst [vmem:[%s7 + $0x30] sm:$0xff] %v705
  %760 = vst [vmem:[%s7 + $0x38] sm:$0xff] %v710
  %761 = vst [vmem:[%s7 + $0x40] sm:$0xff] %v715
  %762 = vst [vmem:[%s7 + $0x48] sm:$0xff] %v720
  %763 = vst [vmem:[%s7 + $0x50] sm:$0xff] %v725
  %764 = vst [vmem:[%s7 + $0x58] sm:$0xff] %v730
  %765 = vst [vmem:[%s7 + $0x60] sm:$0xff] %v735
  %766 = vst [vmem:[%s7 + $0x68] sm:$0xff] %v740
  %767 = vst [vmem:[%s7 + $0x70] sm:$0xff] %v745
  %768 = vst [vmem:[%s7 + $0x78] sm:$0xff] %v750
  // Predicated region
  $region30: #{tagger_forward.5} parent=0 // pred_check
    _
  $region31: #{tagger_forward.5} parent=0 // pred_check_branch
    %770 = sbr.rel (0) target = $region33
  $region32: #{tagger_forward.5} parent=0 // pred_region
    _
  $region33: #{tagger_forward.5} parent=0 // pred_fallthru
    _
  // Predicated region
  $region34: #{tagger_forward.5} parent=0 // pred_check
    _
  $region35: #{tagger_forward.5} parent=0 // pred_check_branch
    %772 = sbr.rel (0) target = $region37
  $region36: #{tagger_forward.5} parent=0 // pred_region
    _
  $region37: #{tagger_forward.5} parent=0 // pred_fallthru
    _

// kernel: tagger_forward.3
$region0: #{tagger_forward.3}
  #allocation0 [shape = 'u32[]', space=smem, size = 0x4, offset = 0x4, fixed_abs, tag = 'smem constant byte address 0x4 - core index']
  #allocation1 [shape = 'u32[144,128]{1,0:T(1,128)}', space=vmem, size = 0x12000, scoped, tag = 'internal scratch']
  %s0 = inlined_call_operand.vmem [shape: f32[128,32], index: 0, kind: input, shape index: {}]
  %s1 = inlined_call_operand.vmem [shape: f32[128,96], index: 1, kind: input, shape index: {}]
  %s2 = inlined_call_operand.vmem [shape: f32[48,16], index: 2, kind: input, shape index: {}]
  %s3 = inlined_call_operand.vmem [shape: f32[1,16], index: 3, kind: input, shape index: {}]
  %s4 = inlined_call_operand.vmem [shape: f32[32,256], index: 4, kind: input, shape index: {}]
  %s5 = inlined_call_operand.vmem [shape: f32[16,256], index: 5, kind: input, shape index: {}]
  %s6 = inlined_call_operand.vmem [shape: f32[1,256], index: 6, kind: input, shape index: {}]
  %s7 = inlined_call_operand.vmem [shape: f32[128,256], index: 7, kind: output, shape index: {}]
  %s8 = sld [smem:[#allocation0]]
  $region38: #{tagger_forward.3} parent=0
    _
  %s10 = ssub.s32 1, %s8
  %s11 = scalar_select 0, %s10, %s8
  // Predicated region
  $region2: #{tagger_forward.3} parent=0 // pred_check
    _
  $region3: #{tagger_forward.3} parent=0 // pred_check_branch
    %13 = sbr.rel (0) target = $region5
  $region4: #{tagger_forward.3} parent=0 // pred_region
    _
  $region5: #{tagger_forward.3} parent=0 // pred_fallthru
    _
  // Predicated region
  $region6: #{tagger_forward.3} parent=0 // pred_check
    _
  $region7: #{tagger_forward.3} parent=0 // pred_check_branch
    %15 = sbr.rel (0) target = $region9
  $region8: #{tagger_forward.3} parent=0 // pred_region
    _
  $region9: #{tagger_forward.3} parent=0 // pred_fallthru
    _
  // Predicated region
  $region10: #{tagger_forward.3} parent=0 // pred_check
    _
  $region11: #{tagger_forward.3} parent=0 // pred_check_branch
    %17 = sbr.rel (0) target = $region13
  $region12: #{tagger_forward.3} parent=0 // pred_region
    _
  $region13: #{tagger_forward.3} parent=0 // pred_fallthru
    _
  // Predicated region
  $region14: #{tagger_forward.3} parent=0 // pred_check
    _
  $region15: #{tagger_forward.3} parent=0 // pred_check_branch
    %19 = sbr.rel (0) target = $region17
  $region16: #{tagger_forward.3} parent=0 // pred_region
    _
  $region17: #{tagger_forward.3} parent=0 // pred_fallthru
    _
  // Predicated region
  $region18: #{tagger_forward.3} parent=0 // pred_check
    _
  $region19: #{tagger_forward.3} parent=0 // pred_check_branch
    %21 = sbr.rel (0) target = $region21
  $region20: #{tagger_forward.3} parent=0 // pred_region
    _
  $region21: #{tagger_forward.3} parent=0 // pred_fallthru
    _
  // Predicated region
  $region22: #{tagger_forward.3} parent=0 // pred_check
    _
  $region23: #{tagger_forward.3} parent=0 // pred_check_branch
    %23 = sbr.rel (0) target = $region25
  $region24: #{tagger_forward.3} parent=0 // pred_region
    _
  $region25: #{tagger_forward.3} parent=0 // pred_fallthru
    _
  // Predicated region
  $region26: #{tagger_forward.3} parent=0 // pred_check
    _
  $region27: #{tagger_forward.3} parent=0 // pred_check_branch
    %25 = sbr.rel (0) target = $region29
  $region28: #{tagger_forward.3} parent=0 // pred_region
    _
  $region29: #{tagger_forward.3} parent=0 // pred_fallthru
    _
  %v26 = vld [vmem:[%s1] sm:$0xff]
  %v27 = vld [vmem:[%s1 + $0x8] sm:$0xff]
  %v28 = vld [vmem:[%s1 + $0x10] sm:$0xff]
  %v29 = vld [vmem:[%s1 + $0x18] sm:$0xff]
  %v30 = vld [vmem:[%s1 + $0x20] sm:$0xff]
  %v31 = vld [vmem:[%s1 + $0x28] sm:$0xff]
  %v32 = vld [vmem:[%s1 + $0x30] sm:$0xff]
  %v33 = vld [vmem:[%s1 + $0x38] sm:$0xff]
  %v34 = vld [vmem:[%s1 + $0x40] sm:$0xff]
  %v35 = vld [vmem:[%s1 + $0x48] sm:$0xff]
  %v36 = vld [vmem:[%s1 + $0x50] sm:$0xff]
  %v37 = vld [vmem:[%s1 + $0x58] sm:$0xff]
  %v38 = vld [vmem:[%s1 + $0x60] sm:$0xff]
  %v39 = vld [vmem:[%s1 + $0x68] sm:$0xff]
  %v40 = vld [vmem:[%s1 + $0x70] sm:$0xff]
  %v41 = vld [vmem:[%s1 + $0x78] sm:$0xff]
  %v42 = vld [vmem:[%s2] sm:$0xff]
  %v43 = vld [vmem:[%s2 + $0x8] sm:$0xff]
  %v44 = vld [vmem:[%s2 + $0x10] sm:$0xff]
  %v45 = vld [vmem:[%s2 + $0x18] sm:$0xff]
  %v46 = vld [vmem:[%s2 + $0x20] sm:$0xff]
  %v47 = vld [vmem:[%s2 + $0x28] sm:$0xff]
  %vm48 = vcmask 392192
  %v50 = vsel %vm48, %v26, 0
  %v53 = vsel %vm48, %v27, 0
  %v56 = vsel %vm48, %v28, 0
  %v59 = vsel %vm48, %v29, 0
  %v62 = vsel %vm48, %v30, 0
  %v65 = vsel %vm48, %v31, 0
  %v68 = vsel %vm48, %v32, 0
  %v71 = vsel %vm48, %v33, 0
  %v74 = vsel %vm48, %v34, 0
  %v77 = vsel %vm48, %v35, 0
  %v80 = vsel %vm48, %v36, 0
  %v83 = vsel %vm48, %v37, 0
  %v86 = vsel %vm48, %v38, 0
  %v89 = vsel %vm48, %v39, 0
  %v92 = vsel %vm48, %v40, 0
  %v95 = vsel %vm48, %v41, 0
  %97 = vmatprep.subr.mxu0 0.0
  %98 = vmatpush1.msra.mxu0 0.0
  %99 = vmatprep.subr.mxu0 0.0
  %100 = vmatpush1.msra.mxu0 0.0
  %101 = vmatprep.subr.mxu0 0.0
  %102 = vmatpush1.msra.mxu0 0.0
  %103 = vmatprep.subr.mxu0 0.0
  %104 = vmatpush1.msra.mxu0 0.0
  %105 = vmatprep.subr.mxu0 0.0
  %106 = vmatpush1.msra.mxu0 0.0
  %107 = vmatprep.subr.mxu0 0.0
  %108 = vmatpush1.msra.mxu0 0.0
  %109 = vmatprep.subr.mxu0 0.0
  %110 = vmatpush1.msra.mxu0 0.0
  %111 = vmatprep.subr.mxu0 0.0
  %112 = vmatpush1.msra.mxu0 0.0
  %113 = vmatprep.subr.mxu0 0.0
  %114 = vmatpush1.msra.mxu0 0.0
  %115 = vmatprep.subr.mxu0 0.0
  %116 = vmatpush1.msra.mxu0 0.0
  %117 = vmatprep.subr.mxu0 0.0
  %118 = vmatpush1.msra.mxu0 %v47
  %119 = vmatprep.subr.mxu0 0.0
  %120 = vmatpush1.msra.mxu0 %v46
  %121 = vmatprep.subr.mxu0 0.0
  %122 = vmatpush1.msra.mxu0 %v45
  %123 = vmatprep.subr.mxu0 0.0
  %124 = vmatpush1.msra.mxu0 %v44
  %125 = vmatprep.subr.mxu0 0.0
  %126 = vmatpush1.msra.mxu0 %v43
  %127 = vmatprep.subr.mxu0 0.0
  %128 = vmatpush1.msra.mxu0 %v42
  %129 = vmatprep.subr.mxu0 0.0
  %130 = vmatpush2.msra.mxu0 0.0
  %131 = vmatprep.subr.mxu0 0.0
  %132 = vmatpush2.msra.mxu0 0.0
  %133 = vmatprep.subr.mxu0 0.0
  %134 = vmatpush2.msra.mxu0 0.0
  %135 = vmatprep.subr.mxu0 0.0
  %136 = vmatpush2.msra.mxu0 0.0
  %137 = vmatprep.subr.mxu0 0.0
  %138 = vmatpush2.msra.mxu0 0.0
  %139 = vmatprep.subr.mxu0 0.0
  %140 = vmatpush2.msra.mxu0 0.0
  %141 = vmatprep.subr.mxu0 0.0
  %142 = vmatpush2.msra.mxu0 0.0
  %143 = vmatprep.subr.mxu0 0.0
  %144 = vmatpush2.msra.mxu0 0.0
  %145 = vmatprep.subr.mxu0 0.0
  %146 = vmatpush2.msra.mxu0 0.0
  %147 = vmatprep.subr.mxu0 0.0
  %148 = vmatpush2.msra.mxu0 0.0
  %149 = vmatprep.subr.mxu0 0.0
  %150 = vmatpush2.msra.mxu0 0.0
  %151 = vmatprep.subr.mxu0 0.0
  %152 = vmatpush2.msra.mxu0 0.0
  %153 = vmatprep.subr.mxu0 0.0
  %154 = vmatpush2.msra.mxu0 0.0
  %155 = vmatprep.subr.mxu0 0.0
  %156 = vmatpush2.msra.mxu0 0.0
  %157 = vmatprep.subr.mxu0 0.0
  %158 = vmatpush2.msra.mxu0 0.0
  %159 = vmatprep.subr.mxu0 0.0
  %160 = vmatpush2.msra.mxu0 0.0
  %161 = vmatprep.mubr.f32.mxu0 0.0
  %162 = vmatmul.mubr.f32.gmra.mxu0 %v50
  %v163 = vpop.f32.mrf.mxu0
  %v164 = vadd.f32 0.0, %v163
  %v165 = vpop.f32.mrf.mxu0
  %166 = vmatprep.mubr.f32.mxu0 0.0
  %167 = vmatmul.mubr.f32.gmra.mxu0 %v53
  %v168 = vpop.f32.mrf.mxu0
  %v169 = vadd.f32 0.0, %v168
  %v170 = vpop.f32.mrf.mxu0
  %171 = vmatprep.mubr.f32.mxu0 0.0
  %172 = vmatmul.mubr.f32.gmra.mxu0 %v56
  %v173 = vpop.f32.mrf.mxu0
  %v174 = vadd.f32 0.0, %v173
  %v175 = vpop.f32.mrf.mxu0
  %176 = vmatprep.mubr.f32.mxu0 0.0
  %177 = vmatmul.mubr.f32.gmra.mxu0 %v59
  %v178 = vpop.f32.mrf.mxu0
  %v179 = vadd.f32 0.0, %v178
  %v180 = vpop.f32.mrf.mxu0
  %181 = vmatprep.mubr.f32.mxu0 0.0
  %182 = vmatmul.mubr.f32.gmra.mxu0 %v62
  %v183 = vpop.f32.mrf.mxu0
  %v184 = vadd.f32 0.0, %v183
  %v185 = vpop.f32.mrf.mxu0
  %186 = vmatprep.mubr.f32.mxu0 0.0
  %187 = vmatmul.mubr.f32.gmra.mxu0 %v65
  %v188 = vpop.f32.mrf.mxu0
  %v189 = vadd.f32 0.0, %v188
  %v190 = vpop.f32.mrf.mxu0
  %191 = vmatprep.mubr.f32.mxu0 0.0
  %192 = vmatmul.mubr.f32.gmra.mxu0 %v68
  %v193 = vpop.f32.mrf.mxu0
  %v194 = vadd.f32 0.0, %v193
  %v195 = vpop.f32.mrf.mxu0
  %196 = vmatprep.mubr.f32.mxu0 0.0
  %197 = vmatmul.mubr.f32.gmra.mxu0 %v71
  %v198 = vpop.f32.mrf.mxu0
  %v199 = vadd.f32 0.0, %v198
  %v200 = vpop.f32.mrf.mxu0
  %201 = vmatprep.mubr.f32.mxu0 0.0
  %202 = vmatmul.mubr.f32.gmra.mxu0 %v74
  %v203 = vpop.f32.mrf.mxu0
  %v204 = vadd.f32 0.0, %v203
  %v205 = vpop.f32.mrf.mxu0
  %206 = vmatprep.mubr.f32.mxu0 0.0
  %207 = vmatmul.mubr.f32.gmra.mxu0 %v77
  %v208 = vpop.f32.mrf.mxu0
  %v209 = vadd.f32 0.0, %v208
  %v210 = vpop.f32.mrf.mxu0
  %211 = vmatprep.mubr.f32.mxu0 0.0
  %212 = vmatmul.mubr.f32.gmra.mxu0 %v80
  %v213 = vpop.f32.mrf.mxu0
  %v214 = vadd.f32 0.0, %v213
  %v215 = vpop.f32.mrf.mxu0
  %216 = vmatprep.mubr.f32.mxu0 0.0
  %217 = vmatmul.mubr.f32.gmra.mxu0 %v83
  %v218 = vpop.f32.mrf.mxu0
  %v219 = vadd.f32 0.0, %v218
  %v220 = vpop.f32.mrf.mxu0
  %221 = vmatprep.mubr.f32.mxu0 0.0
  %222 = vmatmul.mubr.f32.gmra.mxu0 %v86
  %v223 = vpop.f32.mrf.mxu0
  %v224 = vadd.f32 0.0, %v223
  %v225 = vpop.f32.mrf.mxu0
  %226 = vmatprep.mubr.f32.mxu0 0.0
  %227 = vmatmul.mubr.f32.gmra.mxu0 %v89
  %v228 = vpop.f32.mrf.mxu0
  %v229 = vadd.f32 0.0, %v228
  %v230 = vpop.f32.mrf.mxu0
  %231 = vmatprep.mubr.f32.mxu0 0.0
  %232 = vmatmul.mubr.f32.gmra.mxu0 %v92
  %v233 = vpop.f32.mrf.mxu0
  %v234 = vadd.f32 0.0, %v233
  %v235 = vpop.f32.mrf.mxu0
  %236 = vmatprep.mubr.f32.mxu0 0.0
  %237 = vmatmul.mubr.f32.gmra.mxu0 %v95
  %v238 = vpop.f32.mrf.mxu0
  %v239 = vadd.f32 0.0, %v238
  %v240 = vpop.f32.mrf.mxu0
  %241 = vdwg.mxu0
  %242 = vrot.lane.b32.xlu0 %v26, 112
  %v243 = vpop.permute.xlu0 %242
  %244 = vrot.lane.b32.xlu0 %v27, 112
  %v245 = vpop.permute.xlu0 %244
  %246 = vrot.lane.b32.xlu0 %v28, 112
  %v247 = vpop.permute.xlu0 %246
  %248 = vrot.lane.b32.xlu0 %v29, 112
  %v249 = vpop.permute.xlu0 %248
  %250 = vrot.lane.b32.xlu0 %v30, 112
  %v251 = vpop.permute.xlu0 %250
  %252 = vrot.lane.b32.xlu0 %v31, 112
  %v253 = vpop.permute.xlu0 %252
  %254 = vrot.lane.b32.xlu0 %v32, 112
  %v255 = vpop.permute.xlu0 %254
  %256 = vrot.lane.b32.xlu0 %v33, 112
  %v257 = vpop.permute.xlu0 %256
  %258 = vrot.lane.b32.xlu0 %v34, 112
  %v259 = vpop.permute.xlu0 %258
  %260 = vrot.lane.b32.xlu0 %v35, 112
  %v261 = vpop.permute.xlu0 %260
  %262 = vrot.lane.b32.xlu0 %v36, 112
  %v263 = vpop.permute.xlu0 %262
  %264 = vrot.lane.b32.xlu0 %v37, 112
  %v265 = vpop.permute.xlu0 %264
  %266 = vrot.lane.b32.xlu0 %v38, 112
  %v267 = vpop.permute.xlu0 %266
  %268 = vrot.lane.b32.xlu0 %v39, 112
  %v269 = vpop.permute.xlu0 %268
  %270 = vrot.lane.b32.xlu0 %v40, 112
  %v271 = vpop.permute.xlu0 %270
  %272 = vrot.lane.b32.xlu0 %v41, 112
  %v273 = vpop.permute.xlu0 %272
  %v274 = vsel %vm48, %v243, 0
  %v276 = vsel %vm48, %v245, 0
  %v278 = vsel %vm48, %v247, 0
  %v280 = vsel %vm48, %v249, 0
  %v282 = vsel %vm48, %v251, 0
  %v284 = vsel %vm48, %v253, 0
  %v286 = vsel %vm48, %v255, 0
  %v288 = vsel %vm48, %v257, 0
  %v290 = vsel %vm48, %v259, 0
  %v292 = vsel %vm48, %v261, 0
  %v294 = vsel %vm48, %v263, 0
  %v296 = vsel %vm48, %v265, 0
  %v298 = vsel %vm48, %v267, 0
  %v300 = vsel %vm48, %v269, 0
  %v302 = vsel %vm48, %v271, 0
  %v304 = vsel %vm48, %v273, 0
  %306 = vmatprep.subr.mxu0 0.0
  %307 = vmatpush1.msra.mxu0 0.0
  %308 = vmatprep.subr.mxu0 0.0
  %309 = vmatpush1.msra.mxu0 0.0
  %310 = vmatprep.subr.mxu0 0.0
  %311 = vmatpush1.msra.mxu0 0.0
  %312 = vmatprep.subr.mxu0 0.0
  %313 = vmatpush1.msra.mxu0 0.0
  %314 = vmatprep.subr.mxu0 0.0
  %315 = vmatpush1.msra.mxu0 0.0
  %316 = vmatprep.subr.mxu0 0.0
  %317 = vmatpush1.msra.mxu0 0.0
  %318 = vmatprep.subr.mxu0 0.0
  %319 = vmatpush1.msra.mxu0 0.0
  %320 = vmatprep.subr.mxu0 0.0
  %321 = vmatpush1.msra.mxu0 0.0
  %322 = vmatprep.subr.mxu0 0.0
  %323 = vmatpush1.msra.mxu0 0.0
  %324 = vmatprep.subr.mxu0 0.0
  %325 = vmatpush1.msra.mxu0 0.0
  %326 = vmatprep.subr.mxu0 0.0
  %327 = vmatpush1.msra.mxu0 %v47
  %328 = vmatprep.subr.mxu0 0.0
  %329 = vmatpush1.msra.mxu0 %v46
  %330 = vmatprep.subr.mxu0 0.0
  %331 = vmatpush1.msra.mxu0 %v45
  %332 = vmatprep.subr.mxu0 0.0
  %333 = vmatpush1.msra.mxu0 %v44
  %334 = vmatprep.subr.mxu0 0.0
  %335 = vmatpush1.msra.mxu0 %v43
  %336 = vmatprep.subr.mxu0 0.0
  %337 = vmatpush1.msra.mxu0 %v42
  %338 = vmatprep.subr.mxu0 0.0
  %339 = vmatpush2.msra.mxu0 0.0
  %340 = vmatprep.subr.mxu0 0.0
  %341 = vmatpush2.msra.mxu0 0.0
  %342 = vmatprep.subr.mxu0 0.0
  %343 = vmatpush2.msra.mxu0 0.0
  %344 = vmatprep.subr.mxu0 0.0
  %345 = vmatpush2.msra.mxu0 0.0
  %346 = vmatprep.subr.mxu0 0.0
  %347 = vmatpush2.msra.mxu0 0.0
  %348 = vmatprep.subr.mxu0 0.0
  %349 = vmatpush2.msra.mxu0 0.0
  %350 = vmatprep.subr.mxu0 0.0
  %351 = vmatpush2.msra.mxu0 0.0
  %352 = vmatprep.subr.mxu0 0.0
  %353 = vmatpush2.msra.mxu0 0.0
  %354 = vmatprep.subr.mxu0 0.0
  %355 = vmatpush2.msra.mxu0 0.0
  %356 = vmatprep.subr.mxu0 0.0
  %357 = vmatpush2.msra.mxu0 0.0
  %358 = vmatprep.subr.mxu0 0.0
  %359 = vmatpush2.msra.mxu0 0.0
  %360 = vmatprep.subr.mxu0 0.0
  %361 = vmatpush2.msra.mxu0 0.0
  %362 = vmatprep.subr.mxu0 0.0
  %363 = vmatpush2.msra.mxu0 0.0
  %364 = vmatprep.subr.mxu0 0.0
  %365 = vmatpush2.msra.mxu0 0.0
  %366 = vmatprep.subr.mxu0 0.0
  %367 = vmatpush2.msra.mxu0 0.0
  %368 = vmatprep.subr.mxu0 0.0
  %369 = vmatpush2.msra.mxu0 0.0
  %370 = vmatprep.mubr.f32.mxu0 0.0
  %371 = vmatmul.mubr.f32.gmra.mxu0 %v274
  %v372 = vpop.f32.mrf.mxu0
  %v373 = vadd.f32 0.0, %v372
  %v374 = vpop.f32.mrf.mxu0
  %375 = vmatprep.mubr.f32.mxu0 0.0
  %376 = vmatmul.mubr.f32.gmra.mxu0 %v276
  %v377 = vpop.f32.mrf.mxu0
  %v378 = vadd.f32 0.0, %v377
  %v379 = vpop.f32.mrf.mxu0
  %380 = vmatprep.mubr.f32.mxu0 0.0
  %381 = vmatmul.mubr.f32.gmra.mxu0 %v278
  %v382 = vpop.f32.mrf.mxu0
  %v383 = vadd.f32 0.0, %v382
  %v384 = vpop.f32.mrf.mxu0
  %385 = vmatprep.mubr.f32.mxu0 0.0
  %386 = vmatmul.mubr.f32.gmra.mxu0 %v280
  %v387 = vpop.f32.mrf.mxu0
  %v388 = vadd.f32 0.0, %v387
  %v389 = vpop.f32.mrf.mxu0
  %390 = vmatprep.mubr.f32.mxu0 0.0
  %391 = vmatmul.mubr.f32.gmra.mxu0 %v282
  %v392 = vpop.f32.mrf.mxu0
  %v393 = vadd.f32 0.0, %v392
  %v394 = vpop.f32.mrf.mxu0
  %395 = vmatprep.mubr.f32.mxu0 0.0
  %396 = vmatmul.mubr.f32.gmra.mxu0 %v284
  %v397 = vpop.f32.mrf.mxu0
  %v398 = vadd.f32 0.0, %v397
  %v399 = vpop.f32.mrf.mxu0
  %400 = vmatprep.mubr.f32.mxu0 0.0
  %401 = vmatmul.mubr.f32.gmra.mxu0 %v286
  %v402 = vpop.f32.mrf.mxu0
  %v403 = vadd.f32 0.0, %v402
  %v404 = vpop.f32.mrf.mxu0
  %405 = vmatprep.mubr.f32.mxu0 0.0
  %406 = vmatmul.mubr.f32.gmra.mxu0 %v288
  %v407 = vpop.f32.mrf.mxu0
  %v408 = vadd.f32 0.0, %v407
  %v409 = vpop.f32.mrf.mxu0
  %410 = vmatprep.mubr.f32.mxu0 0.0
  %411 = vmatmul.mubr.f32.gmra.mxu0 %v290
  %v412 = vpop.f32.mrf.mxu0
  %v413 = vadd.f32 0.0, %v412
  %v414 = vpop.f32.mrf.mxu0
  %415 = vmatprep.mubr.f32.mxu0 0.0
  %416 = vmatmul.mubr.f32.gmra.mxu0 %v292
  %v417 = vpop.f32.mrf.mxu0
  %v418 = vadd.f32 0.0, %v417
  %v419 = vpop.f32.mrf.mxu0
  %420 = vmatprep.mubr.f32.mxu0 0.0
  %421 = vmatmul.mubr.f32.gmra.mxu0 %v294
  %v422 = vpop.f32.mrf.mxu0
  %v423 = vadd.f32 0.0, %v422
  %v424 = vpop.f32.mrf.mxu0
  %425 = vmatprep.mubr.f32.mxu0 0.0
  %426 = vmatmul.mubr.f32.gmra.mxu0 %v296
  %v427 = vpop.f32.mrf.mxu0
  %v428 = vadd.f32 0.0, %v427
  %v429 = vpop.f32.mrf.mxu0
  %430 = vmatprep.mubr.f32.mxu0 0.0
  %431 = vmatmul.mubr.f32.gmra.mxu0 %v298
  %v432 = vpop.f32.mrf.mxu0
  %v433 = vadd.f32 0.0, %v432
  %v434 = vpop.f32.mrf.mxu0
  %435 = vmatprep.mubr.f32.mxu0 0.0
  %436 = vmatmul.mubr.f32.gmra.mxu0 %v300
  %v437 = vpop.f32.mrf.mxu0
  %v438 = vadd.f32 0.0, %v437
  %v439 = vpop.f32.mrf.mxu0
  %440 = vmatprep.mubr.f32.mxu0 0.0
  %441 = vmatmul.mubr.f32.gmra.mxu0 %v302
  %v442 = vpop.f32.mrf.mxu0
  %v443 = vadd.f32 0.0, %v442
  %v444 = vpop.f32.mrf.mxu0
  %445 = vmatprep.mubr.f32.mxu0 0.0
  %446 = vmatmul.mubr.f32.gmra.mxu0 %v304
  %v447 = vpop.f32.mrf.mxu0
  %v448 = vadd.f32 0.0, %v447
  %v449 = vpop.f32.mrf.mxu0
  %450 = vdwg.mxu0
  %v451 = vmax.f32 %v164, %v373
  %v452 = vmax.f32 %v169, %v378
  %v453 = vmax.f32 %v174, %v383
  %v454 = vmax.f32 %v179, %v388
  %v455 = vmax.f32 %v184, %v393
  %v456 = vmax.f32 %v189, %v398
  %v457 = vmax.f32 %v194, %v403
  %v458 = vmax.f32 %v199, %v408
  %v459 = vmax.f32 %v204, %v413
  %v460 = vmax.f32 %v209, %v418
  %v461 = vmax.f32 %v214, %v423
  %v462 = vmax.f32 %v219, %v428
  %v463 = vmax.f32 %v224, %v433
  %v464 = vmax.f32 %v229, %v438
  %v465 = vmax.f32 %v234, %v443
  %v466 = vmax.f32 %v239, %v448
  %467 = vrot.lane.b32.xlu0 %v26, 96
  %v468 = vpop.permute.xlu0 %467
  %469 = vrot.lane.b32.xlu0 %v27, 96
  %v470 = vpop.permute.xlu0 %469
  %471 = vrot.lane.b32.xlu0 %v28, 96
  %v472 = vpop.permute.xlu0 %471
  %473 = vrot.lane.b32.xlu0 %v29, 96
  %v474 = vpop.permute.xlu0 %473
  %475 = vrot.lane.b32.xlu0 %v30, 96
  %v476 = vpop.permute.xlu0 %475
  %477 = vrot.lane.b32.xlu0 %v31, 96
  %v478 = vpop.permute.xlu0 %477
  %479 = vrot.lane.b32.xlu0 %v32, 96
  %v480 = vpop.permute.xlu0 %479
  %481 = vrot.lane.b32.xlu0 %v33, 96
  %v482 = vpop.permute.xlu0 %481
  %483 = vrot.lane.b32.xlu0 %v34, 96
  %v484 = vpop.permute.xlu0 %483
  %485 = vrot.lane.b32.xlu0 %v35, 96
  %v486 = vpop.permute.xlu0 %485
  %487 = vrot.lane.b32.xlu0 %v36, 96
  %v488 = vpop.permute.xlu0 %487
  %489 = vrot.lane.b32.xlu0 %v37, 96
  %v490 = vpop.permute.xlu0 %489
  %491 = vrot.lane.b32.xlu0 %v38, 96
  %v492 = vpop.permute.xlu0 %491
  %493 = vrot.lane.b32.xlu0 %v39, 96
  %v494 = vpop.permute.xlu0 %493
  %495 = vrot.lane.b32.xlu0 %v40, 96
  %v496 = vpop.permute.xlu0 %495
  %497 = vrot.lane.b32.xlu0 %v41, 96
  %v498 = vpop.permute.xlu0 %497
  %v499 = vsel %vm48, %v468, 0
  %v501 = vsel %vm48, %v470, 0
  %v503 = vsel %vm48, %v472, 0
  %v505 = vsel %vm48, %v474, 0
  %v507 = vsel %vm48, %v476, 0
  %v509 = vsel %vm48, %v478, 0
  %v511 = vsel %vm48, %v480, 0
  %v513 = vsel %vm48, %v482, 0
  %v515 = vsel %vm48, %v484, 0
  %v517 = vsel %vm48, %v486, 0
  %v519 = vsel %vm48, %v488, 0
  %v521 = vsel %vm48, %v490, 0
  %v523 = vsel %vm48, %v492, 0
  %v525 = vsel %vm48, %v494, 0
  %v527 = vsel %vm48, %v496, 0
  %v529 = vsel %vm48, %v498, 0
  %531 = vmatprep.subr.mxu0 0.0
  %532 = vmatpush1.msra.mxu0 0.0
  %533 = vmatprep.subr.mxu0 0.0
  %534 = vmatpush1.msra.mxu0 0.0
  %535 = vmatprep.subr.mxu0 0.0
  %536 = vmatpush1.msra.mxu0 0.0
  %537 = vmatprep.subr.mxu0 0.0
  %538 = vmatpush1.msra.mxu0 0.0
  %539 = vmatprep.subr.mxu0 0.0
  %540 = vmatpush1.msra.mxu0 0.0
  %541 = vmatprep.subr.mxu0 0.0
  %542 = vmatpush1.msra.mxu0 0.0
  %543 = vmatprep.subr.mxu0 0.0
  %544 = vmatpush1.msra.mxu0 0.0
  %545 = vmatprep.subr.mxu0 0.0
  %546 = vmatpush1.msra.mxu0 0.0
  %547 = vmatprep.subr.mxu0 0.0
  %548 = vmatpush1.msra.mxu0 0.0
  %549 = vmatprep.subr.mxu0 0.0
  %550 = vmatpush1.msra.mxu0 0.0
  %551 = vmatprep.subr.mxu0 0.0
  %552 = vmatpush1.msra.mxu0 %v47
  %553 = vmatprep.subr.mxu0 0.0
  %554 = vmatpush1.msra.mxu0 %v46
  %555 = vmatprep.subr.mxu0 0.0
  %556 = vmatpush1.msra.mxu0 %v45
  %557 = vmatprep.subr.mxu0 0.0
  %558 = vmatpush1.msra.mxu0 %v44
  %559 = vmatprep.subr.mxu0 0.0
  %560 = vmatpush1.msra.mxu0 %v43
  %561 = vmatprep.subr.mxu0 0.0
  %562 = vmatpush1.msra.mxu0 %v42
  %563 = vmatprep.subr.mxu0 0.0
  %564 = vmatpush2.msra.mxu0 0.0
  %565 = vmatprep.subr.mxu0 0.0
  %566 = vmatpush2.msra.mxu0 0.0
  %567 = vmatprep.subr.mxu0 0.0
  %568 = vmatpush2.msra.mxu0 0.0
  %569 = vmatprep.subr.mxu0 0.0
  %570 = vmatpush2.msra.mxu0 0.0
  %571 = vmatprep.subr.mxu0 0.0
  %572 = vmatpush2.msra.mxu0 0.0
  %573 = vmatprep.subr.mxu0 0.0
  %574 = vmatpush2.msra.mxu0 0.0
  %575 = vmatprep.subr.mxu0 0.0
  %576 = vmatpush2.msra.mxu0 0.0
  %577 = vmatprep.subr.mxu0 0.0
  %578 = vmatpush2.msra.mxu0 0.0
  %579 = vmatprep.subr.mxu0 0.0
  %580 = vmatpush2.msra.mxu0 0.0
  %581 = vmatprep.subr.mxu0 0.0
  %582 = vmatpush2.msra.mxu0 0.0
  %583 = vmatprep.subr.mxu0 0.0
  %584 = vmatpush2.msra.mxu0 0.0
  %585 = vmatprep.subr.mxu0 0.0
  %586 = vmatpush2.msra.mxu0 0.0
  %587 = vmatprep.subr.mxu0 0.0
  %588 = vmatpush2.msra.mxu0 0.0
  %589 = vmatprep.subr.mxu0 0.0
  %590 = vmatpush2.msra.mxu0 0.0
  %591 = vmatprep.subr.mxu0 0.0
  %592 = vmatpush2.msra.mxu0 0.0
  %593 = vmatprep.subr.mxu0 0.0
  %594 = vmatpush2.msra.mxu0 0.0
  %595 = vmatprep.mubr.f32.mxu0 0.0
  %596 = vmatmul.mubr.f32.gmra.mxu0 %v499
  %v597 = vpop.f32.mrf.mxu0
  %v598 = vadd.f32 0.0, %v597
  %v599 = vpop.f32.mrf.mxu0
  %600 = vmatprep.mubr.f32.mxu0 0.0
  %601 = vmatmul.mubr.f32.gmra.mxu0 %v501
  %v602 = vpop.f32.mrf.mxu0
  %v603 = vadd.f32 0.0, %v602
  %v604 = vpop.f32.mrf.mxu0
  %605 = vmatprep.mubr.f32.mxu0 0.0
  %606 = vmatmul.mubr.f32.gmra.mxu0 %v503
  %v607 = vpop.f32.mrf.mxu0
  %v608 = vadd.f32 0.0, %v607
  %v609 = vpop.f32.mrf.mxu0
  %610 = vmatprep.mubr.f32.mxu0 0.0
  %611 = vmatmul.mubr.f32.gmra.mxu0 %v505
  %v612 = vpop.f32.mrf.mxu0
  %v613 = vadd.f32 0.0, %v612
  %v614 = vpop.f32.mrf.mxu0
  %615 = vmatprep.mubr.f32.mxu0 0.0
  %616 = vmatmul.mubr.f32.gmra.mxu0 %v507
  %v617 = vpop.f32.mrf.mxu0
  %v618 = vadd.f32 0.0, %v617
  %v619 = vpop.f32.mrf.mxu0
  %620 = vmatprep.mubr.f32.mxu0 0.0
  %621 = vmatmul.mubr.f32.gmra.mxu0 %v509
  %v622 = vpop.f32.mrf.mxu0
  %v623 = vadd.f32 0.0, %v622
  %v624 = vpop.f32.mrf.mxu0
  %625 = vmatprep.mubr.f32.mxu0 0.0
  %626 = vmatmul.mubr.f32.gmra.mxu0 %v511
  %v627 = vpop.f32.mrf.mxu0
  %v628 = vadd.f32 0.0, %v627
  %v629 = vpop.f32.mrf.mxu0
  %630 = vmatprep.mubr.f32.mxu0 0.0
  %631 = vmatmul.mubr.f32.gmra.mxu0 %v513
  %v632 = vpop.f32.mrf.mxu0
  %v633 = vadd.f32 0.0, %v632
  %v634 = vpop.f32.mrf.mxu0
  %635 = vmatprep.mubr.f32.mxu0 0.0
  %636 = vmatmul.mubr.f32.gmra.mxu0 %v515
  %v637 = vpop.f32.mrf.mxu0
  %v638 = vadd.f32 0.0, %v637
  %v639 = vpop.f32.mrf.mxu0
  %640 = vmatprep.mubr.f32.mxu0 0.0
  %641 = vmatmul.mubr.f32.gmra.mxu0 %v517
  %v642 = vpop.f32.mrf.mxu0
  %v643 = vadd.f32 0.0, %v642
  %v644 = vpop.f32.mrf.mxu0
  %645 = vmatprep.mubr.f32.mxu0 0.0
  %646 = vmatmul.mubr.f32.gmra.mxu0 %v519
  %v647 = vpop.f32.mrf.mxu0
  %v648 = vadd.f32 0.0, %v647
  %v649 = vpop.f32.mrf.mxu0
  %650 = vmatprep.mubr.f32.mxu0 0.0
  %651 = vmatmul.mubr.f32.gmra.mxu0 %v521
  %v652 = vpop.f32.mrf.mxu0
  %v653 = vadd.f32 0.0, %v652
  %v654 = vpop.f32.mrf.mxu0
  %655 = vmatprep.mubr.f32.mxu0 0.0
  %656 = vmatmul.mubr.f32.gmra.mxu0 %v523
  %v657 = vpop.f32.mrf.mxu0
  %v658 = vadd.f32 0.0, %v657
  %v659 = vpop.f32.mrf.mxu0
  %660 = vmatprep.mubr.f32.mxu0 0.0
  %661 = vmatmul.mubr.f32.gmra.mxu0 %v525
  %v662 = vpop.f32.mrf.mxu0
  %v663 = vadd.f32 0.0, %v662
  %v664 = vpop.f32.mrf.mxu0
  %665 = vmatprep.mubr.f32.mxu0 0.0
  %666 = vmatmul.mubr.f32.gmra.mxu0 %v527
  %v667 = vpop.f32.mrf.mxu0
  %v668 = vadd.f32 0.0, %v667
  %v669 = vpop.f32.mrf.mxu0
  %670 = vmatprep.mubr.f32.mxu0 0.0
  %671 = vmatmul.mubr.f32.gmra.mxu0 %v529
  %v672 = vpop.f32.mrf.mxu0
  %v673 = vadd.f32 0.0, %v672
  %v674 = vpop.f32.mrf.mxu0
  %675 = vdwg.mxu0
  %v676 = vmax.f32 %v451, %v598
  %v677 = vmax.f32 %v452, %v603
  %v678 = vmax.f32 %v453, %v608
  %v679 = vmax.f32 %v454, %v613
  %v680 = vmax.f32 %v455, %v618
  %v681 = vmax.f32 %v456, %v623
  %v682 = vmax.f32 %v457, %v628
  %v683 = vmax.f32 %v458, %v633
  %v684 = vmax.f32 %v459, %v638
  %v685 = vmax.f32 %v460, %v643
  %v686 = vmax.f32 %v461, %v648
  %v687 = vmax.f32 %v462, %v653
  %v688 = vmax.f32 %v463, %v658
  %v689 = vmax.f32 %v464, %v663
  %v690 = vmax.f32 %v465, %v668
  %v691 = vmax.f32 %v466, %v673
  %692 = vrot.lane.b32.xlu0 %v26, 80
  %v693 = vpop.permute.xlu0 %692
  %694 = vrot.lane.b32.xlu0 %v27, 80
  %v695 = vpop.permute.xlu0 %694
  %696 = vrot.lane.b32.xlu0 %v28, 80
  %v697 = vpop.permute.xlu0 %696
  %698 = vrot.lane.b32.xlu0 %v29, 80
  %v699 = vpop.permute.xlu0 %698
  %700 = vrot.lane.b32.xlu0 %v30, 80
  %v701 = vpop.permute.xlu0 %700
  %702 = vrot.lane.b32.xlu0 %v31, 80
  %v703 = vpop.permute.xlu0 %702
  %704 = vrot.lane.b32.xlu0 %v32, 80
  %v705 = vpop.permute.xlu0 %704
  %706 = vrot.lane.b32.xlu0 %v33, 80
  %v707 = vpop.permute.xlu0 %706
  %708 = vrot.lane.b32.xlu0 %v34, 80
  %v709 = vpop.permute.xlu0 %708
  %710 = vrot.lane.b32.xlu0 %v35, 80
  %v711 = vpop.permute.xlu0 %710
  %712 = vrot.lane.b32.xlu0 %v36, 80
  %v713 = vpop.permute.xlu0 %712
  %714 = vrot.lane.b32.xlu0 %v37, 80
  %v715 = vpop.permute.xlu0 %714
  %716 = vrot.lane.b32.xlu0 %v38, 80
  %v717 = vpop.permute.xlu0 %716
  %718 = vrot.lane.b32.xlu0 %v39, 80
  %v719 = vpop.permute.xlu0 %718
  %720 = vrot.lane.b32.xlu0 %v40, 80
  %v721 = vpop.permute.xlu0 %720
  %722 = vrot.lane.b32.xlu0 %v41, 80
  %v723 = vpop.permute.xlu0 %722
  %v724 = vsel %vm48, %v693, 0
  %v726 = vsel %vm48, %v695, 0
  %v728 = vsel %vm48, %v697, 0
  %v730 = vsel %vm48, %v699, 0
  %v732 = vsel %vm48, %v701, 0
  %v734 = vsel %vm48, %v703, 0
  %v736 = vsel %vm48, %v705, 0
  %v738 = vsel %vm48, %v707, 0
  %v740 = vsel %vm48, %v709, 0
  %v742 = vsel %vm48, %v711, 0
  %v744 = vsel %vm48, %v713, 0
  %v746 = vsel %vm48, %v715, 0
  %v748 = vsel %vm48, %v717, 0
  %v750 = vsel %vm48, %v719, 0
  %v752 = vsel %vm48, %v721, 0
  %v754 = vsel %vm48, %v723, 0
  %756 = vmatprep.subr.mxu0 0.0
  %757 = vmatpush1.msra.mxu0 0.0
  %758 = vmatprep.subr.mxu0 0.0
  %759 = vmatpush1.msra.mxu0 0.0
  %760 = vmatprep.subr.mxu0 0.0
  %761 = vmatpush1.msra.mxu0 0.0
  %762 = vmatprep.subr.mxu0 0.0
  %763 = vmatpush1.msra.mxu0 0.0
  %764 = vmatprep.subr.mxu0 0.0
  %765 = vmatpush1.msra.mxu0 0.0
  %766 = vmatprep.subr.mxu0 0.0
  %767 = vmatpush1.msra.mxu0 0.0
  %768 = vmatprep.subr.mxu0 0.0
  %769 = vmatpush1.msra.mxu0 0.0
  %770 = vmatprep.subr.mxu0 0.0
  %771 = vmatpush1.msra.mxu0 0.0
  %772 = vmatprep.subr.mxu0 0.0
  %773 = vmatpush1.msra.mxu0 0.0
  %774 = vmatprep.subr.mxu0 0.0
  %775 = vmatpush1.msra.mxu0 0.0
  %776 = vmatprep.subr.mxu0 0.0
  %777 = vmatpush1.msra.mxu0 %v47
  %778 = vmatprep.subr.mxu0 0.0
  %779 = vmatpush1.msra.mxu0 %v46
  %780 = vmatprep.subr.mxu0 0.0
  %781 = vmatpush1.msra.mxu0 %v45
  %782 = vmatprep.subr.mxu0 0.0
  %783 = vmatpush1.msra.mxu0 %v44
  %784 = vmatprep.subr.mxu0 0.0
  %785 = vmatpush1.msra.mxu0 %v43
  %786 = vmatprep.subr.mxu0 0.0
  %787 = vmatpush1.msra.mxu0 %v42
  %788 = vmatprep.subr.mxu0 0.0
  %789 = vmatpush2.msra.mxu0 0.0
  %790 = vmatprep.subr.mxu0 0.0
  %791 = vmatpush2.msra.mxu0 0.0
  %792 = vmatprep.subr.mxu0 0.0
  %793 = vmatpush2.msra.mxu0 0.0
  %794 = vmatprep.subr.mxu0 0.0
  %795 = vmatpush2.msra.mxu0 0.0
  %796 = vmatprep.subr.mxu0 0.0
  %797 = vmatpush2.msra.mxu0 0.0
  %798 = vmatprep.subr.mxu0 0.0
  %799 = vmatpush2.msra.mxu0 0.0
  %800 = vmatprep.subr.mxu0 0.0
  %801 = vmatpush2.msra.mxu0 0.0
  %802 = vmatprep.subr.mxu0 0.0
  %803 = vmatpush2.msra.mxu0 0.0
  %804 = vmatprep.subr.mxu0 0.0
  %805 = vmatpush2.msra.mxu0 0.0
  %806 = vmatprep.subr.mxu0 0.0
  %807 = vmatpush2.msra.mxu0 0.0
  %808 = vmatprep.subr.mxu0 0.0
  %809 = vmatpush2.msra.mxu0 0.0
  %810 = vmatprep.subr.mxu0 0.0
  %811 = vmatpush2.msra.mxu0 0.0
  %812 = vmatprep.subr.mxu0 0.0
  %813 = vmatpush2.msra.mxu0 0.0
  %814 = vmatprep.subr.mxu0 0.0
  %815 = vmatpush2.msra.mxu0 0.0
  %816 = vmatprep.subr.mxu0 0.0
  %817 = vmatpush2.msra.mxu0 0.0
  %818 = vmatprep.subr.mxu0 0.0
  %819 = vmatpush2.msra.mxu0 0.0
  %820 = vmatprep.mubr.f32.mxu0 0.0
  %821 = vmatmul.mubr.f32.gmra.mxu0 %v724
  %v822 = vpop.f32.mrf.mxu0
  %v823 = vadd.f32 0.0, %v822
  %v824 = vpop.f32.mrf.mxu0
  %825 = vmatprep.mubr.f32.mxu0 0.0
  %826 = vmatmul.mubr.f32.gmra.mxu0 %v726
  %v827 = vpop.f32.mrf.mxu0
  %v828 = vadd.f32 0.0, %v827
  %v829 = vpop.f32.mrf.mxu0
  %830 = vmatprep.mubr.f32.mxu0 0.0
  %831 = vmatmul.mubr.f32.gmra.mxu0 %v728
  %v832 = vpop.f32.mrf.mxu0
  %v833 = vadd.f32 0.0, %v832
  %v834 = vpop.f32.mrf.mxu0
  %835 = vmatprep.mubr.f32.mxu0 0.0
  %836 = vmatmul.mubr.f32.gmra.mxu0 %v730
  %v837 = vpop.f32.mrf.mxu0
  %v838 = vadd.f32 0.0, %v837
  %v839 = vpop.f32.mrf.mxu0
  %840 = vmatprep.mubr.f32.mxu0 0.0
  %841 = vmatmul.mubr.f32.gmra.mxu0 %v732
  %v842 = vpop.f32.mrf.mxu0
  %v843 = vadd.f32 0.0, %v842
  %v844 = vpop.f32.mrf.mxu0
  %845 = vmatprep.mubr.f32.mxu0 0.0
  %846 = vmatmul.mubr.f32.gmra.mxu0 %v734
  %v847 = vpop.f32.mrf.mxu0
  %v848 = vadd.f32 0.0, %v847
  %v849 = vpop.f32.mrf.mxu0
  %850 = vmatprep.mubr.f32.mxu0 0.0
  %851 = vmatmul.mubr.f32.gmra.mxu0 %v736
  %v852 = vpop.f32.mrf.mxu0
  %v853 = vadd.f32 0.0, %v852
  %v854 = vpop.f32.mrf.mxu0
  %855 = vmatprep.mubr.f32.mxu0 0.0
  %856 = vmatmul.mubr.f32.gmra.mxu0 %v738
  %v857 = vpop.f32.mrf.mxu0
  %v858 = vadd.f32 0.0, %v857
  %v859 = vpop.f32.mrf.mxu0
  %860 = vmatprep.mubr.f32.mxu0 0.0
  %861 = vmatmul.mubr.f32.gmra.mxu0 %v740
  %v862 = vpop.f32.mrf.mxu0
  %v863 = vadd.f32 0.0, %v862
  %v864 = vpop.f32.mrf.mxu0
  %865 = vmatprep.mubr.f32.mxu0 0.0
  %866 = vmatmul.mubr.f32.gmra.mxu0 %v742
  %v867 = vpop.f32.mrf.mxu0
  %v868 = vadd.f32 0.0, %v867
  %v869 = vpop.f32.mrf.mxu0
  %870 = vmatprep.mubr.f32.mxu0 0.0
  %871 = vmatmul.mubr.f32.gmra.mxu0 %v744
  %v872 = vpop.f32.mrf.mxu0
  %v873 = vadd.f32 0.0, %v872
  %v874 = vpop.f32.mrf.mxu0
  %875 = vmatprep.mubr.f32.mxu0 0.0
  %876 = vmatmul.mubr.f32.gmra.mxu0 %v746
  %v877 = vpop.f32.mrf.mxu0
  %v878 = vadd.f32 0.0, %v877
  %v879 = vpop.f32.mrf.mxu0
  %880 = vmatprep.mubr.f32.mxu0 0.0
  %881 = vmatmul.mubr.f32.gmra.mxu0 %v748
  %v882 = vpop.f32.mrf.mxu0
  %v883 = vadd.f32 0.0, %v882
  %v884 = vpop.f32.mrf.mxu0
  %885 = vmatprep.mubr.f32.mxu0 0.0
  %886 = vmatmul.mubr.f32.gmra.mxu0 %v750
  %v887 = vpop.f32.mrf.mxu0
  %v888 = vadd.f32 0.0, %v887
  %v889 = vpop.f32.mrf.mxu0
  %890 = vmatprep.mubr.f32.mxu0 0.0
  %891 = vmatmul.mubr.f32.gmra.mxu0 %v752
  %v892 = vpop.f32.mrf.mxu0
  %v893 = vadd.f32 0.0, %v892
  %v894 = vpop.f32.mrf.mxu0
  %895 = vmatprep.mubr.f32.mxu0 0.0
  %896 = vmatmul.mubr.f32.gmra.mxu0 %v754
  %v897 = vpop.f32.mrf.mxu0
  %v898 = vadd.f32 0.0, %v897
  %v899 = vpop.f32.mrf.mxu0
  %900 = vdwg.mxu0
  %v901 = vmax.f32 %v676, %v823
  %v902 = vmax.f32 %v677, %v828
  %v903 = vmax.f32 %v678, %v833
  %v904 = vmax.f32 %v679, %v838
  %v905 = vmax.f32 %v680, %v843
  %v906 = vmax.f32 %v681, %v848
  %v907 = vmax.f32 %v682, %v853
  %v908 = vmax.f32 %v683, %v858
  %v909 = vmax.f32 %v684, %v863
  %v910 = vmax.f32 %v685, %v868
  %v911 = vmax.f32 %v686, %v873
  %v912 = vmax.f32 %v687, %v878
  %v913 = vmax.f32 %v688, %v883
  %v914 = vmax.f32 %v689, %v888
  %v915 = vmax.f32 %v690, %v893
  %v916 = vmax.f32 %v691, %v898
  %v917 = vld [vmem:[%s3] sm:$0x1]
  %v919 = vlaneseq
  %v920 = vshrl.u32 %v919, 7
  %v921 = vsub.s32 0, %v920
  %v922 = vrot.slane %v917, %v921
  %v924 = vadd.f32 %v901, %v922
  %v925 = vadd.f32 %v902, %v922
  %v926 = vadd.f32 %v903, %v922
  %v927 = vadd.f32 %v904, %v922
  %v928 = vadd.f32 %v905, %v922
  %v929 = vadd.f32 %v906, %v922
  %v930 = vadd.f32 %v907, %v922
  %v931 = vadd.f32 %v908, %v922
  %v932 = vadd.f32 %v909, %v922
  %v933 = vadd.f32 %v910, %v922
  %v934 = vadd.f32 %v911, %v922
  %v935 = vadd.f32 %v912, %v922
  %v936 = vadd.f32 %v913, %v922
  %v937 = vadd.f32 %v914, %v922
  %v938 = vadd.f32 %v915, %v922
  %v939 = vadd.f32 %v916, %v922
  %v940 = vmax.f32 %v924, 0.0
  %v941 = vmax.f32 %v925, 0.0
  %v942 = vmax.f32 %v926, 0.0
  %v943 = vmax.f32 %v927, 0.0
  %v944 = vmax.f32 %v928, 0.0
  %v945 = vmax.f32 %v929, 0.0
  %v946 = vmax.f32 %v930, 0.0
  %v947 = vmax.f32 %v931, 0.0
  %v948 = vmax.f32 %v932, 0.0
  %v949 = vmax.f32 %v933, 0.0
  %v950 = vmax.f32 %v934, 0.0
  %v951 = vmax.f32 %v935, 0.0
  %v952 = vmax.f32 %v936, 0.0
  %v953 = vmax.f32 %v937, 0.0
  %v954 = vmax.f32 %v938, 0.0
  %v955 = vmax.f32 %v939, 0.0
  %v956 = vld [vmem:[%s0] sm:$0xff]
  %v957 = vld [vmem:[%s0 + $0x8] sm:$0xff]
  %v958 = vld [vmem:[%s0 + $0x10] sm:$0xff]
  %v959 = vld [vmem:[%s0 + $0x18] sm:$0xff]
  %v960 = vld [vmem:[%s0 + $0x20] sm:$0xff]
  %v961 = vld [vmem:[%s0 + $0x28] sm:$0xff]
  %v962 = vld [vmem:[%s0 + $0x30] sm:$0xff]
  %v963 = vld [vmem:[%s0 + $0x38] sm:$0xff]
  %v964 = vld [vmem:[%s0 + $0x40] sm:$0xff]
  %v965 = vld [vmem:[%s0 + $0x48] sm:$0xff]
  %v966 = vld [vmem:[%s0 + $0x50] sm:$0xff]
  %v967 = vld [vmem:[%s0 + $0x58] sm:$0xff]
  %v968 = vld [vmem:[%s0 + $0x60] sm:$0xff]
  %v969 = vld [vmem:[%s0 + $0x68] sm:$0xff]
  %v970 = vld [vmem:[%s0 + $0x70] sm:$0xff]
  %v971 = vld [vmem:[%s0 + $0x78] sm:$0xff]
  %v972 = vld [vmem:[%s4] sm:$0xff]
  %v973 = vld [vmem:[%s4 + $0x8] sm:$0xff]
  %v974 = vld [vmem:[%s4 + $0x10] sm:$0xff]
  %v975 = vld [vmem:[%s4 + $0x18] sm:$0xff]
  %v976 = vld [vmem:[%s4 + $0x20] sm:$0xff]
  %v977 = vld [vmem:[%s4 + $0x28] sm:$0xff]
  %v978 = vld [vmem:[%s4 + $0x30] sm:$0xff]
  %v979 = vld [vmem:[%s4 + $0x38] sm:$0xff]
  %v980 = vld [vmem:[%s5] sm:$0xff]
  %v981 = vld [vmem:[%s5 + $0x8] sm:$0xff]
  %v982 = vld [vmem:[%s5 + $0x10] sm:$0xff]
  %v983 = vld [vmem:[%s5 + $0x18] sm:$0xff]
  %vm984 = vcmask 130048
  %v986 = vsel %vm984, %v940, 0
  %v989 = vsel %vm984, %v941, 0
  %v992 = vsel %vm984, %v942, 0
  %v995 = vsel %vm984, %v943, 0
  %v998 = vsel %vm984, %v944, 0
  %v1001 = vsel %vm984, %v945, 0
  %v1004 = vsel %vm984, %v946, 0
  %v1007 = vsel %vm984, %v947, 0
  %v1010 = vsel %vm984, %v948, 0
  %v1013 = vsel %vm984, %v949, 0
  %v1016 = vsel %vm984, %v950, 0
  %v1019 = vsel %vm984, %v951, 0
  %v1022 = vsel %vm984, %v952, 0
  %v1025 = vsel %vm984, %v953, 0
  %v1028 = vsel %vm984, %v954, 0
  %v1031 = vsel %vm984, %v955, 0
  %1033 = vmatprep.subr.mxu0 0.0
  %1034 = vmatpush1.msra.mxu0 0.0
  %1035 = vmatprep.subr.mxu0 0.0
  %1036 = vmatpush1.msra.mxu0 0.0
  %1037 = vmatprep.subr.mxu0 0.0
  %1038 = vmatpush1.msra.mxu0 0.0
  %1039 = vmatprep.subr.mxu0 0.0
  %1040 = vmatpush1.msra.mxu0 0.0
  %1041 = vmatprep.subr.mxu0 0.0
  %1042 = vmatpush1.msra.mxu0 0.0
  %1043 = vmatprep.subr.mxu0 0.0
  %1044 = vmatpush1.msra.mxu0 0.0
  %1045 = vmatprep.subr.mxu0 0.0
  %1046 = vmatpush1.msra.mxu0 0.0
  %1047 = vmatprep.subr.mxu0 0.0
  %1048 = vmatpush1.msra.mxu0 0.0
  %1049 = vmatprep.subr.mxu0 0.0
  %1050 = vmatpush1.msra.mxu0 0.0
  %1051 = vmatprep.subr.mxu0 0.0
  %1052 = vmatpush1.msra.mxu0 0.0
  %1053 = vmatprep.subr.mxu0 0.0
  %1054 = vmatpush1.msra.mxu0 0.0
  %1055 = vmatprep.subr.mxu0 0.0
  %1056 = vmatpush1.msra.mxu0 0.0
  %1057 = vmatprep.subr.mxu0 0.0
  %1058 = vmatpush1.msra.mxu0 0.0
  %1059 = vmatprep.subr.mxu0 0.0
  %1060 = vmatpush1.msra.mxu0 0.0
  %1061 = vmatprep.subr.mxu0 %v983
  %1062 = vmatpush1.msra.mxu0 %v982
  %1063 = vmatprep.subr.mxu0 %v981
  %1064 = vmatpush1.msra.mxu0 %v980
  %1065 = vmatprep.subr.mxu0 0.0
  %1066 = vmatpush2.msra.mxu0 0.0
  %1067 = vmatprep.subr.mxu0 0.0
  %1068 = vmatpush2.msra.mxu0 0.0
  %1069 = vmatprep.subr.mxu0 0.0
  %1070 = vmatpush2.msra.mxu0 0.0
  %1071 = vmatprep.subr.mxu0 0.0
  %1072 = vmatpush2.msra.mxu0 0.0
  %1073 = vmatprep.subr.mxu0 0.0
  %1074 = vmatpush2.msra.mxu0 0.0
  %1075 = vmatprep.subr.mxu0 0.0
  %1076 = vmatpush2.msra.mxu0 0.0
  %1077 = vmatprep.subr.mxu0 0.0
  %1078 = vmatpush2.msra.mxu0 0.0
  %1079 = vmatprep.subr.mxu0 0.0
  %1080 = vmatpush2.msra.mxu0 0.0
  %1081 = vmatprep.subr.mxu0 0.0
  %1082 = vmatpush2.msra.mxu0 0.0
  %1083 = vmatprep.subr.mxu0 0.0
  %1084 = vmatpush2.msra.mxu0 0.0
  %1085 = vmatprep.subr.mxu0 0.0
  %1086 = vmatpush2.msra.mxu0 0.0
  %1087 = vmatprep.subr.mxu0 0.0
  %1088 = vmatpush2.msra.mxu0 0.0
  %1089 = vmatprep.subr.mxu0 0.0
  %1090 = vmatpush2.msra.mxu0 0.0
  %1091 = vmatprep.subr.mxu0 0.0
  %1092 = vmatpush2.msra.mxu0 0.0
  %1093 = vmatprep.subr.mxu0 0.0
  %1094 = vmatpush2.msra.mxu0 0.0
  %1095 = vmatprep.subr.mxu0 0.0
  %1096 = vmatpush2.msra.mxu0 0.0
  %1097 = vmatprep.mubr.f32.mxu0 0.0
  %1098 = vmatmul.mubr.f32.gmra.mxu0 %v986
  %v1099 = vpop.f32.mrf.mxu0
  %v1100 = vadd.f32 0.0, %v1099
  %v1101 = vpop.f32.mrf.mxu0
  %v1102 = vadd.f32 0.0, %v1101
  %1103 = vmatprep.mubr.f32.mxu0 0.0
  %1104 = vmatmul.mubr.f32.gmra.mxu0 %v989
  %v1105 = vpop.f32.mrf.mxu0
  %v1106 = vadd.f32 0.0, %v1105
  %v1107 = vpop.f32.mrf.mxu0
  %v1108 = vadd.f32 0.0, %v1107
  %1109 = vmatprep.mubr.f32.mxu0 0.0
  %1110 = vmatmul.mubr.f32.gmra.mxu0 %v992
  %v1111 = vpop.f32.mrf.mxu0
  %v1112 = vadd.f32 0.0, %v1111
  %v1113 = vpop.f32.mrf.mxu0
  %v1114 = vadd.f32 0.0, %v1113
  %1115 = vmatprep.mubr.f32.mxu0 0.0
  %1116 = vmatmul.mubr.f32.gmra.mxu0 %v995
  %v1117 = vpop.f32.mrf.mxu0
  %v1118 = vadd.f32 0.0, %v1117
  %v1119 = vpop.f32.mrf.mxu0
  %v1120 = vadd.f32 0.0, %v1119
  %1121 = vmatprep.mubr.f32.mxu0 0.0
  %1122 = vmatmul.mubr.f32.gmra.mxu0 %v998
  %v1123 = vpop.f32.mrf.mxu0
  %v1124 = vadd.f32 0.0, %v1123
  %v1125 = vpop.f32.mrf.mxu0
  %v1126 = vadd.f32 0.0, %v1125
  %1127 = vmatprep.mubr.f32.mxu0 0.0
  %1128 = vmatmul.mubr.f32.gmra.mxu0 %v1001
  %v1129 = vpop.f32.mrf.mxu0
  %v1130 = vadd.f32 0.0, %v1129
  %v1131 = vpop.f32.mrf.mxu0
  %v1132 = vadd.f32 0.0, %v1131
  %1133 = vmatprep.mubr.f32.mxu0 0.0
  %1134 = vmatmul.mubr.f32.gmra.mxu0 %v1004
  %v1135 = vpop.f32.mrf.mxu0
  %v1136 = vadd.f32 0.0, %v1135
  %v1137 = vpop.f32.mrf.mxu0
  %v1138 = vadd.f32 0.0, %v1137
  %1139 = vmatprep.mubr.f32.mxu0 0.0
  %1140 = vmatmul.mubr.f32.gmra.mxu0 %v1007
  %v1141 = vpop.f32.mrf.mxu0
  %v1142 = vadd.f32 0.0, %v1141
  %v1143 = vpop.f32.mrf.mxu0
  %v1144 = vadd.f32 0.0, %v1143
  %1145 = vmatprep.mubr.f32.mxu0 0.0
  %1146 = vmatmul.mubr.f32.gmra.mxu0 %v1010
  %v1147 = vpop.f32.mrf.mxu0
  %v1148 = vadd.f32 0.0, %v1147
  %v1149 = vpop.f32.mrf.mxu0
  %v1150 = vadd.f32 0.0, %v1149
  %1151 = vmatprep.mubr.f32.mxu0 0.0
  %1152 = vmatmul.mubr.f32.gmra.mxu0 %v1013
  %v1153 = vpop.f32.mrf.mxu0
  %v1154 = vadd.f32 0.0, %v1153
  %v1155 = vpop.f32.mrf.mxu0
  %v1156 = vadd.f32 0.0, %v1155
  %1157 = vmatprep.mubr.f32.mxu0 0.0
  %1158 = vmatmul.mubr.f32.gmra.mxu0 %v1016
  %v1159 = vpop.f32.mrf.mxu0
  %v1160 = vadd.f32 0.0, %v1159
  %v1161 = vpop.f32.mrf.mxu0
  %v1162 = vadd.f32 0.0, %v1161
  %1163 = vmatprep.mubr.f32.mxu0 0.0
  %1164 = vmatmul.mubr.f32.gmra.mxu0 %v1019
  %v1165 = vpop.f32.mrf.mxu0
  %v1166 = vadd.f32 0.0, %v1165
  %v1167 = vpop.f32.mrf.mxu0
  %v1168 = vadd.f32 0.0, %v1167
  %1169 = vmatprep.mubr.f32.mxu0 0.0
  %1170 = vmatmul.mubr.f32.gmra.mxu0 %v1022
  %v1171 = vpop.f32.mrf.mxu0
  %v1172 = vadd.f32 0.0, %v1171
  %v1173 = vpop.f32.mrf.mxu0
  %v1174 = vadd.f32 0.0, %v1173
  %1175 = vmatprep.mubr.f32.mxu0 0.0
  %1176 = vmatmul.mubr.f32.gmra.mxu0 %v1025
  %v1177 = vpop.f32.mrf.mxu0
  %v1178 = vadd.f32 0.0, %v1177
  %v1179 = vpop.f32.mrf.mxu0
  %v1180 = vadd.f32 0.0, %v1179
  %1181 = vmatprep.mubr.f32.mxu0 0.0
  %1182 = vmatmul.mubr.f32.gmra.mxu0 %v1028
  %v1183 = vpop.f32.mrf.mxu0
  %v1184 = vadd.f32 0.0, %v1183
  %v1185 = vpop.f32.mrf.mxu0
  %v1186 = vadd.f32 0.0, %v1185
  %1187 = vmatprep.mubr.f32.mxu0 0.0
  %1188 = vmatmul.mubr.f32.gmra.mxu0 %v1031
  %v1189 = vpop.f32.mrf.mxu0
  %v1190 = vadd.f32 0.0, %v1189
  %v1191 = vpop.f32.mrf.mxu0
  %v1192 = vadd.f32 0.0, %v1191
  %1193 = vdwg.mxu0
  %vm1194 = vcmask 261120
  %v1196 = vsel %vm1194, %v956, 0
  %v1199 = vsel %vm1194, %v957, 0
  %v1202 = vsel %vm1194, %v958, 0
  %v1205 = vsel %vm1194, %v959, 0
  %v1208 = vsel %vm1194, %v960, 0
  %v1211 = vsel %vm1194, %v961, 0
  %v1214 = vsel %vm1194, %v962, 0
  %v1217 = vsel %vm1194, %v963, 0
  %v1220 = vsel %vm1194, %v964, 0
  %v1223 = vsel %vm1194, %v965, 0
  %v1226 = vsel %vm1194, %v966, 0
  %v1229 = vsel %vm1194, %v967, 0
  %v1232 = vsel %vm1194, %v968, 0
  %v1235 = vsel %vm1194, %v969, 0
  %v1238 = vsel %vm1194, %v970, 0
  %v1241 = vsel %vm1194, %v971, 0
  %1243 = vmatprep.subr.mxu0 0.0
  %1244 = vmatpush1.msra.mxu0 0.0
  %1245 = vmatprep.subr.mxu0 0.0
  %1246 = vmatpush1.msra.mxu0 0.0
  %1247 = vmatprep.subr.mxu0 0.0
  %1248 = vmatpush1.msra.mxu0 0.0
  %1249 = vmatprep.subr.mxu0 0.0
  %1250 = vmatpush1.msra.mxu0 0.0
  %1251 = vmatprep.subr.mxu0 0.0
  %1252 = vmatpush1.msra.mxu0 0.0
  %1253 = vmatprep.subr.mxu0 0.0
  %1254 = vmatpush1.msra.mxu0 0.0
  %1255 = vmatprep.subr.mxu0 0.0
  %1256 = vmatpush1.msra.mxu0 0.0
  %1257 = vmatprep.subr.mxu0 0.0
  %1258 = vmatpush1.msra.mxu0 0.0
  %1259 = vmatprep.subr.mxu0 0.0
  %1260 = vmatpush1.msra.mxu0 0.0
  %1261 = vmatprep.subr.mxu0 0.0
  %1262 = vmatpush1.msra.mxu0 0.0
  %1263 = vmatprep.subr.mxu0 0.0
  %1264 = vmatpush1.msra.mxu0 0.0
  %1265 = vmatprep.subr.mxu0 0.0
  %1266 = vmatpush1.msra.mxu0 0.0
  %1267 = vmatprep.subr.mxu0 %v979
  %1268 = vmatpush1.msra.mxu0 %v978
  %1269 = vmatprep.subr.mxu0 %v977
  %1270 = vmatpush1.msra.mxu0 %v976
  %1271 = vmatprep.subr.mxu0 %v975
  %1272 = vmatpush1.msra.mxu0 %v974
  %1273 = vmatprep.subr.mxu0 %v973
  %1274 = vmatpush1.msra.mxu0 %v972
  %1275 = vmatprep.subr.mxu0 0.0
  %1276 = vmatpush2.msra.mxu0 0.0
  %1277 = vmatprep.subr.mxu0 0.0
  %1278 = vmatpush2.msra.mxu0 0.0
  %1279 = vmatprep.subr.mxu0 0.0
  %1280 = vmatpush2.msra.mxu0 0.0
  %1281 = vmatprep.subr.mxu0 0.0
  %1282 = vmatpush2.msra.mxu0 0.0
  %1283 = vmatprep.subr.mxu0 0.0
  %1284 = vmatpush2.msra.mxu0 0.0
  %1285 = vmatprep.subr.mxu0 0.0
  %1286 = vmatpush2.msra.mxu0 0.0
  %1287 = vmatprep.subr.mxu0 0.0
  %1288 = vmatpush2.msra.mxu0 0.0
  %1289 = vmatprep.subr.mxu0 0.0
  %1290 = vmatpush2.msra.mxu0 0.0
  %1291 = vmatprep.subr.mxu0 0.0
  %1292 = vmatpush2.msra.mxu0 0.0
  %1293 = vmatprep.subr.mxu0 0.0
  %1294 = vmatpush2.msra.mxu0 0.0
  %1295 = vmatprep.subr.mxu0 0.0
  %1296 = vmatpush2.msra.mxu0 0.0
  %1297 = vmatprep.subr.mxu0 0.0
  %1298 = vmatpush2.msra.mxu0 0.0
  %1299 = vmatprep.subr.mxu0 0.0
  %1300 = vmatpush2.msra.mxu0 0.0
  %1301 = vmatprep.subr.mxu0 0.0
  %1302 = vmatpush2.msra.mxu0 0.0
  %1303 = vmatprep.subr.mxu0 0.0
  %1304 = vmatpush2.msra.mxu0 0.0
  %1305 = vmatprep.subr.mxu0 0.0
  %1306 = vmatpush2.msra.mxu0 0.0
  %1307 = vmatprep.mubr.f32.mxu0 0.0
  %1308 = vmatmul.mubr.f32.gmra.mxu0 %v1196
  %v1309 = vpop.f32.mrf.mxu0
  %v1310 = vadd.f32 %v1100, %v1309
  %v1311 = vpop.f32.mrf.mxu0
  %v1312 = vadd.f32 %v1102, %v1311
  %1313 = vmatprep.mubr.f32.mxu0 0.0
  %1314 = vmatmul.mubr.f32.gmra.mxu0 %v1199
  %v1315 = vpop.f32.mrf.mxu0
  %v1316 = vadd.f32 %v1106, %v1315
  %v1317 = vpop.f32.mrf.mxu0
  %v1318 = vadd.f32 %v1108, %v1317
  %1319 = vmatprep.mubr.f32.mxu0 0.0
  %1320 = vmatmul.mubr.f32.gmra.mxu0 %v1202
  %v1321 = vpop.f32.mrf.mxu0
  %v1322 = vadd.f32 %v1112, %v1321
  %v1323 = vpop.f32.mrf.mxu0
  %v1324 = vadd.f32 %v1114, %v1323
  %1325 = vmatprep.mubr.f32.mxu0 0.0
  %1326 = vmatmul.mubr.f32.gmra.mxu0 %v1205
  %v1327 = vpop.f32.mrf.mxu0
  %v1328 = vadd.f32 %v1118, %v1327
  %v1329 = vpop.f32.mrf.mxu0
  %v1330 = vadd.f32 %v1120, %v1329
  %1331 = vmatprep.mubr.f32.mxu0 0.0
  %1332 = vmatmul.mubr.f32.gmra.mxu0 %v1208
  %v1333 = vpop.f32.mrf.mxu0
  %v1334 = vadd.f32 %v1124, %v1333
  %v1335 = vpop.f32.mrf.mxu0
  %v1336 = vadd.f32 %v1126, %v1335
  %1337 = vmatprep.mubr.f32.mxu0 0.0
  %1338 = vmatmul.mubr.f32.gmra.mxu0 %v1211
  %v1339 = vpop.f32.mrf.mxu0
  %v1340 = vadd.f32 %v1130, %v1339
  %v1341 = vpop.f32.mrf.mxu0
  %v1342 = vadd.f32 %v1132, %v1341
  %1343 = vmatprep.mubr.f32.mxu0 0.0
  %1344 = vmatmul.mubr.f32.gmra.mxu0 %v1214
  %v1345 = vpop.f32.mrf.mxu0
  %v1346 = vadd.f32 %v1136, %v1345
  %v1347 = vpop.f32.mrf.mxu0
  %v1348 = vadd.f32 %v1138, %v1347
  %1349 = vmatprep.mubr.f32.mxu0 0.0
  %1350 = vmatmul.mubr.f32.gmra.mxu0 %v1217
  %v1351 = vpop.f32.mrf.mxu0
  %v1352 = vadd.f32 %v1142, %v1351
  %v1353 = vpop.f32.mrf.mxu0
  %v1354 = vadd.f32 %v1144, %v1353
  %1355 = vmatprep.mubr.f32.mxu0 0.0
  %1356 = vmatmul.mubr.f32.gmra.mxu0 %v1220
  %v1357 = vpop.f32.mrf.mxu0
  %v1358 = vadd.f32 %v1148, %v1357
  %v1359 = vpop.f32.mrf.mxu0
  %v1360 = vadd.f32 %v1150, %v1359
  %1361 = vmatprep.mubr.f32.mxu0 0.0
  %1362 = vmatmul.mubr.f32.gmra.mxu0 %v1223
  %v1363 = vpop.f32.mrf.mxu0
  %v1364 = vadd.f32 %v1154, %v1363
  %v1365 = vpop.f32.mrf.mxu0
  %v1366 = vadd.f32 %v1156, %v1365
  %1367 = vmatprep.mubr.f32.mxu0 0.0
  %1368 = vmatmul.mubr.f32.gmra.mxu0 %v1226
  %v1369 = vpop.f32.mrf.mxu0
  %v1370 = vadd.f32 %v1160, %v1369
  %v1371 = vpop.f32.mrf.mxu0
  %v1372 = vadd.f32 %v1162, %v1371
  %1373 = vmatprep.mubr.f32.mxu0 0.0
  %1374 = vmatmul.mubr.f32.gmra.mxu0 %v1229
  %v1375 = vpop.f32.mrf.mxu0
  %v1376 = vadd.f32 %v1166, %v1375
  %v1377 = vpop.f32.mrf.mxu0
  %v1378 = vadd.f32 %v1168, %v1377
  %1379 = vmatprep.mubr.f32.mxu0 0.0
  %1380 = vmatmul.mubr.f32.gmra.mxu0 %v1232
  %v1381 = vpop.f32.mrf.mxu0
  %v1382 = vadd.f32 %v1172, %v1381
  %v1383 = vpop.f32.mrf.mxu0
  %v1384 = vadd.f32 %v1174, %v1383
  %1385 = vmatprep.mubr.f32.mxu0 0.0
  %1386 = vmatmul.mubr.f32.gmra.mxu0 %v1235
  %v1387 = vpop.f32.mrf.mxu0
  %v1388 = vadd.f32 %v1178, %v1387
  %v1389 = vpop.f32.mrf.mxu0
  %v1390 = vadd.f32 %v1180, %v1389
  %1391 = vmatprep.mubr.f32.mxu0 0.0
  %1392 = vmatmul.mubr.f32.gmra.mxu0 %v1238
  %v1393 = vpop.f32.mrf.mxu0
  %v1394 = vadd.f32 %v1184, %v1393
  %v1395 = vpop.f32.mrf.mxu0
  %v1396 = vadd.f32 %v1186, %v1395
  %1397 = vmatprep.mubr.f32.mxu0 0.0
  %1398 = vmatmul.mubr.f32.gmra.mxu0 %v1241
  %v1399 = vpop.f32.mrf.mxu0
  %v1400 = vadd.f32 %v1190, %v1399
  %v1401 = vpop.f32.mrf.mxu0
  %v1402 = vadd.f32 %v1192, %v1401
  %1403 = vdwg.mxu0
  %v1404 = vld [vmem:[%s6] sm:$0x3]
  %v1406 = vlaneseq
  %v1407 = vshrl.u32 %v1406, 7
  %v1408 = vsub.s32 0, %v1407
  %v1409 = vrot.slane %v1404, %v1408
  %v1410 = vlaneseq
  %v1411 = vshrl.u32 %v1410, 7
  %v1412 = vsub.s32 1, %v1411
  %v1413 = vrot.slane %v1404, %v1412
  %v1416 = vadd.f32 %v1310, %v1409
  %v1417 = vadd.f32 %v1312, %v1413
  %v1418 = vadd.f32 %v1316, %v1409
  %v1419 = vadd.f32 %v1318, %v1413
  %v1420 = vadd.f32 %v1322, %v1409
  %v1421 = vadd.f32 %v1324, %v1413
  %v1422 = vadd.f32 %v1328, %v1409
  %v1423 = vadd.f32 %v1330, %v1413
  %v1424 = vadd.f32 %v1334, %v1409
  %v1425 = vadd.f32 %v1336, %v1413
  %v1426 = vadd.f32 %v1340, %v1409
  %v1427 = vadd.f32 %v1342, %v1413
  %v1428 = vadd.f32 %v1346, %v1409
  %v1429 = vadd.f32 %v1348, %v1413
  %v1430 = vadd.f32 %v1352, %v1409
  %v1431 = vadd.f32 %v1354, %v1413
  %v1432 = vadd.f32 %v1358, %v1409
  %v1433 = vadd.f32 %v1360, %v1413
  %v1434 = vadd.f32 %v1364, %v1409
  %v1435 = vadd.f32 %v1366, %v1413
  %v1436 = vadd.f32 %v1370, %v1409
  %v1437 = vadd.f32 %v1372, %v1413
  %v1438 = vadd.f32 %v1376, %v1409
  %v1439 = vadd.f32 %v1378, %v1413
  %v1440 = vadd.f32 %v1382, %v1409
  %v1441 = vadd.f32 %v1384, %v1413
  %v1442 = vadd.f32 %v1388, %v1409
  %v1443 = vadd.f32 %v1390, %v1413
  %v1444 = vadd.f32 %v1394, %v1409
  %v1445 = vadd.f32 %v1396, %v1413
  %v1446 = vadd.f32 %v1400, %v1409
  %v1447 = vadd.f32 %v1402, %v1413
  %1448 = vst [vmem:[%s7] sm:$0xff] %v1416
  %1449 = vst [vmem:[%s7 + $0x8] sm:$0xff] %v1417
  %1450 = vst [vmem:[%s7 + $0x10] sm:$0xff] %v1418
  %1451 = vst [vmem:[%s7 + $0x18] sm:$0xff] %v1419
  %1452 = vst [vmem:[%s7 + $0x20] sm:$0xff] %v1420
  %1453 = vst [vmem:[%s7 + $0x28] sm:$0xff] %v1421
  %1454 = vst [vmem:[%s7 + $0x30] sm:$0xff] %v1422
  %1455 = vst [vmem:[%s7 + $0x38] sm:$0xff] %v1423
  %1456 = vst [vmem:[%s7 + $0x40] sm:$0xff] %v1424
  %1457 = vst [vmem:[%s7 + $0x48] sm:$0xff] %v1425
  %1458 = vst [vmem:[%s7 + $0x50] sm:$0xff] %v1426
  %1459 = vst [vmem:[%s7 + $0x58] sm:$0xff] %v1427
  %1460 = vst [vmem:[%s7 + $0x60] sm:$0xff] %v1428
  %1461 = vst [vmem:[%s7 + $0x68] sm:$0xff] %v1429
  %1462 = vst [vmem:[%s7 + $0x70] sm:$0xff] %v1430
  %1463 = vst [vmem:[%s7 + $0x78] sm:$0xff] %v1431
  %1464 = vst [vmem:[%s7 + $0x80] sm:$0xff] %v1432
  %1465 = vst [vmem:[%s7 + $0x88] sm:$0xff] %v1433
  %1466 = vst [vmem:[%s7 + $0x90] sm:$0xff] %v1434
  %1467 = vst [vmem:[%s7 + $0x98] sm:$0xff] %v1435
  %1468 = vst [vmem:[%s7 + $0xa0] sm:$0xff] %v1436
  %1469 = vst [vmem:[%s7 + $0xa8] sm:$0xff] %v1437
  %1470 = vst [vmem:[%s7 + $0xb0] sm:$0xff] %v1438
  %1471 = vst [vmem:[%s7 + $0xb8] sm:$0xff] %v1439
  %1472 = vst [vmem:[%s7 + $0xc0] sm:$0xff] %v1440
  %1473 = vst [vmem:[%s7 + $0xc8] sm:$0xff] %v1441
  %1474 = vst [vmem:[%s7 + $0xd0] sm:$0xff] %v1442
  %1475 = vst [vmem:[%s7 + $0xd8] sm:$0xff] %v1443
  %1476 = vst [vmem:[%s7 + $0xe0] sm:$0xff] %v1444
  %1477 = vst [vmem:[%s7 + $0xe8] sm:$0xff] %v1445
  %1478 = vst [vmem:[%s7 + $0xf0] sm:$0xff] %v1446
  %1479 = vst [vmem:[%s7 + $0xf8] sm:$0xff] %v1447
  // Predicated region
  $region30: #{tagger_forward.3} parent=0 // pred_check
    _
  $region31: #{tagger_forward.3} parent=0 // pred_check_branch
    %1481 = sbr.rel (0) target = $region33
  $region32: #{tagger_forward.3} parent=0 // pred_region
    _
  $region33: #{tagger_forward.3} parent=0 // pred_fallthru
    _
  // Predicated region
  $region34: #{tagger_forward.3} parent=0 // pred_check
    _
  $region35: #{tagger_forward.3} parent=0 // pred_check_branch
    %1483 = sbr.rel (0) target = $region37
  $region36: #{tagger_forward.3} parent=0 // pred_region
    _
  $region37: #{tagger_forward.3} parent=0 // pred_fallthru
    _

// kernel: tagger_forward.4
$region0: #{tagger_forward.4}
  #allocation0 [shape = 'u32[]', space=smem, size = 0x4, offset = 0x4, fixed_abs, tag = 'smem constant byte address 0x4 - core index']
  #allocation1 [shape = 'u32[144,128]{1,0:T(1,128)}', space=vmem, size = 0x12000, scoped, tag = 'internal scratch']
  #allocation2 [shape = 'f32[8,32]{1,0:T(8,128)}', space=vmem, size = 0x1000, scoped, tag = 'scratch operand']
  #allocation3 [shape = 'f32[8,32]{1,0:T(8,128)}', space=vmem, size = 0x1000, scoped, tag = 'scratch operand']
  #allocation4 [shape = 'f32[8,32]{1,0:T(8,128)}', space=vmem, size = 0x1000, scoped, tag = 'scratch operand']
  #allocation5 [shape = 'f32[8,32]{1,0:T(8,128)}', space=vmem, size = 0x1000, scoped, tag = 'scratch operand']
  %s0 = inlined_call_operand.vmem [shape: f32[16,8,256], index: 0, kind: input, shape index: {}, may-alias: {0,1}]
  %s1 = inlined_call_operand.vmem [shape: f32[16,8,256], index: 1, kind: input, shape index: {}, may-alias: {0,1}]
  %s2 = inlined_call_operand.vmem [shape: f32[32,128], index: 2, kind: input, shape index: {}]
  %s3 = inlined_call_operand.vmem [shape: f32[32,128], index: 3, kind: input, shape index: {}]
  %s4 = inlined_call_operand.vmem [shape: f32[16,8,32], index: 4, kind: output, shape index: {0}]
  %s5 = inlined_call_operand.vmem [shape: f32[16,8,32], index: 5, kind: output, shape index: {1}]
  %6 = xla_tuple %s4, %s5
  %s7 = sld [smem:[#allocation0]]
  $region61: #{tagger_forward.4} parent=0
    _
  %s9 = ssub.s32 1, %s7
  %s10 = scalar_select 0, %s9, %s7
  loop: start=0, step=1, limit=4
  $region2: #{tagger_forward.4} parent=0 // loop_pre_header
    _
  $region3: #{tagger_forward.4} parent=0 // loop_header
    %s12 = sphi 0, %s16
    %p13 = scmp.ge.s32.totalorder %s12, 4
    %s22 = sphi 0, %s24
    %s25 = sphi 0, %s22
    %s26 = sphi 0, %s25
    %s42 = sphi 0, %s26
    %s50 = sphi 0, %s52
    %s53 = sphi 0, %s50
    %s54 = sphi 0, %s53
    %s70 = sphi 0, %s54
    %s74 = sphi 0, %s74
    %s76 = sphi 0, %s74
    %s77 = sphi 0, %s76
    %s91 = sphi 0, %s77
    %s95 = sphi 0, %s95
    %s97 = sphi 0, %s95
    %s98 = sphi 0, %s97
    %s112 = sphi 0, %s98
    %s118 = sphi 0, %s120
    %s121 = sphi 0, %s118
    %s122 = sphi 0, %s121
    %s138 = sphi 0, %s122
    %s146 = sphi 0, %s148
    %s149 = sphi 0, %s146
    %s150 = sphi 0, %s149
    %s166 = sphi 0, %s150
  $region4: #{tagger_forward.4} parent=0 // loop_header_branch
    %15 = sbr.rel (%p13) target = $region8
  $region5: #{tagger_forward.4} parent=0 // loop_body
    %s17 = ssub.s32 %s12, 1
    %s18 = ssub.s32 %s12, 2
    %s19 = sadd.s32 %s12, 1
    %s20 = ssub.s32 %s12, %s19
    %p21 = scmp.eq.s32.totalorder %s20, 0
    %s23 = sadd.s32 %s22, 1
    %s24 = scalar_select %p21, %s22, %s23
    %p27 = pneg %p21
    %p28 = scmp.eq.s32.totalorder %s12, 1
    %p29 = por %p27, %p28
    %p30 = scmp.ne.s32.totalorder %s22, %s25
    %p31 = scmp.eq.s32.totalorder %s12, 0
    %p32 = por %p30, %p31
    %p33 = scmp.ne.s32.totalorder %s22, %s25
    %p34 = scmp.eq.s32.totalorder %s17, 1
    %p35 = por %p33, %p34
    %p36 = scmp.ne.s32.totalorder %s25, %s26
    %p37 = scmp.eq.s32.totalorder %s17, 0
    %p38 = por %p36, %p37
    %p39 = scmp.ne.s32.totalorder %s25, %s26
    %p40 = scmp.eq.s32.totalorder %s18, 1
    %p41 = por %p39, %p40
    %p43 = scmp.ne.s32.totalorder %s26, %s42
    %p44 = scmp.eq.s32.totalorder %s18, 0
    %p45 = por %p43, %p44
    %s46 = ssub.s32 1, %s12
    %s47 = ssub.s32 1, %s19
    %s48 = ssub.s32 %s46, %s47
    %p49 = scmp.eq.s32.totalorder %s48, 0
    %s51 = sadd.s32 %s50, 1
    %s52 = scalar_select %p49, %s50, %s51
    %p55 = pneg %p49
    %p56 = scmp.eq.s32.totalorder %s12, 1
    %p57 = por %p55, %p56
    %p58 = scmp.ne.s32.totalorder %s50, %s53
    %p59 = scmp.eq.s32.totalorder %s12, 0
    %p60 = por %p58, %p59
    %p61 = scmp.ne.s32.totalorder %s50, %s53
    %p62 = scmp.eq.s32.totalorder %s17, 1
    %p63 = por %p61, %p62
    %p64 = scmp.ne.s32.totalorder %s53, %s54
    %p65 = scmp.eq.s32.totalorder %s17, 0
    %p66 = por %p64, %p65
    %p67 = scmp.ne.s32.totalorder %s53, %s54
    %p68 = scmp.eq.s32.totalorder %s18, 1
    %p69 = por %p67, %p68
    %p71 = scmp.ne.s32.totalorder %s54, %s70
    %p72 = scmp.eq.s32.totalorder %s18, 0
    %p73 = por %p71, %p72
    %s75 = sadd.s32 %s74, 1
    %p78 = scmp.eq.s32.totalorder %s12, 1
    %p79 = scmp.ne.s32.totalorder %s74, %s76
    %p80 = scmp.eq.s32.totalorder %s12, 0
    %p81 = por %p79, %p80
    %p82 = scmp.ne.s32.totalorder %s74, %s76
    %p83 = scmp.eq.s32.totalorder %s17, 1
    %p84 = por %p82, %p83
    %p85 = scmp.ne.s32.totalorder %s76, %s77
    %p86 = scmp.eq.s32.totalorder %s17, 0
    %p87 = por %p85, %p86
    %p88 = scmp.ne.s32.totalorder %s76, %s77
    %p89 = scmp.eq.s32.totalorder %s18, 1
    %p90 = por %p88, %p89
    %p92 = scmp.ne.s32.totalorder %s77, %s91
    %p93 = scmp.eq.s32.totalorder %s18, 0
    %p94 = por %p92, %p93
    %s96 = sadd.s32 %s95, 1
    %p99 = scmp.eq.s32.totalorder %s12, 1
    %p100 = scmp.ne.s32.totalorder %s95, %s97
    %p101 = scmp.eq.s32.totalorder %s12, 0
    %p102 = por %p100, %p101
    %p103 = scmp.ne.s32.totalorder %s95, %s97
    %p104 = scmp.eq.s32.totalorder %s17, 1
    %p105 = por %p103, %p104
    %p106 = scmp.ne.s32.totalorder %s97, %s98
    %p107 = scmp.eq.s32.totalorder %s17, 0
    %p108 = por %p106, %p107
    %p109 = scmp.ne.s32.totalorder %s97, %s98
    %p110 = scmp.eq.s32.totalorder %s18, 1
    %p111 = por %p109, %p110
    %p113 = scmp.ne.s32.totalorder %s98, %s112
    %p114 = scmp.eq.s32.totalorder %s18, 0
    %p115 = por %p113, %p114
    %s116 = ssub.s32 %s12, %s19
    %p117 = scmp.eq.s32.totalorder %s116, 0
    %s119 = sadd.s32 %s118, 1
    %s120 = scalar_select %p117, %s118, %s119
    %p123 = pneg %p117
    %p124 = scmp.eq.s32.totalorder %s12, 1
    %p125 = por %p123, %p124
    %p126 = scmp.ne.s32.totalorder %s118, %s121
    %p127 = scmp.eq.s32.totalorder %s12, 0
    %p128 = por %p126, %p127
    %p129 = scmp.ne.s32.totalorder %s118, %s121
    %p130 = scmp.eq.s32.totalorder %s17, 1
    %p131 = por %p129, %p130
    %p132 = scmp.ne.s32.totalorder %s121, %s122
    %p133 = scmp.eq.s32.totalorder %s17, 0
    %p134 = por %p132, %p133
    %p135 = scmp.ne.s32.totalorder %s121, %s122
    %p136 = scmp.eq.s32.totalorder %s18, 1
    %p137 = por %p135, %p136
    %p139 = scmp.ne.s32.totalorder %s122, %s138
    %p140 = scmp.eq.s32.totalorder %s18, 0
    %p141 = por %p139, %p140
    %s142 = ssub.s32 1, %s12
    %s143 = ssub.s32 1, %s19
    %s144 = ssub.s32 %s142, %s143
    %p145 = scmp.eq.s32.totalorder %s144, 0
    %s147 = sadd.s32 %s146, 1
    %s148 = scalar_select %p145, %s146, %s147
    %p151 = pneg %p145
    %p152 = scmp.eq.s32.totalorder %s12, 1
    %p153 = por %p151, %p152
    %p154 = scmp.ne.s32.totalorder %s146, %s149
    %p155 = scmp.eq.s32.totalorder %s12, 0
    %p156 = por %p154, %p155
    %p157 = scmp.ne.s32.totalorder %s146, %s149
    %p158 = scmp.eq.s32.totalorder %s17, 1
    %p159 = por %p157, %p158
    %p160 = scmp.ne.s32.totalorder %s149, %s150
    %p161 = scmp.eq.s32.totalorder %s17, 0
    %p162 = por %p160, %p161
    %p163 = scmp.ne.s32.totalorder %s149, %s150
    %p164 = scmp.eq.s32.totalorder %s18, 1
    %p165 = por %p163, %p164
    %p167 = scmp.ne.s32.totalorder %s150, %s166
    %p168 = scmp.eq.s32.totalorder %s18, 0
    %p169 = por %p167, %p168
    %p170 = scmp.le.s32.totalorder 1, %s12
    %p171 = scmp.lt.s32.totalorder %s12, 3
    %p172 = pnand %p170, %p171
    %p173 = pneg %p172
    // Predicated region
    $region9: #{tagger_forward.4} parent=5 // pred_check
      _
    $region10: #{tagger_forward.4} parent=5 // pred_check_branch
      %175 = sbr.rel (%p172) target = $region12
    $region11: #{tagger_forward.4} parent=5 // pred_region
      %s176 = ssub.s32 %s12, 1
      // Predicated region
      $region13: #{tagger_forward.4} parent=11 // pred_check
        %p177 = pneg %p87
      $region14: #{tagger_forward.4} parent=11 // pred_check_branch
        %179 = sbr.rel (%p177) target = $region16
      $region15: #{tagger_forward.4} parent=11 // pred_region
        _
      $region16: #{tagger_forward.4} parent=11 // pred_fallthru
        _
      // Predicated region
      $region17: #{tagger_forward.4} parent=11 // pred_check
        %p180 = pneg %p108
      $region18: #{tagger_forward.4} parent=11 // pred_check_branch
        %182 = sbr.rel (%p180) target = $region20
      $region19: #{tagger_forward.4} parent=11 // pred_region
        _
      $region20: #{tagger_forward.4} parent=11 // pred_fallthru
        _
    $region12: #{tagger_forward.4} parent=5 // pred_fallthru
      _
    %p183 = scmp.lt.s32.totalorder %s12, 2
    // Predicated region
    $region21: #{tagger_forward.4} parent=5 // pred_check
      %p184 = pneg %p183
    $region22: #{tagger_forward.4} parent=5 // pred_check_branch
      %186 = sbr.rel (%p184) target = $region24
    $region23: #{tagger_forward.4} parent=5 // pred_region
      // Predicated region
      $region25: #{tagger_forward.4} parent=23 // pred_check
        %p187 = pneg %p32
      $region26: #{tagger_forward.4} parent=23 // pred_check_branch
        %189 = sbr.rel (%p187) target = $region28
      $region27: #{tagger_forward.4} parent=23 // pred_region
        %s190 = smul.u32 8, %s12
        %p191 = scmp.lt.s32.totalorder %s190, 15
        %s192 = scalar_select %p191, %s190, 15
        %s193 = smul.addr %s192, 2
        %s194 = smul.addr %s193, 8
        %s195 = scalar_lea.vmem %s0, %s194
        %s196 = smul.u32 8, %s12
      $region28: #{tagger_forward.4} parent=23 // pred_fallthru
        _
      // Predicated region
      $region29: #{tagger_forward.4} parent=23 // pred_check
        %p197 = pneg %p60
      $region30: #{tagger_forward.4} parent=23 // pred_check_branch
        %199 = sbr.rel (%p197) target = $region32
      $region31: #{tagger_forward.4} parent=23 // pred_region
        %s200 = ssub.s32 1, %s12
        %s201 = smul.u32 8, %s200
        %p202 = scmp.lt.s32.totalorder %s201, 15
        %s203 = scalar_select %p202, %s201, 15
        %s204 = smul.addr %s203, 2
        %s205 = smul.addr %s204, 8
        %s206 = scalar_lea.vmem %s1, %s205
        %s207 = ssub.s32 1, %s12
        %s208 = smul.u32 8, %s207
      $region32: #{tagger_forward.4} parent=23 // pred_fallthru
        _
    $region24: #{tagger_forward.4} parent=5 // pred_fallthru
      _
    %p209 = scmp.le.s32.totalorder 1, %s12
    %p210 = scmp.lt.s32.totalorder %s12, 3
    %p211 = pnand %p209, %p210
    %p212 = pneg %p211
    // Predicated region
    $region33: #{tagger_forward.4} parent=5 // pred_check
      _
    $region34: #{tagger_forward.4} parent=5 // pred_check_branch
      %214 = sbr.rel (%p211) target = $region36
    $region35: #{tagger_forward.4} parent=5 // pred_region
      %s215 = ssub.s32 %s12, 1
      %s216 = smul.u32 8, %s17
      %p217 = scmp.lt.s32.totalorder %s216, 15
      %s218 = scalar_select %p217, %s216, 15
      %s219 = smul.addr %s218, 2
      %s220 = smul.addr %s219, 8
      %s221 = scalar_lea.vmem %s0, %s220
      %p222 = pneg %p38
      %p223 = pneg %p35
      %s224 = ssub.s32 1, %s17
      %s225 = smul.u32 8, %s224
      %p226 = scmp.lt.s32.totalorder %s225, 15
      %s227 = scalar_select %p226, %s225, 15
      %s228 = smul.addr %s227, 2
      %s229 = smul.addr %s228, 8
      %s230 = scalar_lea.vmem %s1, %s229
      %p231 = pneg %p66
      %p232 = pneg %p63
      %p233 = pneg %p87
      %p234 = pneg %p84
      %p235 = pneg %p108
      %p236 = pneg %p105
      %p237 = pneg %p134
      %p238 = pneg %p131
      %s239 = smul.u32 8, %s17
      %p240 = scmp.lt.s32.totalorder %s239, 15
      %s241 = scalar_select %p240, %s239, 15
      %s242 = smul.addr %s241, 8
      %s243 = scalar_lea.vmem %s4, %s242
      %p244 = pneg %p162
      %p245 = pneg %p159
      %s246 = ssub.s32 1, %s17
      %s247 = smul.u32 8, %s246
      %p248 = scmp.lt.s32.totalorder %s247, 15
      %s249 = scalar_select %p248, %s247, 15
      %s250 = smul.addr %s249, 8
      %s251 = scalar_lea.vmem %s5, %s250
      %s252 = smul.u32 8, %s17
      %p253 = scmp.lt.s32.totalorder %s252, 15
      %s254 = scalar_select %p253, %s252, 15
      %s255 = smul.addr %s254, 2
      %s256 = smul.addr %s255, 8
      %s257 = scalar_lea.vmem %s0, %s256
      %s258 = smul.u32 8, %s17
      %s259 = ssub.s32 1, %s17
      %s260 = smul.u32 8, %s259
      %p261 = scmp.lt.s32.totalorder %s260, 15
      %s262 = scalar_select %p261, %s260, 15
      %s263 = smul.addr %s262, 2
      %s264 = smul.addr %s263, 8
      %s265 = scalar_lea.vmem %s1, %s264
      %s266 = ssub.s32 1, %s17
      %s267 = smul.u32 8, %s266
      %s268 = smul.u32 8, %s17
      %p269 = scmp.lt.s32.totalorder %s268, 15
      %s270 = scalar_select %p269, %s268, 15
      %s271 = smul.addr %s270, 8
      %s272 = scalar_lea.vmem %s4, %s271
      %s273 = smul.u32 8, %s17
      %s274 = ssub.s32 1, %s17
      %s275 = smul.u32 8, %s274
      %p276 = scmp.lt.s32.totalorder %s275, 15
      %s277 = scalar_select %p276, %s275, 15
      %s278 = smul.addr %s277, 8
      %s279 = scalar_lea.vmem %s5, %s278
      %s280 = ssub.s32 1, %s17
      %s281 = smul.u32 8, %s280
      %p282 = scmp.eq.s32.totalorder %s17, 0
      // Predicated region
      $region37: #{tagger_forward.4} parent=35 // pred_check
        %p283 = pneg %p282
      $region38: #{tagger_forward.4} parent=35 // pred_check_branch
        %285 = sbr.rel (%p283) target = $region40
      $region39: #{tagger_forward.4} parent=35 // pred_region
        %vm286 = vcmask 261120
        %287 = vst.msk [vmem:[#allocation2] sm:$0xff] %vm286, 0.0
        %288 = vst.msk [vmem:[#allocation3] sm:$0xff] %vm286, 0.0
        %289 = vst.msk [vmem:[#allocation4] sm:$0xff] %vm286, 0.0
        %290 = vst.msk [vmem:[#allocation5] sm:$0xff] %vm286, 0.0
      $region40: #{tagger_forward.4} parent=35 // pred_fallthru
        _
      %v291 = vld [vmem:[%s2] sm:$0xff]
      %v292 = vld [vmem:[%s2 + $0x8] sm:$0xff]
      %v293 = vld [vmem:[%s2 + $0x10] sm:$0xff]
      %v294 = vld [vmem:[%s2 + $0x18] sm:$0xff]
      %v295 = vld [vmem:[%s3] sm:$0xff]
      %v296 = vld [vmem:[%s3 + $0x8] sm:$0xff]
      %v297 = vld [vmem:[%s3 + $0x10] sm:$0xff]
      %v298 = vld [vmem:[%s3 + $0x18] sm:$0xff]
      %v299 = vld [vmem:[#allocation2] sm:$0xff]
      %v300 = vld [vmem:[#allocation3] sm:$0xff]
      %v301 = vld [vmem:[#allocation4] sm:$0xff]
      %v302 = vld [vmem:[#allocation5] sm:$0xff]
      %v303 = vld [vmem:[%s257] sm:$0xff]
      %vm304 = vcmask 261120
      %v306 = vsel %vm304, %v299, 0
      %308 = vmatprep.subr.mxu0 0.0
      %309 = vmatpush1.msra.mxu0 0.0
      %310 = vmatprep.subr.mxu0 0.0
      %311 = vmatpush1.msra.mxu0 0.0
      %312 = vmatprep.subr.mxu0 0.0
      %313 = vmatpush1.msra.mxu0 0.0
      %314 = vmatprep.subr.mxu0 0.0
      %315 = vmatpush1.msra.mxu0 0.0
      %316 = vmatprep.subr.mxu0 0.0
      %317 = vmatpush1.msra.mxu0 0.0
      %318 = vmatprep.subr.mxu0 0.0
      %319 = vmatpush1.msra.mxu0 0.0
      %320 = vmatprep.subr.mxu0 0.0
      %321 = vmatpush1.msra.mxu0 0.0
      %322 = vmatprep.subr.mxu0 0.0
      %323 = vmatpush1.msra.mxu0 0.0
      %324 = vmatprep.subr.mxu0 0.0
      %325 = vmatpush1.msra.mxu0 0.0
      %326 = vmatprep.subr.mxu0 0.0
      %327 = vmatpush1.msra.mxu0 0.0
      %328 = vmatprep.subr.mxu0 0.0
      %329 = vmatpush1.msra.mxu0 0.0
      %330 = vmatprep.subr.mxu0 0.0
      %331 = vmatpush1.msra.mxu0 0.0
      %332 = vmatprep.subr.mxu0 0.0
      %333 = vmatpush1.msra.mxu0 %v294
      %334 = vmatprep.subr.mxu0 0.0
      %335 = vmatpush1.msra.mxu0 %v293
      %336 = vmatprep.subr.mxu0 0.0
      %337 = vmatpush1.msra.mxu0 %v292
      %338 = vmatprep.subr.mxu0 0.0
      %339 = vmatpush1.msra.mxu0 %v291
      %340 = vmatprep.subr.mxu0 0.0
      %341 = vmatpush2.msra.mxu0 0.0
      %342 = vmatprep.subr.mxu0 0.0
      %343 = vmatpush2.msra.mxu0 0.0
      %344 = vmatprep.subr.mxu0 0.0
      %345 = vmatpush2.msra.mxu0 0.0
      %346 = vmatprep.subr.mxu0 0.0
      %347 = vmatpush2.msra.mxu0 0.0
      %348 = vmatprep.subr.mxu0 0.0
      %349 = vmatpush2.msra.mxu0 0.0
      %350 = vmatprep.subr.mxu0 0.0
      %351 = vmatpush2.msra.mxu0 0.0
      %352 = vmatprep.subr.mxu0 0.0
      %353 = vmatpush2.msra.mxu0 0.0
      %354 = vmatprep.subr.mxu0 0.0
      %355 = vmatpush2.msra.mxu0 0.0
      %356 = vmatprep.subr.mxu0 0.0
      %357 = vmatpush2.msra.mxu0 0.0
      %358 = vmatprep.subr.mxu0 0.0
      %359 = vmatpush2.msra.mxu0 0.0
      %360 = vmatprep.subr.mxu0 0.0
      %361 = vmatpush2.msra.mxu0 0.0
      %362 = vmatprep.subr.mxu0 0.0
      %363 = vmatpush2.msra.mxu0 0.0
      %364 = vmatprep.subr.mxu0 0.0
      %365 = vmatpush2.msra.mxu0 0.0
      %366 = vmatprep.subr.mxu0 0.0
      %367 = vmatpush2.msra.mxu0 0.0
      %368 = vmatprep.subr.mxu0 0.0
      %369 = vmatpush2.msra.mxu0 0.0
      %370 = vmatprep.subr.mxu0 0.0
      %371 = vmatpush2.msra.mxu0 0.0
      %372 = vmatprep.mubr.f32.mxu0 0.0
      %373 = vmatmul.mubr.f32.gmra.mxu0 %v306
      %v374 = vpop.f32.mrf.mxu0
      %v375 = vadd.f32 0.0, %v374
      %v376 = vpop.f32.mrf.mxu0
      %377 = vdwg.mxu0
      %v378 = vadd.f32 %v303, %v375
      %v379 = vxor.u32 %v378, 2147483648
      %v380 = vmul.f32 %v379, 1.442695
      %v381 = vpow.pop %v380
      %v382 = vadd.f32 %v381, 1.0
      %v383 = vrcp.pop %v382
      %v384 = vmul.f32 1.0, %v383
      %v385 = vtanh.pop %v378
      %387 = vrot.lane.b32.xlu0 %v300, 32
      %v388 = vpop.permute.xlu0 %387
      %v390 = vmul.f32 %v384, %v388
      %392 = vrot.lane.b32.xlu0 %v385, 64
      %v393 = vpop.permute.xlu0 %392
      %v395 = vmul.f32 %v384, %v393
      %397 = vrot.lane.b32.xlu0 %v395, 32
      %v398 = vpop.permute.xlu0 %397
      %v400 = vadd.f32 %v390, %v398
      %v401 = vtanh.pop %v400
      %403 = vrot.lane.b32.xlu0 %v401, 64
      %v404 = vpop.permute.xlu0 %403
      %v406 = vmul.f32 %v384, %v404
      %408 = vrot.lane.b32.xlu0 %v406, 32
      %v409 = vpop.permute.xlu0 %408
      %411 = vst.msk [vmem:[%s272] sm:$0xff] %vm304, %v409
      %s412 = scalar_lea.vmem %s265, 112
      %v413 = vld [vmem:[%s412 + $0x8] sm:$0xff]
      %v415 = vsel %vm304, %v301, 0
      %417 = vmatprep.subr.mxu0 0.0
      %418 = vmatpush1.msra.mxu0 0.0
      %419 = vmatprep.subr.mxu0 0.0
      %420 = vmatpush1.msra.mxu0 0.0
      %421 = vmatprep.subr.mxu0 0.0
      %422 = vmatpush1.msra.mxu0 0.0
      %423 = vmatprep.subr.mxu0 0.0
      %424 = vmatpush1.msra.mxu0 0.0
      %425 = vmatprep.subr.mxu0 0.0
      %426 = vmatpush1.msra.mxu0 0.0
      %427 = vmatprep.subr.mxu0 0.0
      %428 = vmatpush1.msra.mxu0 0.0
      %429 = vmatprep.subr.mxu0 0.0
      %430 = vmatpush1.msra.mxu0 0.0
      %431 = vmatprep.subr.mxu0 0.0
      %432 = vmatpush1.msra.mxu0 0.0
      %433 = vmatprep.subr.mxu0 0.0
      %434 = vmatpush1.msra.mxu0 0.0
      %435 = vmatprep.subr.mxu0 0.0
      %436 = vmatpush1.msra.mxu0 0.0
      %437 = vmatprep.subr.mxu0 0.0
      %438 = vmatpush1.msra.mxu0 0.0
      %439 = vmatprep.subr.mxu0 0.0
      %440 = vmatpush1.msra.mxu0 0.0
      %441 = vmatprep.subr.mxu0 0.0
      %442 = vmatpush1.msra.mxu0 %v298
      %443 = vmatprep.subr.mxu0 0.0
      %444 = vmatpush1.msra.mxu0 %v297
      %445 = vmatprep.subr.mxu0 0.0
      %446 = vmatpush1.msra.mxu0 %v296
      %447 = vmatprep.subr.mxu0 0.0
      %448 = vmatpush1.msra.mxu0 %v295
      %449 = vmatprep.subr.mxu0 0.0
      %450 = vmatpush2.msra.mxu0 0.0
      %451 = vmatprep.subr.mxu0 0.0
      %452 = vmatpush2.msra.mxu0 0.0
      %453 = vmatprep.subr.mxu0 0.0
      %454 = vmatpush2.msra.mxu0 0.0
      %455 = vmatprep.subr.mxu0 0.0
      %456 = vmatpush2.msra.mxu0 0.0
      %457 = vmatprep.subr.mxu0 0.0
      %458 = vmatpush2.msra.mxu0 0.0
      %459 = vmatprep.subr.mxu0 0.0
      %460 = vmatpush2.msra.mxu0 0.0
      %461 = vmatprep.subr.mxu0 0.0
      %462 = vmatpush2.msra.mxu0 0.0
      %463 = vmatprep.subr.mxu0 0.0
      %464 = vmatpush2.msra.mxu0 0.0
      %465 = vmatprep.subr.mxu0 0.0
      %466 = vmatpush2.msra.mxu0 0.0
      %467 = vmatprep.subr.mxu0 0.0
      %468 = vmatpush2.msra.mxu0 0.0
      %469 = vmatprep.subr.mxu0 0.0
      %470 = vmatpush2.msra.mxu0 0.0
      %471 = vmatprep.subr.mxu0 0.0
      %472 = vmatpush2.msra.mxu0 0.0
      %473 = vmatprep.subr.mxu0 0.0
      %474 = vmatpush2.msra.mxu0 0.0
      %475 = vmatprep.subr.mxu0 0.0
      %476 = vmatpush2.msra.mxu0 0.0
      %477 = vmatprep.subr.mxu0 0.0
      %478 = vmatpush2.msra.mxu0 0.0
      %479 = vmatprep.subr.mxu0 0.0
      %480 = vmatpush2.msra.mxu0 0.0
      %481 = vmatprep.mubr.f32.mxu0 0.0
      %482 = vmatmul.mubr.f32.gmra.mxu0 %v415
      %v483 = vpop.f32.mrf.mxu0
      %v484 = vadd.f32 0.0, %v483
      %v485 = vpop.f32.mrf.mxu0
      %486 = vdwg.mxu0
      %v487 = vadd.f32 %v413, %v484
      %v488 = vxor.u32 %v487, 2147483648
      %v489 = vmul.f32 %v488, 1.442695
      %v490 = vpow.pop %v489
      %v491 = vadd.f32 %v490, 1.0
      %v492 = vrcp.pop %v491
      %v493 = vmul.f32 1.0, %v492
      %v494 = vtanh.pop %v487
      %496 = vrot.lane.b32.xlu0 %v302, 32
      %v497 = vpop.permute.xlu0 %496
      %v499 = vmul.f32 %v493, %v497
      %501 = vrot.lane.b32.xlu0 %v494, 64
      %v502 = vpop.permute.xlu0 %501
      %v504 = vmul.f32 %v493, %v502
      %506 = vrot.lane.b32.xlu0 %v504, 32
      %v507 = vpop.permute.xlu0 %506
      %v509 = vadd.f32 %v499, %v507
      %v510 = vtanh.pop %v509
      %512 = vrot.lane.b32.xlu0 %v510, 64
      %v513 = vpop.permute.xlu0 %512
      %v515 = vmul.f32 %v493, %v513
      %517 = vrot.lane.b32.xlu0 %v515, 32
      %v518 = vpop.permute.xlu0 %517
      %s520 = scalar_lea.vmem %s279, 56
      %521 = vst.msk [vmem:[%s520] sm:$0xff] %vm304, %v518
      %s522 = scalar_lea.vmem %s257, 16
      %v523 = vld [vmem:[%s522] sm:$0xff]
      %v524 = vsel %vm304, %v409, 0
      %526 = vmatprep.subr.mxu0 0.0
      %527 = vmatpush1.msra.mxu0 0.0
      %528 = vmatprep.subr.mxu0 0.0
      %529 = vmatpush1.msra.mxu0 0.0
      %530 = vmatprep.subr.mxu0 0.0
      %531 = vmatpush1.msra.mxu0 0.0
      %532 = vmatprep.subr.mxu0 0.0
      %533 = vmatpush1.msra.mxu0 0.0
      %534 = vmatprep.subr.mxu0 0.0
      %535 = vmatpush1.msra.mxu0 0.0
      %536 = vmatprep.subr.mxu0 0.0
      %537 = vmatpush1.msra.mxu0 0.0
      %538 = vmatprep.subr.mxu0 0.0
      %539 = vmatpush1.msra.mxu0 0.0
      %540 = vmatprep.subr.mxu0 0.0
      %541 = vmatpush1.msra.mxu0 0.0
      %542 = vmatprep.subr.mxu0 0.0
      %543 = vmatpush1.msra.mxu0 0.0
      %544 = vmatprep.subr.mxu0 0.0
      %545 = vmatpush1.msra.mxu0 0.0
      %546 = vmatprep.subr.mxu0 0.0
      %547 = vmatpush1.msra.mxu0 0.0
      %548 = vmatprep.subr.mxu0 0.0
      %549 = vmatpush1.msra.mxu0 0.0
      %550 = vmatprep.subr.mxu0 0.0
      %551 = vmatpush1.msra.mxu0 %v294
      %552 = vmatprep.subr.mxu0 0.0
      %553 = vmatpush1.msra.mxu0 %v293
      %554 = vmatprep.subr.mxu0 0.0
      %555 = vmatpush1.msra.mxu0 %v292
      %556 = vmatprep.subr.mxu0 0.0
      %557 = vmatpush1.msra.mxu0 %v291
      %558 = vmatprep.subr.mxu0 0.0
      %559 = vmatpush2.msra.mxu0 0.0
      %560 = vmatprep.subr.mxu0 0.0
      %561 = vmatpush2.msra.mxu0 0.0
      %562 = vmatprep.subr.mxu0 0.0
      %563 = vmatpush2.msra.mxu0 0.0
      %564 = vmatprep.subr.mxu0 0.0
      %565 = vmatpush2.msra.mxu0 0.0
      %566 = vmatprep.subr.mxu0 0.0
      %567 = vmatpush2.msra.mxu0 0.0
      %568 = vmatprep.subr.mxu0 0.0
      %569 = vmatpush2.msra.mxu0 0.0
      %570 = vmatprep.subr.mxu0 0.0
      %571 = vmatpush2.msra.mxu0 0.0
      %572 = vmatprep.subr.mxu0 0.0
      %573 = vmatpush2.msra.mxu0 0.0
      %574 = vmatprep.subr.mxu0 0.0
      %575 = vmatpush2.msra.mxu0 0.0
      %576 = vmatprep.subr.mxu0 0.0
      %577 = vmatpush2.msra.mxu0 0.0
      %578 = vmatprep.subr.mxu0 0.0
      %579 = vmatpush2.msra.mxu0 0.0
      %580 = vmatprep.subr.mxu0 0.0
      %581 = vmatpush2.msra.mxu0 0.0
      %582 = vmatprep.subr.mxu0 0.0
      %583 = vmatpush2.msra.mxu0 0.0
      %584 = vmatprep.subr.mxu0 0.0
      %585 = vmatpush2.msra.mxu0 0.0
      %586 = vmatprep.subr.mxu0 0.0
      %587 = vmatpush2.msra.mxu0 0.0
      %588 = vmatprep.subr.mxu0 0.0
      %589 = vmatpush2.msra.mxu0 0.0
      %590 = vmatprep.mubr.f32.mxu0 0.0
      %591 = vmatmul.mubr.f32.gmra.mxu0 %v524
      %v592 = vpop.f32.mrf.mxu0
      %v593 = vadd.f32 0.0, %v592
      %v594 = vpop.f32.mrf.mxu0
      %595 = vdwg.mxu0
      %v596 = vadd.f32 %v523, %v593
      %v597 = vxor.u32 %v596, 2147483648
      %v598 = vmul.f32 %v597, 1.442695
      %v599 = vpow.pop %v598
      %v600 = vadd.f32 %v599, 1.0
      %v601 = vrcp.pop %v600
      %v602 = vmul.f32 1.0, %v601
      %v603 = vtanh.pop %v596
      %v604 = vmul.f32 %v602, %v400
      %606 = vrot.lane.b32.xlu0 %v603, 64
      %v607 = vpop.permute.xlu0 %606
      %v609 = vmul.f32 %v602, %v607
      %611 = vrot.lane.b32.xlu0 %v609, 32
      %v612 = vpop.permute.xlu0 %611
      %v614 = vadd.f32 %v604, %v612
      %v615 = vtanh.pop %v614
      %617 = vrot.lane.b32.xlu0 %v615, 64
      %v618 = vpop.permute.xlu0 %617
      %v620 = vmul.f32 %v602, %v618
      %622 = vrot.lane.b32.xlu0 %v620, 32
      %v623 = vpop.permute.xlu0 %622
      %s625 = scalar_lea.vmem %s272, 8
      %626 = vst.msk [vmem:[%s625] sm:$0xff] %vm304, %v623
      %s627 = scalar_lea.vmem %s265, 96
      %v628 = vld [vmem:[%s627 + $0x8] sm:$0xff]
      %v629 = vsel %vm304, %v518, 0
      %631 = vmatprep.subr.mxu0 0.0
      %632 = vmatpush1.msra.mxu0 0.0
      %633 = vmatprep.subr.mxu0 0.0
      %634 = vmatpush1.msra.mxu0 0.0
      %635 = vmatprep.subr.mxu0 0.0
      %636 = vmatpush1.msra.mxu0 0.0
      %637 = vmatprep.subr.mxu0 0.0
      %638 = vmatpush1.msra.mxu0 0.0
      %639 = vmatprep.subr.mxu0 0.0
      %640 = vmatpush1.msra.mxu0 0.0
      %641 = vmatprep.subr.mxu0 0.0
      %642 = vmatpush1.msra.mxu0 0.0
      %643 = vmatprep.subr.mxu0 0.0
      %644 = vmatpush1.msra.mxu0 0.0
      %645 = vmatprep.subr.mxu0 0.0
      %646 = vmatpush1.msra.mxu0 0.0
      %647 = vmatprep.subr.mxu0 0.0
      %648 = vmatpush1.msra.mxu0 0.0
      %649 = vmatprep.subr.mxu0 0.0
      %650 = vmatpush1.msra.mxu0 0.0
      %651 = vmatprep.subr.mxu0 0.0
      %652 = vmatpush1.msra.mxu0 0.0
      %653 = vmatprep.subr.mxu0 0.0
      %654 = vmatpush1.msra.mxu0 0.0
      %655 = vmatprep.subr.mxu0 0.0
      %656 = vmatpush1.msra.mxu0 %v298
      %657 = vmatprep.subr.mxu0 0.0
      %658 = vmatpush1.msra.mxu0 %v297
      %659 = vmatprep.subr.mxu0 0.0
      %660 = vmatpush1.msra.mxu0 %v296
      %661 = vmatprep.subr.mxu0 0.0
      %662 = vmatpush1.msra.mxu0 %v295
      %663 = vmatprep.subr.mxu0 0.0
      %664 = vmatpush2.msra.mxu0 0.0
      %665 = vmatprep.subr.mxu0 0.0
      %666 = vmatpush2.msra.mxu0 0.0
      %667 = vmatprep.subr.mxu0 0.0
      %668 = vmatpush2.msra.mxu0 0.0
      %669 = vmatprep.subr.mxu0 0.0
      %670 = vmatpush2.msra.mxu0 0.0
      %671 = vmatprep.subr.mxu0 0.0
      %672 = vmatpush2.msra.mxu0 0.0
      %673 = vmatprep.subr.mxu0 0.0
      %674 = vmatpush2.msra.mxu0 0.0
      %675 = vmatprep.subr.mxu0 0.0
      %676 = vmatpush2.msra.mxu0 0.0
      %677 = vmatprep.subr.mxu0 0.0
      %678 = vmatpush2.msra.mxu0 0.0
      %679 = vmatprep.subr.mxu0 0.0
      %680 = vmatpush2.msra.mxu0 0.0
      %681 = vmatprep.subr.mxu0 0.0
      %682 = vmatpush2.msra.mxu0 0.0
      %683 = vmatprep.subr.mxu0 0.0
      %684 = vmatpush2.msra.mxu0 0.0
      %685 = vmatprep.subr.mxu0 0.0
      %686 = vmatpush2.msra.mxu0 0.0
      %687 = vmatprep.subr.mxu0 0.0
      %688 = vmatpush2.msra.mxu0 0.0
      %689 = vmatprep.subr.mxu0 0.0
      %690 = vmatpush2.msra.mxu0 0.0
      %691 = vmatprep.subr.mxu0 0.0
      %692 = vmatpush2.msra.mxu0 0.0
      %693 = vmatprep.subr.mxu0 0.0
      %694 = vmatpush2.msra.mxu0 0.0
      %695 = vmatprep.mubr.f32.mxu0 0.0
      %696 = vmatmul.mubr.f32.gmra.mxu0 %v629
      %v697 = vpop.f32.mrf.mxu0
      %v698 = vadd.f32 0.0, %v697
      %v699 = vpop.f32.mrf.mxu0
      %700 = vdwg.mxu0
      %v701 = vadd.f32 %v628, %v698
      %v702 = vxor.u32 %v701, 2147483648
      %v703 = vmul.f32 %v702, 1.442695
      %v704 = vpow.pop %v703
      %v705 = vadd.f32 %v704, 1.0
      %v706 = vrcp.pop %v705
      %v707 = vmul.f32 1.0, %v706
      %v708 = vtanh.pop %v701
      %v709 = vmul.f32 %v707, %v509
      %711 = vrot.lane.b32.xlu0 %v708, 64
      %v712 = vpop.permute.xlu0 %711
      %v714 = vmul.f32 %v707, %v712
      %716 = vrot.lane.b32.xlu0 %v714, 32
      %v717 = vpop.permute.xlu0 %716
      %v719 = vadd.f32 %v709, %v717
      %v720 = vtanh.pop %v719
      %722 = vrot.lane.b32.xlu0 %v720, 64
      %v723 = vpop.permute.xlu0 %722
      %v725 = vmul.f32 %v707, %v723
      %727 = vrot.lane.b32.xlu0 %v725, 32
      %v728 = vpop.permute.xlu0 %727
      %s730 = scalar_lea.vmem %s279, 48
      %731 = vst.msk [vmem:[%s730] sm:$0xff] %vm304, %v728
      %s732 = scalar_lea.vmem %s257, 32
      %v733 = vld [vmem:[%s732] sm:$0xff]
      %v734 = vsel %vm304, %v623, 0
      %736 = vmatprep.subr.mxu0 0.0
      %737 = vmatpush1.msra.mxu0 0.0
      %738 = vmatprep.subr.mxu0 0.0
      %739 = vmatpush1.msra.mxu0 0.0
      %740 = vmatprep.subr.mxu0 0.0
      %741 = vmatpush1.msra.mxu0 0.0
      %742 = vmatprep.subr.mxu0 0.0
      %743 = vmatpush1.msra.mxu0 0.0
      %744 = vmatprep.subr.mxu0 0.0
      %745 = vmatpush1.msra.mxu0 0.0
      %746 = vmatprep.subr.mxu0 0.0
      %747 = vmatpush1.msra.mxu0 0.0
      %748 = vmatprep.subr.mxu0 0.0
      %749 = vmatpush1.msra.mxu0 0.0
      %750 = vmatprep.subr.mxu0 0.0
      %751 = vmatpush1.msra.mxu0 0.0
      %752 = vmatprep.subr.mxu0 0.0
      %753 = vmatpush1.msra.mxu0 0.0
      %754 = vmatprep.subr.mxu0 0.0
      %755 = vmatpush1.msra.mxu0 0.0
      %756 = vmatprep.subr.mxu0 0.0
      %757 = vmatpush1.msra.mxu0 0.0
      %758 = vmatprep.subr.mxu0 0.0
      %759 = vmatpush1.msra.mxu0 0.0
      %760 = vmatprep.subr.mxu0 0.0
      %761 = vmatpush1.msra.mxu0 %v294
      %762 = vmatprep.subr.mxu0 0.0
      %763 = vmatpush1.msra.mxu0 %v293
      %764 = vmatprep.subr.mxu0 0.0
      %765 = vmatpush1.msra.mxu0 %v292
      %766 = vmatprep.subr.mxu0 0.0
      %767 = vmatpush1.msra.mxu0 %v291
      %768 = vmatprep.subr.mxu0 0.0
      %769 = vmatpush2.msra.mxu0 0.0
      %770 = vmatprep.subr.mxu0 0.0
      %771 = vmatpush2.msra.mxu0 0.0
      %772 = vmatprep.subr.mxu0 0.0
      %773 = vmatpush2.msra.mxu0 0.0
      %774 = vmatprep.subr.mxu0 0.0
      %775 = vmatpush2.msra.mxu0 0.0
      %776 = vmatprep.subr.mxu0 0.0
      %777 = vmatpush2.msra.mxu0 0.0
      %778 = vmatprep.subr.mxu0 0.0
      %779 = vmatpush2.msra.mxu0 0.0
      %780 = vmatprep.subr.mxu0 0.0
      %781 = vmatpush2.msra.mxu0 0.0
      %782 = vmatprep.subr.mxu0 0.0
      %783 = vmatpush2.msra.mxu0 0.0
      %784 = vmatprep.subr.mxu0 0.0
      %785 = vmatpush2.msra.mxu0 0.0
      %786 = vmatprep.subr.mxu0 0.0
      %787 = vmatpush2.msra.mxu0 0.0
      %788 = vmatprep.subr.mxu0 0.0
      %789 = vmatpush2.msra.mxu0 0.0
      %790 = vmatprep.subr.mxu0 0.0
      %791 = vmatpush2.msra.mxu0 0.0
      %792 = vmatprep.subr.mxu0 0.0
      %793 = vmatpush2.msra.mxu0 0.0
      %794 = vmatprep.subr.mxu0 0.0
      %795 = vmatpush2.msra.mxu0 0.0
      %796 = vmatprep.subr.mxu0 0.0
      %797 = vmatpush2.msra.mxu0 0.0
      %798 = vmatprep.subr.mxu0 0.0
      %799 = vmatpush2.msra.mxu0 0.0
      %800 = vmatprep.mubr.f32.mxu0 0.0
      %801 = vmatmul.mubr.f32.gmra.mxu0 %v734
      %v802 = vpop.f32.mrf.mxu0
      %v803 = vadd.f32 0.0, %v802
      %v804 = vpop.f32.mrf.mxu0
      %805 = vdwg.mxu0
      %v806 = vadd.f32 %v733, %v803
      %v807 = vxor.u32 %v806, 2147483648
      %v808 = vmul.f32 %v807, 1.442695
      %v809 = vpow.pop %v808
      %v810 = vadd.f32 %v809, 1.0
      %v811 = vrcp.pop %v810
      %v812 = vmul.f32 1.0, %v811
      %v813 = vtanh.pop %v806
      %v814 = vmul.f32 %v812, %v614
      %816 = vrot.lane.b32.xlu0 %v813, 64
      %v817 = vpop.permute.xlu0 %816
      %v819 = vmul.f32 %v812, %v817
      %821 = vrot.lane.b32.xlu0 %v819, 32
      %v822 = vpop.permute.xlu0 %821
      %v824 = vadd.f32 %v814, %v822
      %v825 = vtanh.pop %v824
      %827 = vrot.lane.b32.xlu0 %v825, 64
      %v828 = vpop.permute.xlu0 %827
      %v830 = vmul.f32 %v812, %v828
      %832 = vrot.lane.b32.xlu0 %v830, 32
      %v833 = vpop.permute.xlu0 %832
      %s835 = scalar_lea.vmem %s272, 16
      %836 = vst.msk [vmem:[%s835] sm:$0xff] %vm304, %v833
      %s837 = scalar_lea.vmem %s265, 80
      %v838 = vld [vmem:[%s837 + $0x8] sm:$0xff]
      %v839 = vsel %vm304, %v728, 0
      %841 = vmatprep.subr.mxu0 0.0
      %842 = vmatpush1.msra.mxu0 0.0
      %843 = vmatprep.subr.mxu0 0.0
      %844 = vmatpush1.msra.mxu0 0.0
      %845 = vmatprep.subr.mxu0 0.0
      %846 = vmatpush1.msra.mxu0 0.0
      %847 = vmatprep.subr.mxu0 0.0
      %848 = vmatpush1.msra.mxu0 0.0
      %849 = vmatprep.subr.mxu0 0.0
      %850 = vmatpush1.msra.mxu0 0.0
      %851 = vmatprep.subr.mxu0 0.0
      %852 = vmatpush1.msra.mxu0 0.0
      %853 = vmatprep.subr.mxu0 0.0
      %854 = vmatpush1.msra.mxu0 0.0
      %855 = vmatprep.subr.mxu0 0.0
      %856 = vmatpush1.msra.mxu0 0.0
      %857 = vmatprep.subr.mxu0 0.0
      %858 = vmatpush1.msra.mxu0 0.0
      %859 = vmatprep.subr.mxu0 0.0
      %860 = vmatpush1.msra.mxu0 0.0
      %861 = vmatprep.subr.mxu0 0.0
      %862 = vmatpush1.msra.mxu0 0.0
      %863 = vmatprep.subr.mxu0 0.0
      %864 = vmatpush1.msra.mxu0 0.0
      %865 = vmatprep.subr.mxu0 0.0
      %866 = vmatpush1.msra.mxu0 %v298
      %867 = vmatprep.subr.mxu0 0.0
      %868 = vmatpush1.msra.mxu0 %v297
      %869 = vmatprep.subr.mxu0 0.0
      %870 = vmatpush1.msra.mxu0 %v296
      %871 = vmatprep.subr.mxu0 0.0
      %872 = vmatpush1.msra.mxu0 %v295
      %873 = vmatprep.subr.mxu0 0.0
      %874 = vmatpush2.msra.mxu0 0.0
      %875 = vmatprep.subr.mxu0 0.0
      %876 = vmatpush2.msra.mxu0 0.0
      %877 = vmatprep.subr.mxu0 0.0
      %878 = vmatpush2.msra.mxu0 0.0
      %879 = vmatprep.subr.mxu0 0.0
      %880 = vmatpush2.msra.mxu0 0.0
      %881 = vmatprep.subr.mxu0 0.0
      %882 = vmatpush2.msra.mxu0 0.0
      %883 = vmatprep.subr.mxu0 0.0
      %884 = vmatpush2.msra.mxu0 0.0
      %885 = vmatprep.subr.mxu0 0.0
      %886 = vmatpush2.msra.mxu0 0.0
      %887 = vmatprep.subr.mxu0 0.0
      %888 = vmatpush2.msra.mxu0 0.0
      %889 = vmatprep.subr.mxu0 0.0
      %890 = vmatpush2.msra.mxu0 0.0
      %891 = vmatprep.subr.mxu0 0.0
      %892 = vmatpush2.msra.mxu0 0.0
      %893 = vmatprep.subr.mxu0 0.0
      %894 = vmatpush2.msra.mxu0 0.0
      %895 = vmatprep.subr.mxu0 0.0
      %896 = vmatpush2.msra.mxu0 0.0
      %897 = vmatprep.subr.mxu0 0.0
      %898 = vmatpush2.msra.mxu0 0.0
      %899 = vmatprep.subr.mxu0 0.0
      %900 = vmatpush2.msra.mxu0 0.0
      %901 = vmatprep.subr.mxu0 0.0
      %902 = vmatpush2.msra.mxu0 0.0
      %903 = vmatprep.subr.mxu0 0.0
      %904 = vmatpush2.msra.mxu0 0.0
      %905 = vmatprep.mubr.f32.mxu0 0.0
      %906 = vmatmul.mubr.f32.gmra.mxu0 %v839
      %v907 = vpop.f32.mrf.mxu0
      %v908 = vadd.f32 0.0, %v907
      %v909 = vpop.f32.mrf.mxu0
      %910 = vdwg.mxu0
      %v911 = vadd.f32 %v838, %v908
      %v912 = vxor.u32 %v911, 2147483648
      %v913 = vmul.f32 %v912, 1.442695
      %v914 = vpow.pop %v913
      %v915 = vadd.f32 %v914, 1.0
      %v916 = vrcp.pop %v915
      %v917 = vmul.f32 1.0, %v916
      %v918 = vtanh.pop %v911
      %v919 = vmul.f32 %v917, %v719
      %921 = vrot.lane.b32.xlu0 %v918, 64
      %v922 = vpop.permute.xlu0 %921
      %v924 = vmul.f32 %v917, %v922
      %926 = vrot.lane.b32.xlu0 %v924, 32
      %v927 = vpop.permute.xlu0 %926
      %v929 = vadd.f32 %v919, %v927
      %v930 = vtanh.pop %v929
      %932 = vrot.lane.b32.xlu0 %v930, 64
      %v933 = vpop.permute.xlu0 %932
      %v935 = vmul.f32 %v917, %v933
      %937 = vrot.lane.b32.xlu0 %v935, 32
      %v938 = vpop.permute.xlu0 %937
      %s940 = scalar_lea.vmem %s279, 40
      %941 = vst.msk [vmem:[%s940] sm:$0xff] %vm304, %v938
      %s942 = scalar_lea.vmem %s257, 48
      %v943 = vld [vmem:[%s942] sm:$0xff]
      %v944 = vsel %vm304, %v833, 0
      %946 = vmatprep.subr.mxu0 0.0
      %947 = vmatpush1.msra.mxu0 0.0
      %948 = vmatprep.subr.mxu0 0.0
      %949 = vmatpush1.msra.mxu0 0.0
      %950 = vmatprep.subr.mxu0 0.0
      %951 = vmatpush1.msra.mxu0 0.0
      %952 = vmatprep.subr.mxu0 0.0
      %953 = vmatpush1.msra.mxu0 0.0
      %954 = vmatprep.subr.mxu0 0.0
      %955 = vmatpush1.msra.mxu0 0.0
      %956 = vmatprep.subr.mxu0 0.0
      %957 = vmatpush1.msra.mxu0 0.0
      %958 = vmatprep.subr.mxu0 0.0
      %959 = vmatpush1.msra.mxu0 0.0
      %960 = vmatprep.subr.mxu0 0.0
      %961 = vmatpush1.msra.mxu0 0.0
      %962 = vmatprep.subr.mxu0 0.0
      %963 = vmatpush1.msra.mxu0 0.0
      %964 = vmatprep.subr.mxu0 0.0
      %965 = vmatpush1.msra.mxu0 0.0
      %966 = vmatprep.subr.mxu0 0.0
      %967 = vmatpush1.msra.mxu0 0.0
      %968 = vmatprep.subr.mxu0 0.0
      %969 = vmatpush1.msra.mxu0 0.0
      %970 = vmatprep.subr.mxu0 0.0
      %971 = vmatpush1.msra.mxu0 %v294
      %972 = vmatprep.subr.mxu0 0.0
      %973 = vmatpush1.msra.mxu0 %v293
      %974 = vmatprep.subr.mxu0 0.0
      %975 = vmatpush1.msra.mxu0 %v292
      %976 = vmatprep.subr.mxu0 0.0
      %977 = vmatpush1.msra.mxu0 %v291
      %978 = vmatprep.subr.mxu0 0.0
      %979 = vmatpush2.msra.mxu0 0.0
      %980 = vmatprep.subr.mxu0 0.0
      %981 = vmatpush2.msra.mxu0 0.0
      %982 = vmatprep.subr.mxu0 0.0
      %983 = vmatpush2.msra.mxu0 0.0
      %984 = vmatprep.subr.mxu0 0.0
      %985 = vmatpush2.msra.mxu0 0.0
      %986 = vmatprep.subr.mxu0 0.0
      %987 = vmatpush2.msra.mxu0 0.0
      %988 = vmatprep.subr.mxu0 0.0
      %989 = vmatpush2.msra.mxu0 0.0
      %990 = vmatprep.subr.mxu0 0.0
      %991 = vmatpush2.msra.mxu0 0.0
      %992 = vmatprep.subr.mxu0 0.0
      %993 = vmatpush2.msra.mxu0 0.0
      %994 = vmatprep.subr.mxu0 0.0
      %995 = vmatpush2.msra.mxu0 0.0
      %996 = vmatprep.subr.mxu0 0.0
      %997 = vmatpush2.msra.mxu0 0.0
      %998 = vmatprep.subr.mxu0 0.0
      %999 = vmatpush2.msra.mxu0 0.0
      %1000 = vmatprep.subr.mxu0 0.0
      %1001 = vmatpush2.msra.mxu0 0.0
      %1002 = vmatprep.subr.mxu0 0.0
      %1003 = vmatpush2.msra.mxu0 0.0
      %1004 = vmatprep.subr.mxu0 0.0
      %1005 = vmatpush2.msra.mxu0 0.0
      %1006 = vmatprep.subr.mxu0 0.0
      %1007 = vmatpush2.msra.mxu0 0.0
      %1008 = vmatprep.subr.mxu0 0.0
      %1009 = vmatpush2.msra.mxu0 0.0
      %1010 = vmatprep.mubr.f32.mxu0 0.0
      %1011 = vmatmul.mubr.f32.gmra.mxu0 %v944
      %v1012 = vpop.f32.mrf.mxu0
      %v1013 = vadd.f32 0.0, %v1012
      %v1014 = vpop.f32.mrf.mxu0
      %1015 = vdwg.mxu0
      %v1016 = vadd.f32 %v943, %v1013
      %v1017 = vxor.u32 %v1016, 2147483648
      %v1018 = vmul.f32 %v1017, 1.442695
      %v1019 = vpow.pop %v1018
      %v1020 = vadd.f32 %v1019, 1.0
      %v1021 = vrcp.pop %v1020
      %v1022 = vmul.f32 1.0, %v1021
      %v1023 = vtanh.pop %v1016
      %v1024 = vmul.f32 %v1022, %v824
      %1026 = vrot.lane.b32.xlu0 %v1023, 64
      %v1027 = vpop.permute.xlu0 %1026
      %v1029 = vmul.f32 %v1022, %v1027
      %1031 = vrot.lane.b32.xlu0 %v1029, 32
      %v1032 = vpop.permute.xlu0 %1031
      %v1034 = vadd.f32 %v1024, %v1032
      %v1035 = vtanh.pop %v1034
      %1037 = vrot.lane.b32.xlu0 %v1035, 64
      %v1038 = vpop.permute.xlu0 %1037
      %v1040 = vmul.f32 %v1022, %v1038
      %1042 = vrot.lane.b32.xlu0 %v1040, 32
      %v1043 = vpop.permute.xlu0 %1042
      %s1045 = scalar_lea.vmem %s272, 24
      %1046 = vst.msk [vmem:[%s1045] sm:$0xff] %vm304, %v1043
      %s1047 = scalar_lea.vmem %s265, 64
      %v1048 = vld [vmem:[%s1047 + $0x8] sm:$0xff]
      %v1049 = vsel %vm304, %v938, 0
      %1051 = vmatprep.subr.mxu0 0.0
      %1052 = vmatpush1.msra.mxu0 0.0
      %1053 = vmatprep.subr.mxu0 0.0
      %1054 = vmatpush1.msra.mxu0 0.0
      %1055 = vmatprep.subr.mxu0 0.0
      %1056 = vmatpush1.msra.mxu0 0.0
      %1057 = vmatprep.subr.mxu0 0.0
      %1058 = vmatpush1.msra.mxu0 0.0
      %1059 = vmatprep.subr.mxu0 0.0
      %1060 = vmatpush1.msra.mxu0 0.0
      %1061 = vmatprep.subr.mxu0 0.0
      %1062 = vmatpush1.msra.mxu0 0.0
      %1063 = vmatprep.subr.mxu0 0.0
      %1064 = vmatpush1.msra.mxu0 0.0
      %1065 = vmatprep.subr.mxu0 0.0
      %1066 = vmatpush1.msra.mxu0 0.0
      %1067 = vmatprep.subr.mxu0 0.0
      %1068 = vmatpush1.msra.mxu0 0.0
      %1069 = vmatprep.subr.mxu0 0.0
      %1070 = vmatpush1.msra.mxu0 0.0
      %1071 = vmatprep.subr.mxu0 0.0
      %1072 = vmatpush1.msra.mxu0 0.0
      %1073 = vmatprep.subr.mxu0 0.0
      %1074 = vmatpush1.msra.mxu0 0.0
      %1075 = vmatprep.subr.mxu0 0.0
      %1076 = vmatpush1.msra.mxu0 %v298
      %1077 = vmatprep.subr.mxu0 0.0
      %1078 = vmatpush1.msra.mxu0 %v297
      %1079 = vmatprep.subr.mxu0 0.0
      %1080 = vmatpush1.msra.mxu0 %v296
      %1081 = vmatprep.subr.mxu0 0.0
      %1082 = vmatpush1.msra.mxu0 %v295
      %1083 = vmatprep.subr.mxu0 0.0
      %1084 = vmatpush2.msra.mxu0 0.0
      %1085 = vmatprep.subr.mxu0 0.0
      %1086 = vmatpush2.msra.mxu0 0.0
      %1087 = vmatprep.subr.mxu0 0.0
      %1088 = vmatpush2.msra.mxu0 0.0
      %1089 = vmatprep.subr.mxu0 0.0
      %1090 = vmatpush2.msra.mxu0 0.0
      %1091 = vmatprep.subr.mxu0 0.0
      %1092 = vmatpush2.msra.mxu0 0.0
      %1093 = vmatprep.subr.mxu0 0.0
      %1094 = vmatpush2.msra.mxu0 0.0
      %1095 = vmatprep.subr.mxu0 0.0
      %1096 = vmatpush2.msra.mxu0 0.0
      %1097 = vmatprep.subr.mxu0 0.0
      %1098 = vmatpush2.msra.mxu0 0.0
      %1099 = vmatprep.subr.mxu0 0.0
      %1100 = vmatpush2.msra.mxu0 0.0
      %1101 = vmatprep.subr.mxu0 0.0
      %1102 = vmatpush2.msra.mxu0 0.0
      %1103 = vmatprep.subr.mxu0 0.0
      %1104 = vmatpush2.msra.mxu0 0.0
      %1105 = vmatprep.subr.mxu0 0.0
      %1106 = vmatpush2.msra.mxu0 0.0
      %1107 = vmatprep.subr.mxu0 0.0
      %1108 = vmatpush2.msra.mxu0 0.0
      %1109 = vmatprep.subr.mxu0 0.0
      %1110 = vmatpush2.msra.mxu0 0.0
      %1111 = vmatprep.subr.mxu0 0.0
      %1112 = vmatpush2.msra.mxu0 0.0
      %1113 = vmatprep.subr.mxu0 0.0
      %1114 = vmatpush2.msra.mxu0 0.0
      %1115 = vmatprep.mubr.f32.mxu0 0.0
      %1116 = vmatmul.mubr.f32.gmra.mxu0 %v1049
      %v1117 = vpop.f32.mrf.mxu0
      %v1118 = vadd.f32 0.0, %v1117
      %v1119 = vpop.f32.mrf.mxu0
      %1120 = vdwg.mxu0
      %v1121 = vadd.f32 %v1048, %v1118
      %v1122 = vxor.u32 %v1121, 2147483648
      %v1123 = vmul.f32 %v1122, 1.442695
      %v1124 = vpow.pop %v1123
      %v1125 = vadd.f32 %v1124, 1.0
      %v1126 = vrcp.pop %v1125
      %v1127 = vmul.f32 1.0, %v1126
      %v1128 = vtanh.pop %v1121
      %v1129 = vmul.f32 %v1127, %v929
      %1131 = vrot.lane.b32.xlu0 %v1128, 64
      %v1132 = vpop.permute.xlu0 %1131
      %v1134 = vmul.f32 %v1127, %v1132
      %1136 = vrot.lane.b32.xlu0 %v1134, 32
      %v1137 = vpop.permute.xlu0 %1136
      %v1139 = vadd.f32 %v1129, %v1137
      %v1140 = vtanh.pop %v1139
      %1142 = vrot.lane.b32.xlu0 %v1140, 64
      %v1143 = vpop.permute.xlu0 %1142
      %v1145 = vmul.f32 %v1127, %v1143
      %1147 = vrot.lane.b32.xlu0 %v1145, 32
      %v1148 = vpop.permute.xlu0 %1147
      %s1150 = scalar_lea.vmem %s279, 32
      %1151 = vst.msk [vmem:[%s1150] sm:$0xff] %vm304, %v1148
      %s1152 = scalar_lea.vmem %s257, 64
      %v1153 = vld [vmem:[%s1152] sm:$0xff]
      %v1154 = vsel %vm304, %v1043, 0
      %1156 = vmatprep.subr.mxu0 0.0
      %1157 = vmatpush1.msra.mxu0 0.0
      %1158 = vmatprep.subr.mxu0 0.0
      %1159 = vmatpush1.msra.mxu0 0.0
      %1160 = vmatprep.subr.mxu0 0.0
      %1161 = vmatpush1.msra.mxu0 0.0
      %1162 = vmatprep.subr.mxu0 0.0
      %1163 = vmatpush1.msra.mxu0 0.0
      %1164 = vmatprep.subr.mxu0 0.0
      %1165 = vmatpush1.msra.mxu0 0.0
      %1166 = vmatprep.subr.mxu0 0.0
      %1167 = vmatpush1.msra.mxu0 0.0
      %1168 = vmatprep.subr.mxu0 0.0
      %1169 = vmatpush1.msra.mxu0 0.0
      %1170 = vmatprep.subr.mxu0 0.0
      %1171 = vmatpush1.msra.mxu0 0.0
      %1172 = vmatprep.subr.mxu0 0.0
      %1173 = vmatpush1.msra.mxu0 0.0
      %1174 = vmatprep.subr.mxu0 0.0
      %1175 = vmatpush1.msra.mxu0 0.0
      %1176 = vmatprep.subr.mxu0 0.0
      %1177 = vmatpush1.msra.mxu0 0.0
      %1178 = vmatprep.subr.mxu0 0.0
      %1179 = vmatpush1.msra.mxu0 0.0
      %1180 = vmatprep.subr.mxu0 0.0
      %1181 = vmatpush1.msra.mxu0 %v294
      %1182 = vmatprep.subr.mxu0 0.0
      %1183 = vmatpush1.msra.mxu0 %v293
      %1184 = vmatprep.subr.mxu0 0.0
      %1185 = vmatpush1.msra.mxu0 %v292
      %1186 = vmatprep.subr.mxu0 0.0
      %1187 = vmatpush1.msra.mxu0 %v291
      %1188 = vmatprep.subr.mxu0 0.0
      %1189 = vmatpush2.msra.mxu0 0.0
      %1190 = vmatprep.subr.mxu0 0.0
      %1191 = vmatpush2.msra.mxu0 0.0
      %1192 = vmatprep.subr.mxu0 0.0
      %1193 = vmatpush2.msra.mxu0 0.0
      %1194 = vmatprep.subr.mxu0 0.0
      %1195 = vmatpush2.msra.mxu0 0.0
      %1196 = vmatprep.subr.mxu0 0.0
      %1197 = vmatpush2.msra.mxu0 0.0
      %1198 = vmatprep.subr.mxu0 0.0
      %1199 = vmatpush2.msra.mxu0 0.0
      %1200 = vmatprep.subr.mxu0 0.0
      %1201 = vmatpush2.msra.mxu0 0.0
      %1202 = vmatprep.subr.mxu0 0.0
      %1203 = vmatpush2.msra.mxu0 0.0
      %1204 = vmatprep.subr.mxu0 0.0
      %1205 = vmatpush2.msra.mxu0 0.0
      %1206 = vmatprep.subr.mxu0 0.0
      %1207 = vmatpush2.msra.mxu0 0.0
      %1208 = vmatprep.subr.mxu0 0.0
      %1209 = vmatpush2.msra.mxu0 0.0
      %1210 = vmatprep.subr.mxu0 0.0
      %1211 = vmatpush2.msra.mxu0 0.0
      %1212 = vmatprep.subr.mxu0 0.0
      %1213 = vmatpush2.msra.mxu0 0.0
      %1214 = vmatprep.subr.mxu0 0.0
      %1215 = vmatpush2.msra.mxu0 0.0
      %1216 = vmatprep.subr.mxu0 0.0
      %1217 = vmatpush2.msra.mxu0 0.0
      %1218 = vmatprep.subr.mxu0 0.0
      %1219 = vmatpush2.msra.mxu0 0.0
      %1220 = vmatprep.mubr.f32.mxu0 0.0
      %1221 = vmatmul.mubr.f32.gmra.mxu0 %v1154
      %v1222 = vpop.f32.mrf.mxu0
      %v1223 = vadd.f32 0.0, %v1222
      %v1224 = vpop.f32.mrf.mxu0
      %1225 = vdwg.mxu0
      %v1226 = vadd.f32 %v1153, %v1223
      %v1227 = vxor.u32 %v1226, 2147483648
      %v1228 = vmul.f32 %v1227, 1.442695
      %v1229 = vpow.pop %v1228
      %v1230 = vadd.f32 %v1229, 1.0
      %v1231 = vrcp.pop %v1230
      %v1232 = vmul.f32 1.0, %v1231
      %v1233 = vtanh.pop %v1226
      %v1234 = vmul.f32 %v1232, %v1034
      %1236 = vrot.lane.b32.xlu0 %v1233, 64
      %v1237 = vpop.permute.xlu0 %1236
      %v1239 = vmul.f32 %v1232, %v1237
      %1241 = vrot.lane.b32.xlu0 %v1239, 32
      %v1242 = vpop.permute.xlu0 %1241
      %v1244 = vadd.f32 %v1234, %v1242
      %v1245 = vtanh.pop %v1244
      %1247 = vrot.lane.b32.xlu0 %v1245, 64
      %v1248 = vpop.permute.xlu0 %1247
      %v1250 = vmul.f32 %v1232, %v1248
      %1252 = vrot.lane.b32.xlu0 %v1250, 32
      %v1253 = vpop.permute.xlu0 %1252
      %s1255 = scalar_lea.vmem %s272, 32
      %1256 = vst.msk [vmem:[%s1255] sm:$0xff] %vm304, %v1253
      %s1257 = scalar_lea.vmem %s265, 48
      %v1258 = vld [vmem:[%s1257 + $0x8] sm:$0xff]
      %v1259 = vsel %vm304, %v1148, 0
      %1261 = vmatprep.subr.mxu0 0.0
      %1262 = vmatpush1.msra.mxu0 0.0
      %1263 = vmatprep.subr.mxu0 0.0
      %1264 = vmatpush1.msra.mxu0 0.0
      %1265 = vmatprep.subr.mxu0 0.0
      %1266 = vmatpush1.msra.mxu0 0.0
      %1267 = vmatprep.subr.mxu0 0.0
      %1268 = vmatpush1.msra.mxu0 0.0
      %1269 = vmatprep.subr.mxu0 0.0
      %1270 = vmatpush1.msra.mxu0 0.0
      %1271 = vmatprep.subr.mxu0 0.0
      %1272 = vmatpush1.msra.mxu0 0.0
      %1273 = vmatprep.subr.mxu0 0.0
      %1274 = vmatpush1.msra.mxu0 0.0
      %1275 = vmatprep.subr.mxu0 0.0
      %1276 = vmatpush1.msra.mxu0 0.0
      %1277 = vmatprep.subr.mxu0 0.0
      %1278 = vmatpush1.msra.mxu0 0.0
      %1279 = vmatprep.subr.mxu0 0.0
      %1280 = vmatpush1.msra.mxu0 0.0
      %1281 = vmatprep.subr.mxu0 0.0
      %1282 = vmatpush1.msra.mxu0 0.0
      %1283 = vmatprep.subr.mxu0 0.0
      %1284 = vmatpush1.msra.mxu0 0.0
      %1285 = vmatprep.subr.mxu0 0.0
      %1286 = vmatpush1.msra.mxu0 %v298
      %1287 = vmatprep.subr.mxu0 0.0
      %1288 = vmatpush1.msra.mxu0 %v297
      %1289 = vmatprep.subr.mxu0 0.0
      %1290 = vmatpush1.msra.mxu0 %v296
      %1291 = vmatprep.subr.mxu0 0.0
      %1292 = vmatpush1.msra.mxu0 %v295
      %1293 = vmatprep.subr.mxu0 0.0
      %1294 = vmatpush2.msra.mxu0 0.0
      %1295 = vmatprep.subr.mxu0 0.0
      %1296 = vmatpush2.msra.mxu0 0.0
      %1297 = vmatprep.subr.mxu0 0.0
      %1298 = vmatpush2.msra.mxu0 0.0
      %1299 = vmatprep.subr.mxu0 0.0
      %1300 = vmatpush2.msra.mxu0 0.0
      %1301 = vmatprep.subr.mxu0 0.0
      %1302 = vmatpush2.msra.mxu0 0.0
      %1303 = vmatprep.subr.mxu0 0.0
      %1304 = vmatpush2.msra.mxu0 0.0
      %1305 = vmatprep.subr.mxu0 0.0
      %1306 = vmatpush2.msra.mxu0 0.0
      %1307 = vmatprep.subr.mxu0 0.0
      %1308 = vmatpush2.msra.mxu0 0.0
      %1309 = vmatprep.subr.mxu0 0.0
      %1310 = vmatpush2.msra.mxu0 0.0
      %1311 = vmatprep.subr.mxu0 0.0
      %1312 = vmatpush2.msra.mxu0 0.0
      %1313 = vmatprep.subr.mxu0 0.0
      %1314 = vmatpush2.msra.mxu0 0.0
      %1315 = vmatprep.subr.mxu0 0.0
      %1316 = vmatpush2.msra.mxu0 0.0
      %1317 = vmatprep.subr.mxu0 0.0
      %1318 = vmatpush2.msra.mxu0 0.0
      %1319 = vmatprep.subr.mxu0 0.0
      %1320 = vmatpush2.msra.mxu0 0.0
      %1321 = vmatprep.subr.mxu0 0.0
      %1322 = vmatpush2.msra.mxu0 0.0
      %1323 = vmatprep.subr.mxu0 0.0
      %1324 = vmatpush2.msra.mxu0 0.0
      %1325 = vmatprep.mubr.f32.mxu0 0.0
      %1326 = vmatmul.mubr.f32.gmra.mxu0 %v1259
      %v1327 = vpop.f32.mrf.mxu0
      %v1328 = vadd.f32 0.0, %v1327
      %v1329 = vpop.f32.mrf.mxu0
      %1330 = vdwg.mxu0
      %v1331 = vadd.f32 %v1258, %v1328
      %v1332 = vxor.u32 %v1331, 2147483648
      %v1333 = vmul.f32 %v1332, 1.442695
      %v1334 = vpow.pop %v1333
      %v1335 = vadd.f32 %v1334, 1.0
      %v1336 = vrcp.pop %v1335
      %v1337 = vmul.f32 1.0, %v1336
      %v1338 = vtanh.pop %v1331
      %v1339 = vmul.f32 %v1337, %v1139
      %1341 = vrot.lane.b32.xlu0 %v1338, 64
      %v1342 = vpop.permute.xlu0 %1341
      %v1344 = vmul.f32 %v1337, %v1342
      %1346 = vrot.lane.b32.xlu0 %v1344, 32
      %v1347 = vpop.permute.xlu0 %1346
      %v1349 = vadd.f32 %v1339, %v1347
      %v1350 = vtanh.pop %v1349
      %1352 = vrot.lane.b32.xlu0 %v1350, 64
      %v1353 = vpop.permute.xlu0 %1352
      %v1355 = vmul.f32 %v1337, %v1353
      %1357 = vrot.lane.b32.xlu0 %v1355, 32
      %v1358 = vpop.permute.xlu0 %1357
      %s1360 = scalar_lea.vmem %s279, 24
      %1361 = vst.msk [vmem:[%s1360] sm:$0xff] %vm304, %v1358
      %s1362 = scalar_lea.vmem %s257, 80
      %v1363 = vld [vmem:[%s1362] sm:$0xff]
      %v1364 = vsel %vm304, %v1253, 0
      %1366 = vmatprep.subr.mxu0 0.0
      %1367 = vmatpush1.msra.mxu0 0.0
      %1368 = vmatprep.subr.mxu0 0.0
      %1369 = vmatpush1.msra.mxu0 0.0
      %1370 = vmatprep.subr.mxu0 0.0
      %1371 = vmatpush1.msra.mxu0 0.0
      %1372 = vmatprep.subr.mxu0 0.0
      %1373 = vmatpush1.msra.mxu0 0.0
      %1374 = vmatprep.subr.mxu0 0.0
      %1375 = vmatpush1.msra.mxu0 0.0
      %1376 = vmatprep.subr.mxu0 0.0
      %1377 = vmatpush1.msra.mxu0 0.0
      %1378 = vmatprep.subr.mxu0 0.0
      %1379 = vmatpush1.msra.mxu0 0.0
      %1380 = vmatprep.subr.mxu0 0.0
      %1381 = vmatpush1.msra.mxu0 0.0
      %1382 = vmatprep.subr.mxu0 0.0
      %1383 = vmatpush1.msra.mxu0 0.0
      %1384 = vmatprep.subr.mxu0 0.0
      %1385 = vmatpush1.msra.mxu0 0.0
      %1386 = vmatprep.subr.mxu0 0.0
      %1387 = vmatpush1.msra.mxu0 0.0
      %1388 = vmatprep.subr.mxu0 0.0
      %1389 = vmatpush1.msra.mxu0 0.0
      %1390 = vmatprep.subr.mxu0 0.0
      %1391 = vmatpush1.msra.mxu0 %v294
      %1392 = vmatprep.subr.mxu0 0.0
      %1393 = vmatpush1.msra.mxu0 %v293
      %1394 = vmatprep.subr.mxu0 0.0
      %1395 = vmatpush1.msra.mxu0 %v292
      %1396 = vmatprep.subr.mxu0 0.0
      %1397 = vmatpush1.msra.mxu0 %v291
      %1398 = vmatprep.subr.mxu0 0.0
      %1399 = vmatpush2.msra.mxu0 0.0
      %1400 = vmatprep.subr.mxu0 0.0
      %1401 = vmatpush2.msra.mxu0 0.0
      %1402 = vmatprep.subr.mxu0 0.0
      %1403 = vmatpush2.msra.mxu0 0.0
      %1404 = vmatprep.subr.mxu0 0.0
      %1405 = vmatpush2.msra.mxu0 0.0
      %1406 = vmatprep.subr.mxu0 0.0
      %1407 = vmatpush2.msra.mxu0 0.0
      %1408 = vmatprep.subr.mxu0 0.0
      %1409 = vmatpush2.msra.mxu0 0.0
      %1410 = vmatprep.subr.mxu0 0.0
      %1411 = vmatpush2.msra.mxu0 0.0
      %1412 = vmatprep.subr.mxu0 0.0
      %1413 = vmatpush2.msra.mxu0 0.0
      %1414 = vmatprep.subr.mxu0 0.0
      %1415 = vmatpush2.msra.mxu0 0.0
      %1416 = vmatprep.subr.mxu0 0.0
      %1417 = vmatpush2.msra.mxu0 0.0
      %1418 = vmatprep.subr.mxu0 0.0
      %1419 = vmatpush2.msra.mxu0 0.0
      %1420 = vmatprep.subr.mxu0 0.0
      %1421 = vmatpush2.msra.mxu0 0.0
      %1422 = vmatprep.subr.mxu0 0.0
      %1423 = vmatpush2.msra.mxu0 0.0
      %1424 = vmatprep.subr.mxu0 0.0
      %1425 = vmatpush2.msra.mxu0 0.0
      %1426 = vmatprep.subr.mxu0 0.0
      %1427 = vmatpush2.msra.mxu0 0.0
      %1428 = vmatprep.subr.mxu0 0.0
      %1429 = vmatpush2.msra.mxu0 0.0
      %1430 = vmatprep.mubr.f32.mxu0 0.0
      %1431 = vmatmul.mubr.f32.gmra.mxu0 %v1364
      %v1432 = vpop.f32.mrf.mxu0
      %v1433 = vadd.f32 0.0, %v1432
      %v1434 = vpop.f32.mrf.mxu0
      %1435 = vdwg.mxu0
      %v1436 = vadd.f32 %v1363, %v1433
      %v1437 = vxor.u32 %v1436, 2147483648
      %v1438 = vmul.f32 %v1437, 1.442695
      %v1439 = vpow.pop %v1438
      %v1440 = vadd.f32 %v1439, 1.0
      %v1441 = vrcp.pop %v1440
      %v1442 = vmul.f32 1.0, %v1441
      %v1443 = vtanh.pop %v1436
      %v1444 = vmul.f32 %v1442, %v1244
      %1446 = vrot.lane.b32.xlu0 %v1443, 64
      %v1447 = vpop.permute.xlu0 %1446
      %v1449 = vmul.f32 %v1442, %v1447
      %1451 = vrot.lane.b32.xlu0 %v1449, 32
      %v1452 = vpop.permute.xlu0 %1451
      %v1454 = vadd.f32 %v1444, %v1452
      %v1455 = vtanh.pop %v1454
      %1457 = vrot.lane.b32.xlu0 %v1455, 64
      %v1458 = vpop.permute.xlu0 %1457
      %v1460 = vmul.f32 %v1442, %v1458
      %1462 = vrot.lane.b32.xlu0 %v1460, 32
      %v1463 = vpop.permute.xlu0 %1462
      %s1465 = scalar_lea.vmem %s272, 40
      %1466 = vst.msk [vmem:[%s1465] sm:$0xff] %vm304, %v1463
      %s1467 = scalar_lea.vmem %s265, 32
      %v1468 = vld [vmem:[%s1467 + $0x8] sm:$0xff]
      %v1469 = vsel %vm304, %v1358, 0
      %1471 = vmatprep.subr.mxu0 0.0
      %1472 = vmatpush1.msra.mxu0 0.0
      %1473 = vmatprep.subr.mxu0 0.0
      %1474 = vmatpush1.msra.mxu0 0.0
      %1475 = vmatprep.subr.mxu0 0.0
      %1476 = vmatpush1.msra.mxu0 0.0
      %1477 = vmatprep.subr.mxu0 0.0
      %1478 = vmatpush1.msra.mxu0 0.0
      %1479 = vmatprep.subr.mxu0 0.0
      %1480 = vmatpush1.msra.mxu0 0.0
      %1481 = vmatprep.subr.mxu0 0.0
      %1482 = vmatpush1.msra.mxu0 0.0
      %1483 = vmatprep.subr.mxu0 0.0
      %1484 = vmatpush1.msra.mxu0 0.0
      %1485 = vmatprep.subr.mxu0 0.0
      %1486 = vmatpush1.msra.mxu0 0.0
      %1487 = vmatprep.subr.mxu0 0.0
      %1488 = vmatpush1.msra.mxu0 0.0
      %1489 = vmatprep.subr.mxu0 0.0
      %1490 = vmatpush1.msra.mxu0 0.0
      %1491 = vmatprep.subr.mxu0 0.0
      %1492 = vmatpush1.msra.mxu0 0.0
      %1493 = vmatprep.subr.mxu0 0.0
      %1494 = vmatpush1.msra.mxu0 0.0
      %1495 = vmatprep.subr.mxu0 0.0
      %1496 = vmatpush1.msra.mxu0 %v298
      %1497 = vmatprep.subr.mxu0 0.0
      %1498 = vmatpush1.msra.mxu0 %v297
      %1499 = vmatprep.subr.mxu0 0.0
      %1500 = vmatpush1.msra.mxu0 %v296
      %1501 = vmatprep.subr.mxu0 0.0
      %1502 = vmatpush1.msra.mxu0 %v295
      %1503 = vmatprep.subr.mxu0 0.0
      %1504 = vmatpush2.msra.mxu0 0.0
      %1505 = vmatprep.subr.mxu0 0.0
      %1506 = vmatpush2.msra.mxu0 0.0
      %1507 = vmatprep.subr.mxu0 0.0
      %1508 = vmatpush2.msra.mxu0 0.0
      %1509 = vmatprep.subr.mxu0 0.0
      %1510 = vmatpush2.msra.mxu0 0.0
      %1511 = vmatprep.subr.mxu0 0.0
      %1512 = vmatpush2.msra.mxu0 0.0
      %1513 = vmatprep.subr.mxu0 0.0
      %1514 = vmatpush2.msra.mxu0 0.0
      %1515 = vmatprep.subr.mxu0 0.0
      %1516 = vmatpush2.msra.mxu0 0.0
      %1517 = vmatprep.subr.mxu0 0.0
      %1518 = vmatpush2.msra.mxu0 0.0
      %1519 = vmatprep.subr.mxu0 0.0
      %1520 = vmatpush2.msra.mxu0 0.0
      %1521 = vmatprep.subr.mxu0 0.0
      %1522 = vmatpush2.msra.mxu0 0.0
      %1523 = vmatprep.subr.mxu0 0.0
      %1524 = vmatpush2.msra.mxu0 0.0
      %1525 = vmatprep.subr.mxu0 0.0
      %1526 = vmatpush2.msra.mxu0 0.0
      %1527 = vmatprep.subr.mxu0 0.0
      %1528 = vmatpush2.msra.mxu0 0.0
      %1529 = vmatprep.subr.mxu0 0.0
      %1530 = vmatpush2.msra.mxu0 0.0
      %1531 = vmatprep.subr.mxu0 0.0
      %1532 = vmatpush2.msra.mxu0 0.0
      %1533 = vmatprep.subr.mxu0 0.0
      %1534 = vmatpush2.msra.mxu0 0.0
      %1535 = vmatprep.mubr.f32.mxu0 0.0
      %1536 = vmatmul.mubr.f32.gmra.mxu0 %v1469
      %v1537 = vpop.f32.mrf.mxu0
      %v1538 = vadd.f32 0.0, %v1537
      %v1539 = vpop.f32.mrf.mxu0
      %1540 = vdwg.mxu0
      %v1541 = vadd.f32 %v1468, %v1538
      %v1542 = vxor.u32 %v1541, 2147483648
      %v1543 = vmul.f32 %v1542, 1.442695
      %v1544 = vpow.pop %v1543
      %v1545 = vadd.f32 %v1544, 1.0
      %v1546 = vrcp.pop %v1545
      %v1547 = vmul.f32 1.0, %v1546
      %v1548 = vtanh.pop %v1541
      %v1549 = vmul.f32 %v1547, %v1349
      %1551 = vrot.lane.b32.xlu0 %v1548, 64
      %v1552 = vpop.permute.xlu0 %1551
      %v1554 = vmul.f32 %v1547, %v1552
      %1556 = vrot.lane.b32.xlu0 %v1554, 32
      %v1557 = vpop.permute.xlu0 %1556
      %v1559 = vadd.f32 %v1549, %v1557
      %v1560 = vtanh.pop %v1559
      %1562 = vrot.lane.b32.xlu0 %v1560, 64
      %v1563 = vpop.permute.xlu0 %1562
      %v1565 = vmul.f32 %v1547, %v1563
      %1567 = vrot.lane.b32.xlu0 %v1565, 32
      %v1568 = vpop.permute.xlu0 %1567
      %s1570 = scalar_lea.vmem %s279, 16
      %1571 = vst.msk [vmem:[%s1570] sm:$0xff] %vm304, %v1568
      %s1572 = scalar_lea.vmem %s257, 96
      %v1573 = vld [vmem:[%s1572] sm:$0xff]
      %v1574 = vsel %vm304, %v1463, 0
      %1576 = vmatprep.subr.mxu0 0.0
      %1577 = vmatpush1.msra.mxu0 0.0
      %1578 = vmatprep.subr.mxu0 0.0
      %1579 = vmatpush1.msra.mxu0 0.0
      %1580 = vmatprep.subr.mxu0 0.0
      %1581 = vmatpush1.msra.mxu0 0.0
      %1582 = vmatprep.subr.mxu0 0.0
      %1583 = vmatpush1.msra.mxu0 0.0
      %1584 = vmatprep.subr.mxu0 0.0
      %1585 = vmatpush1.msra.mxu0 0.0
      %1586 = vmatprep.subr.mxu0 0.0
      %1587 = vmatpush1.msra.mxu0 0.0
      %1588 = vmatprep.subr.mxu0 0.0
      %1589 = vmatpush1.msra.mxu0 0.0
      %1590 = vmatprep.subr.mxu0 0.0
      %1591 = vmatpush1.msra.mxu0 0.0
      %1592 = vmatprep.subr.mxu0 0.0
      %1593 = vmatpush1.msra.mxu0 0.0
      %1594 = vmatprep.subr.mxu0 0.0
      %1595 = vmatpush1.msra.mxu0 0.0
      %1596 = vmatprep.subr.mxu0 0.0
      %1597 = vmatpush1.msra.mxu0 0.0
      %1598 = vmatprep.subr.mxu0 0.0
      %1599 = vmatpush1.msra.mxu0 0.0
      %1600 = vmatprep.subr.mxu0 0.0
      %1601 = vmatpush1.msra.mxu0 %v294
      %1602 = vmatprep.subr.mxu0 0.0
      %1603 = vmatpush1.msra.mxu0 %v293
      %1604 = vmatprep.subr.mxu0 0.0
      %1605 = vmatpush1.msra.mxu0 %v292
      %1606 = vmatprep.subr.mxu0 0.0
      %1607 = vmatpush1.msra.mxu0 %v291
      %1608 = vmatprep.subr.mxu0 0.0
      %1609 = vmatpush2.msra.mxu0 0.0
      %1610 = vmatprep.subr.mxu0 0.0
      %1611 = vmatpush2.msra.mxu0 0.0
      %1612 = vmatprep.subr.mxu0 0.0
      %1613 = vmatpush2.msra.mxu0 0.0
      %1614 = vmatprep.subr.mxu0 0.0
      %1615 = vmatpush2.msra.mxu0 0.0
      %1616 = vmatprep.subr.mxu0 0.0
      %1617 = vmatpush2.msra.mxu0 0.0
      %1618 = vmatprep.subr.mxu0 0.0
      %1619 = vmatpush2.msra.mxu0 0.0
      %1620 = vmatprep.subr.mxu0 0.0
      %1621 = vmatpush2.msra.mxu0 0.0
      %1622 = vmatprep.subr.mxu0 0.0
      %1623 = vmatpush2.msra.mxu0 0.0
      %1624 = vmatprep.subr.mxu0 0.0
      %1625 = vmatpush2.msra.mxu0 0.0
      %1626 = vmatprep.subr.mxu0 0.0
      %1627 = vmatpush2.msra.mxu0 0.0
      %1628 = vmatprep.subr.mxu0 0.0
      %1629 = vmatpush2.msra.mxu0 0.0
      %1630 = vmatprep.subr.mxu0 0.0
      %1631 = vmatpush2.msra.mxu0 0.0
      %1632 = vmatprep.subr.mxu0 0.0
      %1633 = vmatpush2.msra.mxu0 0.0
      %1634 = vmatprep.subr.mxu0 0.0
      %1635 = vmatpush2.msra.mxu0 0.0
      %1636 = vmatprep.subr.mxu0 0.0
      %1637 = vmatpush2.msra.mxu0 0.0
      %1638 = vmatprep.subr.mxu0 0.0
      %1639 = vmatpush2.msra.mxu0 0.0
      %1640 = vmatprep.mubr.f32.mxu0 0.0
      %1641 = vmatmul.mubr.f32.gmra.mxu0 %v1574
      %v1642 = vpop.f32.mrf.mxu0
      %v1643 = vadd.f32 0.0, %v1642
      %v1644 = vpop.f32.mrf.mxu0
      %1645 = vdwg.mxu0
      %v1646 = vadd.f32 %v1573, %v1643
      %v1647 = vxor.u32 %v1646, 2147483648
      %v1648 = vmul.f32 %v1647, 1.442695
      %v1649 = vpow.pop %v1648
      %v1650 = vadd.f32 %v1649, 1.0
      %v1651 = vrcp.pop %v1650
      %v1652 = vmul.f32 1.0, %v1651
      %v1653 = vtanh.pop %v1646
      %v1654 = vmul.f32 %v1652, %v1454
      %1656 = vrot.lane.b32.xlu0 %v1653, 64
      %v1657 = vpop.permute.xlu0 %1656
      %v1659 = vmul.f32 %v1652, %v1657
      %1661 = vrot.lane.b32.xlu0 %v1659, 32
      %v1662 = vpop.permute.xlu0 %1661
      %v1664 = vadd.f32 %v1654, %v1662
      %v1665 = vtanh.pop %v1664
      %1667 = vrot.lane.b32.xlu0 %v1665, 64
      %v1668 = vpop.permute.xlu0 %1667
      %v1670 = vmul.f32 %v1652, %v1668
      %1672 = vrot.lane.b32.xlu0 %v1670, 32
      %v1673 = vpop.permute.xlu0 %1672
      %s1675 = scalar_lea.vmem %s272, 48
      %1676 = vst.msk [vmem:[%s1675] sm:$0xff] %vm304, %v1673
      %s1677 = scalar_lea.vmem %s265, 16
      %v1678 = vld [vmem:[%s1677 + $0x8] sm:$0xff]
      %v1679 = vsel %vm304, %v1568, 0
      %1681 = vmatprep.subr.mxu0 0.0
      %1682 = vmatpush1.msra.mxu0 0.0
      %1683 = vmatprep.subr.mxu0 0.0
      %1684 = vmatpush1.msra.mxu0 0.0
      %1685 = vmatprep.subr.mxu0 0.0
      %1686 = vmatpush1.msra.mxu0 0.0
      %1687 = vmatprep.subr.mxu0 0.0
      %1688 = vmatpush1.msra.mxu0 0.0
      %1689 = vmatprep.subr.mxu0 0.0
      %1690 = vmatpush1.msra.mxu0 0.0
      %1691 = vmatprep.subr.mxu0 0.0
      %1692 = vmatpush1.msra.mxu0 0.0
      %1693 = vmatprep.subr.mxu0 0.0
      %1694 = vmatpush1.msra.mxu0 0.0
      %1695 = vmatprep.subr.mxu0 0.0
      %1696 = vmatpush1.msra.mxu0 0.0
      %1697 = vmatprep.subr.mxu0 0.0
      %1698 = vmatpush1.msra.mxu0 0.0
      %1699 = vmatprep.subr.mxu0 0.0
      %1700 = vmatpush1.msra.mxu0 0.0
      %1701 = vmatprep.subr.mxu0 0.0
      %1702 = vmatpush1.msra.mxu0 0.0
      %1703 = vmatprep.subr.mxu0 0.0
      %1704 = vmatpush1.msra.mxu0 0.0
      %1705 = vmatprep.subr.mxu0 0.0
      %1706 = vmatpush1.msra.mxu0 %v298
      %1707 = vmatprep.subr.mxu0 0.0
      %1708 = vmatpush1.msra.mxu0 %v297
      %1709 = vmatprep.subr.mxu0 0.0
      %1710 = vmatpush1.msra.mxu0 %v296
      %1711 = vmatprep.subr.mxu0 0.0
      %1712 = vmatpush1.msra.mxu0 %v295
      %1713 = vmatprep.subr.mxu0 0.0
      %1714 = vmatpush2.msra.mxu0 0.0
      %1715 = vmatprep.subr.mxu0 0.0
      %1716 = vmatpush2.msra.mxu0 0.0
      %1717 = vmatprep.subr.mxu0 0.0
      %1718 = vmatpush2.msra.mxu0 0.0
      %1719 = vmatprep.subr.mxu0 0.0
      %1720 = vmatpush2.msra.mxu0 0.0
      %1721 = vmatprep.subr.mxu0 0.0
      %1722 = vmatpush2.msra.mxu0 0.0
      %1723 = vmatprep.subr.mxu0 0.0
      %1724 = vmatpush2.msra.mxu0 0.0
      %1725 = vmatprep.subr.mxu0 0.0
      %1726 = vmatpush2.msra.mxu0 0.0
      %1727 = vmatprep.subr.mxu0 0.0
      %1728 = vmatpush2.msra.mxu0 0.0
      %1729 = vmatprep.subr.mxu0 0.0
      %1730 = vmatpush2.msra.mxu0 0.0
      %1731 = vmatprep.subr.mxu0 0.0
      %1732 = vmatpush2.msra.mxu0 0.0
      %1733 = vmatprep.subr.mxu0 0.0
      %1734 = vmatpush2.msra.mxu0 0.0
      %1735 = vmatprep.subr.mxu0 0.0
      %1736 = vmatpush2.msra.mxu0 0.0
      %1737 = vmatprep.subr.mxu0 0.0
      %1738 = vmatpush2.msra.mxu0 0.0
      %1739 = vmatprep.subr.mxu0 0.0
      %1740 = vmatpush2.msra.mxu0 0.0
      %1741 = vmatprep.subr.mxu0 0.0
      %1742 = vmatpush2.msra.mxu0 0.0
      %1743 = vmatprep.subr.mxu0 0.0
      %1744 = vmatpush2.msra.mxu0 0.0
      %1745 = vmatprep.mubr.f32.mxu0 0.0
      %1746 = vmatmul.mubr.f32.gmra.mxu0 %v1679
      %v1747 = vpop.f32.mrf.mxu0
      %v1748 = vadd.f32 0.0, %v1747
      %v1749 = vpop.f32.mrf.mxu0
      %1750 = vdwg.mxu0
      %v1751 = vadd.f32 %v1678, %v1748
      %v1752 = vxor.u32 %v1751, 2147483648
      %v1753 = vmul.f32 %v1752, 1.442695
      %v1754 = vpow.pop %v1753
      %v1755 = vadd.f32 %v1754, 1.0
      %v1756 = vrcp.pop %v1755
      %v1757 = vmul.f32 1.0, %v1756
      %v1758 = vtanh.pop %v1751
      %v1759 = vmul.f32 %v1757, %v1559
      %1761 = vrot.lane.b32.xlu0 %v1758, 64
      %v1762 = vpop.permute.xlu0 %1761
      %v1764 = vmul.f32 %v1757, %v1762
      %1766 = vrot.lane.b32.xlu0 %v1764, 32
      %v1767 = vpop.permute.xlu0 %1766
      %v1769 = vadd.f32 %v1759, %v1767
      %v1770 = vtanh.pop %v1769
      %1772 = vrot.lane.b32.xlu0 %v1770, 64
      %v1773 = vpop.permute.xlu0 %1772
      %v1775 = vmul.f32 %v1757, %v1773
      %1777 = vrot.lane.b32.xlu0 %v1775, 32
      %v1778 = vpop.permute.xlu0 %1777
      %s1780 = scalar_lea.vmem %s279, 8
      %1781 = vst.msk [vmem:[%s1780] sm:$0xff] %vm304, %v1778
      %s1782 = scalar_lea.vmem %s257, 112
      %v1783 = vld [vmem:[%s1782] sm:$0xff]
      %v1784 = vsel %vm304, %v1673, 0
      %1786 = vmatprep.subr.mxu0 0.0
      %1787 = vmatpush1.msra.mxu0 0.0
      %1788 = vmatprep.subr.mxu0 0.0
      %1789 = vmatpush1.msra.mxu0 0.0
      %1790 = vmatprep.subr.mxu0 0.0
      %1791 = vmatpush1.msra.mxu0 0.0
      %1792 = vmatprep.subr.mxu0 0.0
      %1793 = vmatpush1.msra.mxu0 0.0
      %1794 = vmatprep.subr.mxu0 0.0
      %1795 = vmatpush1.msra.mxu0 0.0
      %1796 = vmatprep.subr.mxu0 0.0
      %1797 = vmatpush1.msra.mxu0 0.0
      %1798 = vmatprep.subr.mxu0 0.0
      %1799 = vmatpush1.msra.mxu0 0.0
      %1800 = vmatprep.subr.mxu0 0.0
      %1801 = vmatpush1.msra.mxu0 0.0
      %1802 = vmatprep.subr.mxu0 0.0
      %1803 = vmatpush1.msra.mxu0 0.0
      %1804 = vmatprep.subr.mxu0 0.0
      %1805 = vmatpush1.msra.mxu0 0.0
      %1806 = vmatprep.subr.mxu0 0.0
      %1807 = vmatpush1.msra.mxu0 0.0
      %1808 = vmatprep.subr.mxu0 0.0
      %1809 = vmatpush1.msra.mxu0 0.0
      %1810 = vmatprep.subr.mxu0 0.0
      %1811 = vmatpush1.msra.mxu0 %v294
      %1812 = vmatprep.subr.mxu0 0.0
      %1813 = vmatpush1.msra.mxu0 %v293
      %1814 = vmatprep.subr.mxu0 0.0
      %1815 = vmatpush1.msra.mxu0 %v292
      %1816 = vmatprep.subr.mxu0 0.0
      %1817 = vmatpush1.msra.mxu0 %v291
      %1818 = vmatprep.subr.mxu0 0.0
      %1819 = vmatpush2.msra.mxu0 0.0
      %1820 = vmatprep.subr.mxu0 0.0
      %1821 = vmatpush2.msra.mxu0 0.0
      %1822 = vmatprep.subr.mxu0 0.0
      %1823 = vmatpush2.msra.mxu0 0.0
      %1824 = vmatprep.subr.mxu0 0.0
      %1825 = vmatpush2.msra.mxu0 0.0
      %1826 = vmatprep.subr.mxu0 0.0
      %1827 = vmatpush2.msra.mxu0 0.0
      %1828 = vmatprep.subr.mxu0 0.0
      %1829 = vmatpush2.msra.mxu0 0.0
      %1830 = vmatprep.subr.mxu0 0.0
      %1831 = vmatpush2.msra.mxu0 0.0
      %1832 = vmatprep.subr.mxu0 0.0
      %1833 = vmatpush2.msra.mxu0 0.0
      %1834 = vmatprep.subr.mxu0 0.0
      %1835 = vmatpush2.msra.mxu0 0.0
      %1836 = vmatprep.subr.mxu0 0.0
      %1837 = vmatpush2.msra.mxu0 0.0
      %1838 = vmatprep.subr.mxu0 0.0
      %1839 = vmatpush2.msra.mxu0 0.0
      %1840 = vmatprep.subr.mxu0 0.0
      %1841 = vmatpush2.msra.mxu0 0.0
      %1842 = vmatprep.subr.mxu0 0.0
      %1843 = vmatpush2.msra.mxu0 0.0
      %1844 = vmatprep.subr.mxu0 0.0
      %1845 = vmatpush2.msra.mxu0 0.0
      %1846 = vmatprep.subr.mxu0 0.0
      %1847 = vmatpush2.msra.mxu0 0.0
      %1848 = vmatprep.subr.mxu0 0.0
      %1849 = vmatpush2.msra.mxu0 0.0
      %1850 = vmatprep.mubr.f32.mxu0 0.0
      %1851 = vmatmul.mubr.f32.gmra.mxu0 %v1784
      %v1852 = vpop.f32.mrf.mxu0
      %v1853 = vadd.f32 0.0, %v1852
      %v1854 = vpop.f32.mrf.mxu0
      %1855 = vdwg.mxu0
      %v1856 = vadd.f32 %v1783, %v1853
      %v1857 = vxor.u32 %v1856, 2147483648
      %v1858 = vmul.f32 %v1857, 1.442695
      %v1859 = vpow.pop %v1858
      %v1860 = vadd.f32 %v1859, 1.0
      %v1861 = vrcp.pop %v1860
      %v1862 = vmul.f32 1.0, %v1861
      %v1863 = vtanh.pop %v1856
      %v1864 = vmul.f32 %v1862, %v1664
      %1866 = vrot.lane.b32.xlu0 %v1863, 64
      %v1867 = vpop.permute.xlu0 %1866
      %v1869 = vmul.f32 %v1862, %v1867
      %1871 = vrot.lane.b32.xlu0 %v1869, 32
      %v1872 = vpop.permute.xlu0 %1871
      %v1874 = vadd.f32 %v1864, %v1872
      %v1875 = vtanh.pop %v1874
      %1877 = vrot.lane.b32.xlu0 %v1875, 64
      %v1878 = vpop.permute.xlu0 %1877
      %v1880 = vmul.f32 %v1862, %v1878
      %1882 = vrot.lane.b32.xlu0 %v1880, 32
      %v1883 = vpop.permute.xlu0 %1882
      %s1885 = scalar_lea.vmem %s272, 56
      %1886 = vst.msk [vmem:[%s1885] sm:$0xff] %vm304, %v1883
      %v1887 = vld [vmem:[%s265 + $0x8] sm:$0xff]
      %v1888 = vsel %vm304, %v1778, 0
      %1890 = vmatprep.subr.mxu0 0.0
      %1891 = vmatpush1.msra.mxu0 0.0
      %1892 = vmatprep.subr.mxu0 0.0
      %1893 = vmatpush1.msra.mxu0 0.0
      %1894 = vmatprep.subr.mxu0 0.0
      %1895 = vmatpush1.msra.mxu0 0.0
      %1896 = vmatprep.subr.mxu0 0.0
      %1897 = vmatpush1.msra.mxu0 0.0
      %1898 = vmatprep.subr.mxu0 0.0
      %1899 = vmatpush1.msra.mxu0 0.0
      %1900 = vmatprep.subr.mxu0 0.0
      %1901 = vmatpush1.msra.mxu0 0.0
      %1902 = vmatprep.subr.mxu0 0.0
      %1903 = vmatpush1.msra.mxu0 0.0
      %1904 = vmatprep.subr.mxu0 0.0
      %1905 = vmatpush1.msra.mxu0 0.0
      %1906 = vmatprep.subr.mxu0 0.0
      %1907 = vmatpush1.msra.mxu0 0.0
      %1908 = vmatprep.subr.mxu0 0.0
      %1909 = vmatpush1.msra.mxu0 0.0
      %1910 = vmatprep.subr.mxu0 0.0
      %1911 = vmatpush1.msra.mxu0 0.0
      %1912 = vmatprep.subr.mxu0 0.0
      %1913 = vmatpush1.msra.mxu0 0.0
      %1914 = vmatprep.subr.mxu0 0.0
      %1915 = vmatpush1.msra.mxu0 %v298
      %1916 = vmatprep.subr.mxu0 0.0
      %1917 = vmatpush1.msra.mxu0 %v297
      %1918 = vmatprep.subr.mxu0 0.0
      %1919 = vmatpush1.msra.mxu0 %v296
      %1920 = vmatprep.subr.mxu0 0.0
      %1921 = vmatpush1.msra.mxu0 %v295
      %1922 = vmatprep.subr.mxu0 0.0
      %1923 = vmatpush2.msra.mxu0 0.0
      %1924 = vmatprep.subr.mxu0 0.0
      %1925 = vmatpush2.msra.mxu0 0.0
      %1926 = vmatprep.subr.mxu0 0.0
      %1927 = vmatpush2.msra.mxu0 0.0
      %1928 = vmatprep.subr.mxu0 0.0
      %1929 = vmatpush2.msra.mxu0 0.0
      %1930 = vmatprep.subr.mxu0 0.0
      %1931 = vmatpush2.msra.mxu0 0.0
      %1932 = vmatprep.subr.mxu0 0.0
      %1933 = vmatpush2.msra.mxu0 0.0
      %1934 = vmatprep.subr.mxu0 0.0
      %1935 = vmatpush2.msra.mxu0 0.0
      %1936 = vmatprep.subr.mxu0 0.0
      %1937 = vmatpush2.msra.mxu0 0.0
      %1938 = vmatprep.subr.mxu0 0.0
      %1939 = vmatpush2.msra.mxu0 0.0
      %1940 = vmatprep.subr.mxu0 0.0
      %1941 = vmatpush2.msra.mxu0 0.0
      %1942 = vmatprep.subr.mxu0 0.0
      %1943 = vmatpush2.msra.mxu0 0.0
      %1944 = vmatprep.subr.mxu0 0.0
      %1945 = vmatpush2.msra.mxu0 0.0
      %1946 = vmatprep.subr.mxu0 0.0
      %1947 = vmatpush2.msra.mxu0 0.0
      %1948 = vmatprep.subr.mxu0 0.0
      %1949 = vmatpush2.msra.mxu0 0.0
      %1950 = vmatprep.subr.mxu0 0.0
      %1951 = vmatpush2.msra.mxu0 0.0
      %1952 = vmatprep.subr.mxu0 0.0
      %1953 = vmatpush2.msra.mxu0 0.0
      %1954 = vmatprep.mubr.f32.mxu0 0.0
      %1955 = vmatmul.mubr.f32.gmra.mxu0 %v1888
      %v1956 = vpop.f32.mrf.mxu0
      %v1957 = vadd.f32 0.0, %v1956
      %v1958 = vpop.f32.mrf.mxu0
      %1959 = vdwg.mxu0
      %v1960 = vadd.f32 %v1887, %v1957
      %v1961 = vxor.u32 %v1960, 2147483648
      %v1962 = vmul.f32 %v1961, 1.442695
      %v1963 = vpow.pop %v1962
      %v1964 = vadd.f32 %v1963, 1.0
      %v1965 = vrcp.pop %v1964
      %v1966 = vmul.f32 1.0, %v1965
      %v1967 = vtanh.pop %v1960
      %v1968 = vmul.f32 %v1966, %v1769
      %1970 = vrot.lane.b32.xlu0 %v1967, 64
      %v1971 = vpop.permute.xlu0 %1970
      %v1973 = vmul.f32 %v1966, %v1971
      %1975 = vrot.lane.b32.xlu0 %v1973, 32
      %v1976 = vpop.permute.xlu0 %1975
      %v1978 = vadd.f32 %v1968, %v1976
      %v1979 = vtanh.pop %v1978
      %1981 = vrot.lane.b32.xlu0 %v1979, 64
      %v1982 = vpop.permute.xlu0 %1981
      %v1984 = vmul.f32 %v1966, %v1982
      %1986 = vrot.lane.b32.xlu0 %v1984, 32
      %v1987 = vpop.permute.xlu0 %1986
      %1989 = vst.msk [vmem:[%s279] sm:$0xff] %vm304, %v1987
      %1990 = vst.msk [vmem:[#allocation2] sm:$0xff] %vm304, %v1883
      %1992 = vrot.lane.b32.xlu0 %v1874, 96
      %v1993 = vpop.permute.xlu0 %1992
      %1995 = vst.msk [vmem:[#allocation3] sm:$0xff] %vm304, %v1993
      %1996 = vst.msk [vmem:[#allocation4] sm:$0xff] %vm304, %v1987
      %1998 = vrot.lane.b32.xlu0 %v1978, 96
      %v1999 = vpop.permute.xlu0 %1998
      %2001 = vst.msk [vmem:[#allocation5] sm:$0xff] %vm304, %v1999
      %s2002 = smul.u32 8, %s17
      %p2003 = scmp.lt.s32.totalorder %s2002, 15
      %s2004 = scalar_select %p2003, %s2002, 15
      %s2005 = smul.addr %s2004, 8
      %s2006 = scalar_lea.vmem %s4, %s2005
      %s2007 = ssub.s32 1, %s17
      %s2008 = smul.u32 8, %s2007
      %p2009 = scmp.lt.s32.totalorder %s2008, 15
      %s2010 = scalar_select %p2009, %s2008, 15
      %s2011 = smul.addr %s2010, 8
      %s2012 = scalar_lea.vmem %s5, %s2011
      // Predicated region
      $region41: #{tagger_forward.4} parent=35 // pred_check
        %p2013 = pneg %p131
      $region42: #{tagger_forward.4} parent=35 // pred_check_branch
        %2015 = sbr.rel (%p2013) target = $region44
      $region43: #{tagger_forward.4} parent=35 // pred_region
        %s2016 = smul.u32 8, %s17
      $region44: #{tagger_forward.4} parent=35 // pred_fallthru
        _
      // Predicated region
      $region45: #{tagger_forward.4} parent=35 // pred_check
        %p2017 = pneg %p159
      $region46: #{tagger_forward.4} parent=35 // pred_check_branch
        %2019 = sbr.rel (%p2017) target = $region48
      $region47: #{tagger_forward.4} parent=35 // pred_region
        %s2020 = ssub.s32 1, %s17
        %s2021 = smul.u32 8, %s2020
      $region48: #{tagger_forward.4} parent=35 // pred_fallthru
        _
    $region36: #{tagger_forward.4} parent=5 // pred_fallthru
      _
    %p2022 = scmp.le.s32.totalorder 2, %s12
    // Predicated region
    $region49: #{tagger_forward.4} parent=5 // pred_check
      %p2023 = pneg %p2022
    $region50: #{tagger_forward.4} parent=5 // pred_check_branch
      %2025 = sbr.rel (%p2023) target = $region52
    $region51: #{tagger_forward.4} parent=5 // pred_region
      %s2026 = ssub.s32 %s12, 2
      // Predicated region
      $region53: #{tagger_forward.4} parent=51 // pred_check
        %p2027 = pneg %p137
      $region54: #{tagger_forward.4} parent=51 // pred_check_branch
        %2029 = sbr.rel (%p2027) target = $region56
      $region55: #{tagger_forward.4} parent=51 // pred_region
        %s2030 = smul.u32 8, %s18
        %p2031 = scmp.lt.s32.totalorder %s2030, 15
        %s2032 = scalar_select %p2031, %s2030, 15
        %s2033 = smul.addr %s2032, 8
        %s2034 = scalar_lea.vmem %s4, %s2033
      $region56: #{tagger_forward.4} parent=51 // pred_fallthru
        _
      // Predicated region
      $region57: #{tagger_forward.4} parent=51 // pred_check
        %p2035 = pneg %p165
      $region58: #{tagger_forward.4} parent=51 // pred_check_branch
        %2037 = sbr.rel (%p2035) target = $region60
      $region59: #{tagger_forward.4} parent=51 // pred_region
        %s2038 = ssub.s32 1, %s18
        %s2039 = smul.u32 8, %s2038
        %p2040 = scmp.lt.s32.totalorder %s2039, 15
        %s2041 = scalar_select %p2040, %s2039, 15
        %s2042 = smul.addr %s2041, 8
        %s2043 = scalar_lea.vmem %s5, %s2042
      $region60: #{tagger_forward.4} parent=51 // pred_fallthru
        _
    $region52: #{tagger_forward.4} parent=5 // pred_fallthru
      _
  $region6: #{tagger_forward.4} parent=0 // loop_footer
    %s16 = sadd.s32 1, %s12
  $region7: #{tagger_forward.4} parent=0 // loop_footer_branch
    %11 = sbr.rel target = $region3
  $region8: #{tagger_forward.4} parent=0 // loop_exit
    _

</llo_original>
